<compile_context>
chip_gen: v7x
topology: tpu7x:2x2x1
jax: 0.10.0
libtpu: 0.0.40
codegen_flags: <defaults>
</compile_context>

<pallas_src>
import jax
import jax.numpy as jnp
from jax.experimental import pallas as pl
from jax.experimental.pallas import tpu as pltpu


NEG_SLOPE = 0.2      # PyG GATConv default negative_slope
NEG_BIG = -1e30      # mask value for non-edges


def _attention_aggregate(h, a_src, a_dst, b, mask):
    """Single-head GAT attention + aggregation given projected features h (f32)."""
    # Per-node attention scalars (VPU mul + XLU reduce; hidden under weight DMA).
    s_src = jnp.sum(h * a_src, axis=-1, keepdims=True)     # (N, 1)
    s_dst = jnp.sum(h * a_dst, axis=-1, keepdims=True)     # (N, 1)

    # Edge logits e[i, j] = leaky_relu(s_dst[i] + s_src[j])   (rows = dst).
    e = s_dst + jnp.transpose(s_src)                        # (N, N)
    e = jnp.where(e > 0, e, NEG_SLOPE * e)

    # Masked softmax over incoming edges.  Every row has a self-loop, so the
    # row max is finite and masked entries underflow exp() to exactly 0 --
    # no second masking pass needed.
    e = jnp.where(mask, e, NEG_BIG)
    m = jnp.max(e, axis=-1, keepdims=True)
    p = jnp.exp(e - m)
    denom = jnp.sum(p, axis=-1, keepdims=True)
    alpha = p * pl.reciprocal(denom, approx=True)           # EUP vrcp

    # Aggregate messages (MXU, bf16 operands, f32 accumulate) + bias.
    out = jnp.dot(alpha.astype(jnp.bfloat16), h.astype(jnp.bfloat16),
                  preferred_element_type=jnp.float32)
    return out + b


def _gat_fused_kernel(x_ref, w1_ref, a_src1_ref, a_dst1_ref, b1_ref,
                      adj_ref, w2_hbm_ref, a_src2_ref, a_dst2_ref, b2_ref,
                      out_ref, w2_vmem, w2_sem):
    """conv1 -> ReLU -> conv2, fully resident in VMEM; W2 prefetched from HBM."""
    # Kick off the layer-2 weight DMA; it overlaps all of layer-1 compute.
    w2_copy = pltpu.make_async_copy(w2_hbm_ref, w2_vmem, w2_sem)
    w2_copy.start()

    mask = adj_ref[...] > 0                                 # hoisted once, both layers
    x = x_ref[...].astype(jnp.bfloat16)

    # ---- layer 1: GATConv + fused ReLU ----
    h1 = jnp.dot(x, w1_ref[...], preferred_element_type=jnp.float32)
    y1 = _attention_aggregate(h1, a_src1_ref[...], a_dst1_ref[...],
                              b1_ref[...], mask)
    y1 = jnp.maximum(y1, 0.0)

    # ---- layer 2: GATConv ----
    w2_copy.wait()
    h2 = jnp.dot(y1.astype(jnp.bfloat16), w2_vmem[...],
                 preferred_element_type=jnp.float32)
    out_ref[...] = _attention_aggregate(h2, a_src2_ref[...], a_dst2_ref[...],
                                        b2_ref[...], mask)


def gat_forward(x, adj, params):
    """GAT.forward: conv1 -> relu -> conv2, one pallas_call."""
    (w1, a_src1, a_dst1, b1), (w2, a_src2, a_dst2, b2) = params
    n, _ = x.shape
    c_in, c_out = w2.shape
    vmem = pl.BlockSpec(memory_space=pltpu.MemorySpace.VMEM)
    hbm = pl.BlockSpec(memory_space=pl.ANY)                 # W2 stays in HBM
    return pl.pallas_call(
        _gat_fused_kernel,
        out_shape=jax.ShapeDtypeStruct((n, c_out), jnp.float32),
        in_specs=[vmem, vmem, vmem, vmem, vmem, vmem,       # x, W1, a1s, a1d, b1, adj
                  hbm, vmem, vmem, vmem],                   # W2 (HBM), a2s, a2d, b2
        out_specs=vmem,
        scratch_shapes=[pltpu.VMEM((c_in, c_out), jnp.bfloat16),  # W2 landing buffer
                        pltpu.SemaphoreType.DMA(())],
    )(x, w1, a_src1, a_dst1, b1, adj, w2, a_src2, a_dst2, b2)


# ---------------------------------------------------------------------------
# Pure-JAX reference with the SAME precision choices (bf16 MXU operands, f32
# accumulation) so the comparison isolates kernel/lowering correctness.
# ---------------------------------------------------------------------------
def _ref_conv(x, w_bf16, a_src, a_dst, b, adj):
    h = jnp.dot(x.astype(jnp.bfloat16), w_bf16,
                preferred_element_type=jnp.float32)
    s_src = jnp.sum(h * a_src, axis=-1)
    s_dst = jnp.sum(h * a_dst, axis=-1)
    e = s_dst[:, None] + s_src[None, :]
    e = jnp.where(e > 0, e, NEG_SLOPE * e)
    e = jnp.where(adj > 0, e, NEG_BIG)
    alpha = jax.nn.softmax(e, axis=-1)
    out = jnp.dot(alpha.astype(jnp.bfloat16), h.astype(jnp.bfloat16),
                  preferred_element_type=jnp.float32)
    return out + b


def _ref_forward(x, adj, params):
    (w1, a_src1, a_dst1, b1), (w2, a_src2, a_dst2, b2) = params
    y = jax.nn.relu(_ref_conv(x, w1, a_src1, a_dst1, b1, adj))
    return _ref_conv(y, w2, a_src2, a_dst2, b2, adj)


if __name__ == "__main__":
    N = 64          # number of graph nodes (small, synthetic)
    C = 768         # in/out channels fixed by the module (GATConv(768, 768))

    key = jax.random.PRNGKey(0)
    k_x, k1, k2, k3, k4, k5, k6 = jax.random.split(key, 7)

    # Node features.
    x = jax.random.normal(k_x, (N, C), dtype=jnp.float32)

    # Deterministic synthetic edge_index [2, E]: bidirectional ring.
    src = jnp.concatenate([jnp.arange(N), (jnp.arange(N) + 1) % N])
    dst = jnp.concatenate([(jnp.arange(N) + 1) % N, jnp.arange(N)])
    # Dense adjacency (rows = dst) with self-loops, stored narrow (bf16):
    # the only O(N^2) input, so keep it skinny.
    adj = jnp.zeros((N, N), jnp.float32).at[dst, src].set(1.0)
    adj = jnp.maximum(adj, jnp.eye(N, dtype=jnp.float32)).astype(jnp.bfloat16)

    # GATConv(768, 768, heads=1) parameters: lin weight stored pre-transposed
    # (Cin, Cout) and cast to bf16 (MXU bf16 mode, half the weight DMA);
    # attention vectors / bias stay f32.
    def init_layer(kw, ka, kd):
        w = (jax.random.normal(kw, (C, C), dtype=jnp.float32) * 0.02
             ).astype(jnp.bfloat16)
        a_src = jax.random.normal(ka, (1, C), dtype=jnp.float32) * 0.1
        a_dst = jax.random.normal(kd, (1, C), dtype=jnp.float32) * 0.1
        b = jnp.zeros((1, C), dtype=jnp.float32)
        return w, a_src, a_dst, b

    params = (init_layer(k1, k2, k3), init_layer(k4, k5, k6))

    out = jax.block_until_ready(gat_forward(x, adj, params))
    ref = jax.block_until_ready(_ref_forward(x, adj, params))

    assert out.shape == (N, C) and out.dtype == jnp.float32
    assert bool(jnp.all(jnp.isfinite(out)))
    assert jnp.allclose(out, ref, rtol=2e-2, atol=2e-2), \
        float(jnp.max(jnp.abs(out - ref)))
    print("KERNEL_OK")
</pallas_src>

<mosaic_0001>
module attributes {stable_mosaic.version = 11 : i64} {
  func.func @_gat_fused_kernel(%arg0: memref<64x768xf32, #tpu.memory_space<vmem>>, %arg1: memref<768x768xbf16, #tpu.memory_space<vmem>>, %arg2: memref<1x768xf32, #tpu.memory_space<vmem>>, %arg3: memref<1x768xf32, #tpu.memory_space<vmem>>, %arg4: memref<1x768xf32, #tpu.memory_space<vmem>>, %arg5: memref<64x64xbf16, #tpu.memory_space<vmem>>, %arg6: memref<768x768xbf16, #tpu.memory_space<any>>, %arg7: memref<1x768xf32, #tpu.memory_space<vmem>>, %arg8: memref<1x768xf32, #tpu.memory_space<vmem>>, %arg9: memref<1x768xf32, #tpu.memory_space<vmem>>, %arg10: memref<64x768xf32, #tpu.memory_space<vmem>>, %arg11: memref<768x768xbf16, #tpu.memory_space<vmem>>, %arg12: memref<!tpu.dma_semaphore, #tpu.memory_space<semaphore_mem>>) attributes {dimension_semantics = [], scalar_prefetch = 0 : i64, scratch_operands = 2 : i64, tpu.core_type = #tpu.core_type<tc>} {
    tpu.enqueue_dma source(%arg6 : memref<768x768xbf16, #tpu.memory_space<any>>) target(%arg11 : memref<768x768xbf16, #tpu.memory_space<vmem>>) target_semaphore(%arg12 : memref<!tpu.dma_semaphore, #tpu.memory_space<semaphore_mem>>)
    %c0 = arith.constant 0 : index
    %c0_0 = arith.constant 0 : index
    %0 = vector.load %arg5[%c0, %c0_0] : memref<64x64xbf16, #tpu.memory_space<vmem>>, vector<64x64xbf16>
    %cst = arith.constant 0.000000e+00 : bf16
    %1 = vector.broadcast %cst : bf16 to vector<64x64xbf16>
    %2 = arith.cmpf ogt, %0, %1 : vector<64x64xbf16>
    %c0_1 = arith.constant 0 : index
    %c0_2 = arith.constant 0 : index
    %3 = vector.load %arg0[%c0_1, %c0_2] : memref<64x768xf32, #tpu.memory_space<vmem>>, vector<64x768xf32>
    %4 = arith.truncf %3 : vector<64x768xf32> to vector<64x768xbf16>
    %c0_3 = arith.constant 0 : index
    %c0_4 = arith.constant 0 : index
    %5 = vector.load %arg1[%c0_3, %c0_4] : memref<768x768xbf16, #tpu.memory_space<vmem>>, vector<768x768xbf16>
    %cst_5 = arith.constant dense<0.000000e+00> : vector<64x768xf32>
    %6 = tpu.matmul %4, %5, %cst_5 {dimension_numbers = #tpu.dot_dimension_numbers<[1], [0], [0], [1], [0, 0, 1, 1], [], []>} : vector<64x768xbf16>, vector<768x768xbf16>, vector<64x768xf32> -> vector<64x768xf32>
    %c0_6 = arith.constant 0 : index
    %c0_7 = arith.constant 0 : index
    %7 = vector.load %arg2[%c0_6, %c0_7] : memref<1x768xf32, #tpu.memory_space<vmem>>, vector<1x768xf32>
    %c0_8 = arith.constant 0 : index
    %c0_9 = arith.constant 0 : index
    %8 = vector.load %arg3[%c0_8, %c0_9] : memref<1x768xf32, #tpu.memory_space<vmem>>, vector<1x768xf32>
    %c0_10 = arith.constant 0 : index
    %c0_11 = arith.constant 0 : index
    %9 = vector.load %arg4[%c0_10, %c0_11] : memref<1x768xf32, #tpu.memory_space<vmem>>, vector<1x768xf32>
    %10 = vector.broadcast %7 : vector<1x768xf32> to vector<64x768xf32>
    %11 = arith.mulf %6, %10 : vector<64x768xf32>
    %cst_12 = arith.constant dense<0.000000e+00> : vector<64xf32>
    %12 = vector.multi_reduction <add>, %11, %cst_12 [1] : vector<64x768xf32> to vector<64xf32>
    %13 = vector.shape_cast %12 : vector<64xf32> to vector<64x1xf32>
    %14 = vector.broadcast %8 : vector<1x768xf32> to vector<64x768xf32>
    %15 = arith.mulf %6, %14 : vector<64x768xf32>
    %cst_13 = arith.constant dense<0.000000e+00> : vector<64xf32>
    %16 = vector.multi_reduction <add>, %15, %cst_13 [1] : vector<64x768xf32> to vector<64xf32>
    %17 = vector.shape_cast %16 : vector<64xf32> to vector<64x1xf32>
    %18 = tpu.transpose %13, [1, 0] : vector<64x1xf32> -> vector<1x64xf32>
    %19 = vector.broadcast %17 : vector<64x1xf32> to vector<64x64xf32>
    %20 = vector.broadcast %18 : vector<1x64xf32> to vector<64x64xf32>
    %21 = arith.addf %19, %20 : vector<64x64xf32>
    %cst_14 = arith.constant 0.000000e+00 : f32
    %22 = vector.broadcast %cst_14 : f32 to vector<64x64xf32>
    %23 = arith.cmpf ogt, %21, %22 : vector<64x64xf32>
    %cst_15 = arith.constant 2.000000e-01 : f32
    %24 = vector.broadcast %cst_15 : f32 to vector<64x64xf32>
    %25 = arith.mulf %24, %21 : vector<64x64xf32>
    %26 = arith.select %23, %21, %25 : vector<64x64xi1>, vector<64x64xf32>
    %cst_16 = arith.constant -1.000000e+30 : f32
    %27 = vector.broadcast %cst_16 : f32 to vector<64x64xf32>
    %28 = arith.select %2, %26, %27 : vector<64x64xi1>, vector<64x64xf32>
    %cst_17 = arith.constant dense<0xFF800000> : vector<64xf32>
    %29 = vector.multi_reduction <maximumf>, %28, %cst_17 [1] : vector<64x64xf32> to vector<64xf32>
    %30 = vector.shape_cast %29 : vector<64xf32> to vector<64x1xf32>
    %31 = vector.broadcast %30 : vector<64x1xf32> to vector<64x64xf32>
    %32 = arith.subf %28, %31 : vector<64x64xf32>
    %33 = math.exp %32 : vector<64x64xf32>
    %cst_18 = arith.constant dense<0.000000e+00> : vector<64xf32>
    %34 = vector.multi_reduction <add>, %33, %cst_18 [1] : vector<64x64xf32> to vector<64xf32>
    %35 = vector.shape_cast %34 : vector<64xf32> to vector<64x1xf32>
    %36 = tpu.reciprocal %35 {approx = true} : vector<64x1xf32> -> vector<64x1xf32>
    %37 = vector.broadcast %36 : vector<64x1xf32> to vector<64x64xf32>
    %38 = arith.mulf %33, %37 : vector<64x64xf32>
    %39 = arith.truncf %38 : vector<64x64xf32> to vector<64x64xbf16>
    %40 = arith.truncf %6 : vector<64x768xf32> to vector<64x768xbf16>
    %cst_19 = arith.constant dense<0.000000e+00> : vector<64x768xf32>
    %41 = tpu.matmul %39, %40, %cst_19 {dimension_numbers = #tpu.dot_dimension_numbers<[1], [0], [0], [1], [0, 0, 1, 1], [], []>} : vector<64x64xbf16>, vector<64x768xbf16>, vector<64x768xf32> -> vector<64x768xf32>
    %42 = vector.broadcast %9 : vector<1x768xf32> to vector<64x768xf32>
    %43 = arith.addf %41, %42 : vector<64x768xf32>
    %cst_20 = arith.constant 0.000000e+00 : f32
    %44 = vector.broadcast %cst_20 : f32 to vector<64x768xf32>
    %45 = arith.maximumf %43, %44 : vector<64x768xf32>
    tpu.wait_dma2 semaphore(%arg12 : memref<!tpu.dma_semaphore, #tpu.memory_space<semaphore_mem>>) src(%arg6 : memref<768x768xbf16, #tpu.memory_space<any>>) dst(%arg11 : memref<768x768xbf16, #tpu.memory_space<vmem>>)
    %46 = arith.truncf %45 : vector<64x768xf32> to vector<64x768xbf16>
    %c0_21 = arith.constant 0 : index
    %c0_22 = arith.constant 0 : index
    %47 = vector.load %arg11[%c0_21, %c0_22] : memref<768x768xbf16, #tpu.memory_space<vmem>>, vector<768x768xbf16>
    %cst_23 = arith.constant dense<0.000000e+00> : vector<64x768xf32>
    %48 = tpu.matmul %46, %47, %cst_23 {dimension_numbers = #tpu.dot_dimension_numbers<[1], [0], [0], [1], [0, 0, 1, 1], [], []>} : vector<64x768xbf16>, vector<768x768xbf16>, vector<64x768xf32> -> vector<64x768xf32>
    %c0_24 = arith.constant 0 : index
    %c0_25 = arith.constant 0 : index
    %49 = vector.load %arg7[%c0_24, %c0_25] : memref<1x768xf32, #tpu.memory_space<vmem>>, vector<1x768xf32>
    %c0_26 = arith.constant 0 : index
    %c0_27 = arith.constant 0 : index
    %50 = vector.load %arg8[%c0_26, %c0_27] : memref<1x768xf32, #tpu.memory_space<vmem>>, vector<1x768xf32>
    %c0_28 = arith.constant 0 : index
    %c0_29 = arith.constant 0 : index
    %51 = vector.load %arg9[%c0_28, %c0_29] : memref<1x768xf32, #tpu.memory_space<vmem>>, vector<1x768xf32>
    %52 = vector.broadcast %49 : vector<1x768xf32> to vector<64x768xf32>
    %53 = arith.mulf %48, %52 : vector<64x768xf32>
    %cst_30 = arith.constant dense<0.000000e+00> : vector<64xf32>
    %54 = vector.multi_reduction <add>, %53, %cst_30 [1] : vector<64x768xf32> to vector<64xf32>
    %55 = vector.shape_cast %54 : vector<64xf32> to vector<64x1xf32>
    %56 = vector.broadcast %50 : vector<1x768xf32> to vector<64x768xf32>
    %57 = arith.mulf %48, %56 : vector<64x768xf32>
    %cst_31 = arith.constant dense<0.000000e+00> : vector<64xf32>
    %58 = vector.multi_reduction <add>, %57, %cst_31 [1] : vector<64x768xf32> to vector<64xf32>
    %59 = vector.shape_cast %58 : vector<64xf32> to vector<64x1xf32>
    %60 = tpu.transpose %55, [1, 0] : vector<64x1xf32> -> vector<1x64xf32>
    %61 = vector.broadcast %59 : vector<64x1xf32> to vector<64x64xf32>
    %62 = vector.broadcast %60 : vector<1x64xf32> to vector<64x64xf32>
    %63 = arith.addf %61, %62 : vector<64x64xf32>
    %cst_32 = arith.constant 0.000000e+00 : f32
    %64 = vector.broadcast %cst_32 : f32 to vector<64x64xf32>
    %65 = arith.cmpf ogt, %63, %64 : vector<64x64xf32>
    %cst_33 = arith.constant 2.000000e-01 : f32
    %66 = vector.broadcast %cst_33 : f32 to vector<64x64xf32>
    %67 = arith.mulf %66, %63 : vector<64x64xf32>
    %68 = arith.select %65, %63, %67 : vector<64x64xi1>, vector<64x64xf32>
    %cst_34 = arith.constant -1.000000e+30 : f32
    %69 = vector.broadcast %cst_34 : f32 to vector<64x64xf32>
    %70 = arith.select %2, %68, %69 : vector<64x64xi1>, vector<64x64xf32>
    %cst_35 = arith.constant dense<0xFF800000> : vector<64xf32>
    %71 = vector.multi_reduction <maximumf>, %70, %cst_35 [1] : vector<64x64xf32> to vector<64xf32>
    %72 = vector.shape_cast %71 : vector<64xf32> to vector<64x1xf32>
    %73 = vector.broadcast %72 : vector<64x1xf32> to vector<64x64xf32>
    %74 = arith.subf %70, %73 : vector<64x64xf32>
    %75 = math.exp %74 : vector<64x64xf32>
    %cst_36 = arith.constant dense<0.000000e+00> : vector<64xf32>
    %76 = vector.multi_reduction <add>, %75, %cst_36 [1] : vector<64x64xf32> to vector<64xf32>
    %77 = vector.shape_cast %76 : vector<64xf32> to vector<64x1xf32>
    %78 = tpu.reciprocal %77 {approx = true} : vector<64x1xf32> -> vector<64x1xf32>
    %79 = vector.broadcast %78 : vector<64x1xf32> to vector<64x64xf32>
    %80 = arith.mulf %75, %79 : vector<64x64xf32>
    %81 = arith.truncf %80 : vector<64x64xf32> to vector<64x64xbf16>
    %82 = arith.truncf %48 : vector<64x768xf32> to vector<64x768xbf16>
    %cst_37 = arith.constant dense<0.000000e+00> : vector<64x768xf32>
    %83 = tpu.matmul %81, %82, %cst_37 {dimension_numbers = #tpu.dot_dimension_numbers<[1], [0], [0], [1], [0, 0, 1, 1], [], []>} : vector<64x64xbf16>, vector<64x768xbf16>, vector<64x768xf32> -> vector<64x768xf32>
    %84 = vector.broadcast %51 : vector<1x768xf32> to vector<64x768xf32>
    %85 = arith.addf %83, %84 : vector<64x768xf32>
    %c0_38 = arith.constant 0 : index
    %c0_39 = arith.constant 0 : index
    %86 = vector.load %arg10[%c0_38, %c0_39] : memref<64x768xf32, #tpu.memory_space<vmem>>, vector<64x768xf32>
    tpu.vector_store %arg10[%c0_38, %c0_39], %85 {strides = array<i32>} : memref<64x768xf32, #tpu.memory_space<vmem>>, vector<64x768xf32>,
    return
  }
}

</mosaic_0001>

<llo_original>
// kernel: tpu_custom_call.1
$region0: #{tpu_custom_call.1}
  #allocation0 [shape = 'u32[]', space=smem, size = 0x4, offset = 0x4, fixed_abs, tag = 'smem constant byte address 0x4 - core index']
  #allocation1 [shape = 'u32[144,128]{1,0:T(1,128)}', space=vmem, size = 0x12000, scoped, tag = 'internal scratch']
  #allocation2 [shape = 'bf16[768,768]{1,0:T(16,128)(2,1)}', space=vmem, size = 0x120000, scoped, tag = 'scratch operand']
  #allocation3 [shape = 's32[1]{0}', space=sflag, size = 0x4, scoped, tag = 'scratch operand']
  #allocation20 [shape = 's32[]', space=sflag, size = 0x4, offset = 0, fixed_abs, tag = 'sflag constant byte address 0x0 - dummy sync flag']
  %s0 = inlined_call_operand.hbm [shape: f32[64,768], index: 0, kind: input, shape index: {}]
  %s1 = inlined_call_operand.hbm [shape: bf16[768,768], index: 1, kind: input, shape index: {}]
  %s2 = inlined_call_operand.hbm [shape: f32[1,768], index: 2, kind: input, shape index: {}]
  %s3 = inlined_call_operand.hbm [shape: f32[1,768], index: 3, kind: input, shape index: {}]
  %s4 = inlined_call_operand.hbm [shape: f32[1,768], index: 4, kind: input, shape index: {}]
  %s5 = inlined_call_operand.hbm [shape: bf16[64,64], index: 5, kind: input, shape index: {}]
  %s6 = inlined_call_operand.hbm [shape: bf16[768,768], index: 6, kind: input, shape index: {}]
  %s7 = inlined_call_operand.hbm [shape: f32[1,768], index: 7, kind: input, shape index: {}]
  %s8 = inlined_call_operand.hbm [shape: f32[1,768], index: 8, kind: input, shape index: {}]
  %s9 = inlined_call_operand.hbm [shape: f32[1,768], index: 9, kind: input, shape index: {}]
  %s10 = inlined_call_operand.hbm [shape: f32[64,768], index: 10, kind: output, shape index: {}]
  %s11 = sld [smem:[#allocation0]]
  $region82: #{tpu_custom_call.1} parent=0
    _
  %s13 = ssub.s32 1, %s11
  %s14 = scalar_select 0, %s13, %s11
  $region1: #{tpu_custom_call.1} parent=0
    #allocation4 [shape = 'u8[196608]{0}', space=vmem, size = 0x30000, scoped, tag = 'input window, operand 0, single buffered']
    #allocation5 [shape = 's32[1]{0}', space=sflag, size = 0x4, scoped, tag = 'scoped memory for tpu_custom_call.1']
    #allocation6 [shape = 's32[1]{0}', space=sflag, size = 0x4, scoped, tag = 'scoped memory for tpu_custom_call.1']
    #allocation7 [shape = 'u8[1179648]{0}', space=vmem, size = 0x120000, scoped, tag = 'input window, operand 1, single buffered']
    #allocation8 [shape = 's32[1]{0}', space=sflag, size = 0x4, scoped, tag = 'scoped memory for tpu_custom_call.1']
    #allocation9 [shape = 'u8[3072]{0}', space=vmem, size = 0xc00, scoped, tag = 'input window, operand 2, single buffered']
    #allocation10 [shape = 'u8[3072]{0}', space=vmem, size = 0xc00, scoped, tag = 'input window, operand 3, single buffered']
    #allocation11 [shape = 's32[1]{0}', space=sflag, size = 0x4, scoped, tag = 'scoped memory for tpu_custom_call.1']
    #allocation12 [shape = 'u8[3072]{0}', space=vmem, size = 0xc00, scoped, tag = 'input window, operand 4, single buffered']
    #allocation13 [shape = 'u8[16384]{0}', space=vmem, size = 0x4000, scoped, tag = 'input window, operand 5, single buffered']
    #allocation14 [shape = 's32[1]{0}', space=sflag, size = 0x4, scoped, tag = 'scoped memory for tpu_custom_call.1']
    #allocation15 [shape = 'u8[3072]{0}', space=vmem, size = 0xc00, scoped, tag = 'input window, operand 7, single buffered']
    #allocation16 [shape = 'u8[3072]{0}', space=vmem, size = 0xc00, scoped, tag = 'input window, operand 8, single buffered']
    #allocation17 [shape = 's32[1]{0}', space=sflag, size = 0x4, scoped, tag = 'scoped memory for tpu_custom_call.1']
    #allocation18 [shape = 'u8[3072]{0}', space=vmem, size = 0xc00, scoped, tag = 'input window, operand 9, single buffered']
    #allocation19 [shape = 'u8[196608]{0}', space=vmem, size = 0x30000, scoped, tag = 'output window, operand 0, single buffered']
    #allocation21 [shape = 'u32[9]{0}', space=smem, size = 0x24, scoped, tag = 'DMA stride descriptor']
    %15 = vsyncpa [#allocation5], 0
    %16 = vsyncpa [#allocation8], 0
    %17 = vsyncpa [#allocation11], 0
    %18 = vsyncpa [#allocation14], 0
    %19 = vsyncpa [#allocation17], 0
    %20 = vsyncpa [#allocation6], 0
    // Predicated region
    $region2: #{tpu_custom_call.1} parent=1 // pred_check
      _
    $region3: #{tpu_custom_call.1} parent=1 // pred_check_branch
      %22 = sbr.rel (0) target = $region5
    $region4: #{tpu_custom_call.1} parent=1 // pred_region
      %s24 = ssub.s32 6144, 6144
      %25 = vsyncadd [#allocation5], %s24
      %s26 = sshll.u32 [#allocation4], 4
      %s27 = int_to_ptr.vmem [resolvable:$true] %s26
      %32 = dma.hbm_to_vmem [thread:$0]  %s0, 6144, %s27, [#allocation5], 768, 768, 48
    $region5: #{tpu_custom_call.1} parent=1 // pred_fallthru
      _
    // Predicated region
    $region6: #{tpu_custom_call.1} parent=1 // pred_check
      _
    $region7: #{tpu_custom_call.1} parent=1 // pred_check_branch
      %34 = sbr.rel (0) target = $region9
    $region8: #{tpu_custom_call.1} parent=1 // pred_region
      %s36 = ssub.s32 36864, 36864
      %37 = vsyncadd [#allocation8], %s36
      %s38 = sshll.u32 [#allocation7], 4
      %s39 = int_to_ptr.vmem [resolvable:$true] %s38
      %44 = dma.hbm_to_vmem [thread:$0]  %s1, 36864, %s39, [#allocation8], 384, 384, 24
    $region9: #{tpu_custom_call.1} parent=1 // pred_fallthru
      _
    // Predicated region
    $region10: #{tpu_custom_call.1} parent=1 // pred_check
      _
    $region11: #{tpu_custom_call.1} parent=1 // pred_check_branch
      %46 = sbr.rel (0) target = $region13
    $region12: #{tpu_custom_call.1} parent=1 // pred_region
      %s48 = ssub.s32 96, 96
      %49 = vsyncadd [#allocation8], %s48
      %s51 = sshll.u32 [#allocation9], 4
      %s52 = int_to_ptr.vmem [resolvable:$true] %s51
      %54 = dma.hbm_to_vmem [thread:$0]  %s2, 96, %s52, [#allocation8]
    $region13: #{tpu_custom_call.1} parent=1 // pred_fallthru
      _
    // Predicated region
    $region14: #{tpu_custom_call.1} parent=1 // pred_check
      _
    $region15: #{tpu_custom_call.1} parent=1 // pred_check_branch
      %56 = sbr.rel (0) target = $region17
    $region16: #{tpu_custom_call.1} parent=1 // pred_region
      %s58 = ssub.s32 96, 96
      %59 = vsyncadd [#allocation11], %s58
      %s61 = sshll.u32 [#allocation10], 4
      %s62 = int_to_ptr.vmem [resolvable:$true] %s61
      %64 = dma.hbm_to_vmem [thread:$0]  %s3, 96, %s62, [#allocation11]
    $region17: #{tpu_custom_call.1} parent=1 // pred_fallthru
      _
    // Predicated region
    $region18: #{tpu_custom_call.1} parent=1 // pred_check
      _
    $region19: #{tpu_custom_call.1} parent=1 // pred_check_branch
      %66 = sbr.rel (0) target = $region21
    $region20: #{tpu_custom_call.1} parent=1 // pred_region
      %s68 = ssub.s32 96, 96
      %69 = vsyncadd [#allocation11], %s68
      %s71 = sshll.u32 [#allocation12], 4
      %s72 = int_to_ptr.vmem [resolvable:$true] %s71
      %74 = dma.hbm_to_vmem [thread:$0]  %s4, 96, %s72, [#allocation11]
    $region21: #{tpu_custom_call.1} parent=1 // pred_fallthru
      _
    // Predicated region
    $region22: #{tpu_custom_call.1} parent=1 // pred_check
      _
    $region23: #{tpu_custom_call.1} parent=1 // pred_check_branch
      %76 = sbr.rel (0) target = $region25
    $region24: #{tpu_custom_call.1} parent=1 // pred_region
      %s78 = ssub.s32 512, 512
      %79 = vsyncadd [#allocation14], %s78
      %s80 = sshll.u32 [#allocation13], 4
      %s81 = int_to_ptr.vmem [resolvable:$true] %s80
      %86 = dma.hbm_to_vmem [thread:$0]  %s5, 512, %s81, [#allocation14], 64, 64, 4
    $region25: #{tpu_custom_call.1} parent=1 // pred_fallthru
      _
    // Predicated region
    $region26: #{tpu_custom_call.1} parent=1 // pred_check
      _
    $region27: #{tpu_custom_call.1} parent=1 // pred_check_branch
      %88 = sbr.rel (0) target = $region29
    $region28: #{tpu_custom_call.1} parent=1 // pred_region
      %s90 = ssub.s32 96, 96
      %91 = vsyncadd [#allocation14], %s90
      %s93 = sshll.u32 [#allocation15], 4
      %s94 = int_to_ptr.vmem [resolvable:$true] %s93
      %96 = dma.hbm_to_vmem [thread:$0]  %s7, 96, %s94, [#allocation14]
    $region29: #{tpu_custom_call.1} parent=1 // pred_fallthru
      _
    // Predicated region
    $region30: #{tpu_custom_call.1} parent=1 // pred_check
      _
    $region31: #{tpu_custom_call.1} parent=1 // pred_check_branch
      %98 = sbr.rel (0) target = $region33
    $region32: #{tpu_custom_call.1} parent=1 // pred_region
      %s100 = ssub.s32 96, 96
      %101 = vsyncadd [#allocation17], %s100
      %s103 = sshll.u32 [#allocation16], 4
      %s104 = int_to_ptr.vmem [resolvable:$true] %s103
      %106 = dma.hbm_to_vmem [thread:$0]  %s8, 96, %s104, [#allocation17]
    $region33: #{tpu_custom_call.1} parent=1 // pred_fallthru
      _
    // Predicated region
    $region34: #{tpu_custom_call.1} parent=1 // pred_check
      _
    $region35: #{tpu_custom_call.1} parent=1 // pred_check_branch
      %108 = sbr.rel (0) target = $region37
    $region36: #{tpu_custom_call.1} parent=1 // pred_region
      %s110 = ssub.s32 96, 96
      %111 = vsyncadd [#allocation17], %s110
      %s113 = sshll.u32 [#allocation18], 4
      %s114 = int_to_ptr.vmem [resolvable:$true] %s113
      %116 = dma.hbm_to_vmem [thread:$0]  %s9, 96, %s114, [#allocation17]
    $region37: #{tpu_custom_call.1} parent=1 // pred_fallthru
      _
    // Predicated region
    $region38: #{tpu_custom_call.1} parent=1 // pred_check
      _
    $region39: #{tpu_custom_call.1} parent=1 // pred_check_branch
      %118 = sbr.rel (0) target = $region41
    $region40: #{tpu_custom_call.1} parent=1 // pred_region
      %119 = dma.done [#allocation5], 6144
    $region41: #{tpu_custom_call.1} parent=1 // pred_fallthru
      _
    // Predicated region
    $region42: #{tpu_custom_call.1} parent=1 // pred_check
      _
    $region43: #{tpu_custom_call.1} parent=1 // pred_check_branch
      %121 = sbr.rel (0) target = $region45
    $region44: #{tpu_custom_call.1} parent=1 // pred_region
      %122 = dma.done [#allocation8], 36864
    $region45: #{tpu_custom_call.1} parent=1 // pred_fallthru
      _
    // Predicated region
    $region46: #{tpu_custom_call.1} parent=1 // pred_check
      _
    $region47: #{tpu_custom_call.1} parent=1 // pred_check_branch
      %124 = sbr.rel (0) target = $region49
    $region48: #{tpu_custom_call.1} parent=1 // pred_region
      %125 = dma.done [#allocation8], 96
    $region49: #{tpu_custom_call.1} parent=1 // pred_fallthru
      _
    // Predicated region
    $region50: #{tpu_custom_call.1} parent=1 // pred_check
      _
    $region51: #{tpu_custom_call.1} parent=1 // pred_check_branch
      %127 = sbr.rel (0) target = $region53
    $region52: #{tpu_custom_call.1} parent=1 // pred_region
      %128 = dma.done [#allocation11], 96
    $region53: #{tpu_custom_call.1} parent=1 // pred_fallthru
      _
    // Predicated region
    $region54: #{tpu_custom_call.1} parent=1 // pred_check
      _
    $region55: #{tpu_custom_call.1} parent=1 // pred_check_branch
      %130 = sbr.rel (0) target = $region57
    $region56: #{tpu_custom_call.1} parent=1 // pred_region
      %131 = dma.done [#allocation11], 96
    $region57: #{tpu_custom_call.1} parent=1 // pred_fallthru
      _
    // Predicated region
    $region58: #{tpu_custom_call.1} parent=1 // pred_check
      _
    $region59: #{tpu_custom_call.1} parent=1 // pred_check_branch
      %133 = sbr.rel (0) target = $region61
    $region60: #{tpu_custom_call.1} parent=1 // pred_region
      %134 = dma.done [#allocation14], 512
    $region61: #{tpu_custom_call.1} parent=1 // pred_fallthru
      _
    // Predicated region
    $region62: #{tpu_custom_call.1} parent=1 // pred_check
      _
    $region63: #{tpu_custom_call.1} parent=1 // pred_check_branch
      %136 = sbr.rel (0) target = $region65
    $region64: #{tpu_custom_call.1} parent=1 // pred_region
      %137 = dma.done [#allocation14], 96
    $region65: #{tpu_custom_call.1} parent=1 // pred_fallthru
      _
    // Predicated region
    $region66: #{tpu_custom_call.1} parent=1 // pred_check
      _
    $region67: #{tpu_custom_call.1} parent=1 // pred_check_branch
      %139 = sbr.rel (0) target = $region69
    $region68: #{tpu_custom_call.1} parent=1 // pred_region
      %140 = dma.done [#allocation17], 96
    $region69: #{tpu_custom_call.1} parent=1 // pred_fallthru
      _
    // Predicated region
    $region70: #{tpu_custom_call.1} parent=1 // pred_check
      _
    $region71: #{tpu_custom_call.1} parent=1 // pred_check_branch
      %142 = sbr.rel (0) target = $region73
    $region72: #{tpu_custom_call.1} parent=1 // pred_region
      %143 = dma.done [#allocation17], 96
    $region73: #{tpu_custom_call.1} parent=1 // pred_fallthru
      _
    %s148 = sshll.u32 1, 14
    %s149 = sxor.u32 4294967295, %s148
    %s151 = sld [smem:[#allocation0]]
    %s152 = sadd.s32 2, %s151
    %s154 = sshll.u32 7, 26
    %s155 = sxor.u32 4294967295, %s154
    %s156 = sand.u32 0, %s155
    %s157 = sshll.u32 %s152, 26
    %s158 = sor.u32 %s156, %s157
    %s159 = sshll.u32 [#allocation2], 4
    %s160 = int_to_ptr.vmem [resolvable:$true] %s159
    %163 = sst [smem:[#allocation21]] 768
    %s164 = scalar_lea.smem [#allocation21], 1
    %165 = sst [smem:[%s164]] 768
    %s166 = scalar_lea.smem [#allocation21], 2
    %167 = sst [smem:[%s166]] 6
    %s168 = scalar_lea.smem [#allocation21], 3
    %169 = sst [smem:[%s168]] 64
    %s170 = scalar_lea.smem [#allocation21], 4
    %171 = sst [smem:[%s170]] 128
    %s172 = scalar_lea.smem [#allocation21], 5
    %173 = sst [smem:[%s172]] 2
    %s174 = scalar_lea.smem [#allocation21], 6
    %175 = sst [smem:[%s174]] 384
    %s176 = scalar_lea.smem [#allocation21], 7
    %177 = sst [smem:[%s176]] 64
    %s178 = scalar_lea.smem [#allocation21], 8
    %179 = sst [smem:[%s178]] 4
    %181 = dma.general %s6, 36864, %s160, [#allocation3], [#allocation20], [#allocation21], %s158, 0
    %v182 = vld [vmem:[#allocation13] sm:$0xf]
    %v183 = vld [vmem:[#allocation13 + $0x4] sm:$0xf]
    %v184 = vld [vmem:[#allocation13 + $0x8] sm:$0xf]
    %v185 = vld [vmem:[#allocation13 + $0xc] sm:$0xf]
    %v186 = vld [vmem:[#allocation13 + $0x10] sm:$0xf]
    %v187 = vld [vmem:[#allocation13 + $0x14] sm:$0xf]
    %v188 = vld [vmem:[#allocation13 + $0x18] sm:$0xf]
    %v189 = vld [vmem:[#allocation13 + $0x1c] sm:$0xf]
    %vm190 = vcmp.gt.bf16.partialorder %v182, 0
    %vm191 = vcmp.gt.bf16.partialorder %v183, 0
    %vm192 = vcmp.gt.bf16.partialorder %v184, 0
    %vm193 = vcmp.gt.bf16.partialorder %v185, 0
    %vm194 = vcmp.gt.bf16.partialorder %v186, 0
    %vm195 = vcmp.gt.bf16.partialorder %v187, 0
    %vm196 = vcmp.gt.bf16.partialorder %v188, 0
    %vm197 = vcmp.gt.bf16.partialorder %v189, 0
    %v198 = vld [vmem:[#allocation4] sm:$0xff]
    %v199 = vld [vmem:[#allocation4 + $0x8] sm:$0xff]
    %v200 = vld [vmem:[#allocation4 + $0x10] sm:$0xff]
    %v201 = vld [vmem:[#allocation4 + $0x18] sm:$0xff]
    %v202 = vld [vmem:[#allocation4 + $0x20] sm:$0xff]
    %v203 = vld [vmem:[#allocation4 + $0x28] sm:$0xff]
    %v204 = vld [vmem:[#allocation4 + $0x30] sm:$0xff]
    %v205 = vld [vmem:[#allocation4 + $0x38] sm:$0xff]
    %v206 = vld [vmem:[#allocation4 + $0x40] sm:$0xff]
    %v207 = vld [vmem:[#allocation4 + $0x48] sm:$0xff]
    %v208 = vld [vmem:[#allocation4 + $0x50] sm:$0xff]
    %v209 = vld [vmem:[#allocation4 + $0x58] sm:$0xff]
    %v210 = vld [vmem:[#allocation4 + $0x60] sm:$0xff]
    %v211 = vld [vmem:[#allocation4 + $0x68] sm:$0xff]
    %v212 = vld [vmem:[#allocation4 + $0x70] sm:$0xff]
    %v213 = vld [vmem:[#allocation4 + $0x78] sm:$0xff]
    %v214 = vld [vmem:[#allocation4 + $0x80] sm:$0xff]
    %v215 = vld [vmem:[#allocation4 + $0x88] sm:$0xff]
    %v216 = vld [vmem:[#allocation4 + $0x90] sm:$0xff]
    %v217 = vld [vmem:[#allocation4 + $0x98] sm:$0xff]
    %v218 = vld [vmem:[#allocation4 + $0xa0] sm:$0xff]
    %v219 = vld [vmem:[#allocation4 + $0xa8] sm:$0xff]
    %v220 = vld [vmem:[#allocation4 + $0xb0] sm:$0xff]
    %v221 = vld [vmem:[#allocation4 + $0xb8] sm:$0xff]
    %v222 = vld [vmem:[#allocation4 + $0xc0] sm:$0xff]
    %v223 = vld [vmem:[#allocation4 + $0xc8] sm:$0xff]
    %v224 = vld [vmem:[#allocation4 + $0xd0] sm:$0xff]
    %v225 = vld [vmem:[#allocation4 + $0xd8] sm:$0xff]
    %v226 = vld [vmem:[#allocation4 + $0xe0] sm:$0xff]
    %v227 = vld [vmem:[#allocation4 + $0xe8] sm:$0xff]
    %v228 = vld [vmem:[#allocation4 + $0xf0] sm:$0xff]
    %v229 = vld [vmem:[#allocation4 + $0xf8] sm:$0xff]
    %v230 = vld [vmem:[#allocation4 + $0x100] sm:$0xff]
    %v231 = vld [vmem:[#allocation4 + $0x108] sm:$0xff]
    %v232 = vld [vmem:[#allocation4 + $0x110] sm:$0xff]
    %v233 = vld [vmem:[#allocation4 + $0x118] sm:$0xff]
    %v234 = vld [vmem:[#allocation4 + $0x120] sm:$0xff]
    %v235 = vld [vmem:[#allocation4 + $0x128] sm:$0xff]
    %v236 = vld [vmem:[#allocation4 + $0x130] sm:$0xff]
    %v237 = vld [vmem:[#allocation4 + $0x138] sm:$0xff]
    %v238 = vld [vmem:[#allocation4 + $0x140] sm:$0xff]
    %v239 = vld [vmem:[#allocation4 + $0x148] sm:$0xff]
    %v240 = vld [vmem:[#allocation4 + $0x150] sm:$0xff]
    %v241 = vld [vmem:[#allocation4 + $0x158] sm:$0xff]
    %v242 = vld [vmem:[#allocation4 + $0x160] sm:$0xff]
    %v243 = vld [vmem:[#allocation4 + $0x168] sm:$0xff]
    %v244 = vld [vmem:[#allocation4 + $0x170] sm:$0xff]
    %v245 = vld [vmem:[#allocation4 + $0x178] sm:$0xff]
    %v246 = vpack.c.bf16 %v204, %v198
    %v247 = vpack.c.bf16 %v205, %v199
    %v248 = vpack.c.bf16 %v206, %v200
    %v249 = vpack.c.bf16 %v207, %v201
    %v250 = vpack.c.bf16 %v208, %v202
    %v251 = vpack.c.bf16 %v209, %v203
    %v252 = vpack.c.bf16 %v216, %v210
    %v253 = vpack.c.bf16 %v217, %v211
    %v254 = vpack.c.bf16 %v218, %v212
    %v255 = vpack.c.bf16 %v219, %v213
    %v256 = vpack.c.bf16 %v220, %v214
    %v257 = vpack.c.bf16 %v221, %v215
    %v258 = vpack.c.bf16 %v228, %v222
    %v259 = vpack.c.bf16 %v229, %v223
    %v260 = vpack.c.bf16 %v230, %v224
    %v261 = vpack.c.bf16 %v231, %v225
    %v262 = vpack.c.bf16 %v232, %v226
    %v263 = vpack.c.bf16 %v233, %v227
    %v264 = vpack.c.bf16 %v240, %v234
    %v265 = vpack.c.bf16 %v241, %v235
    %v266 = vpack.c.bf16 %v242, %v236
    %v267 = vpack.c.bf16 %v243, %v237
    %v268 = vpack.c.bf16 %v244, %v238
    %v269 = vpack.c.bf16 %v245, %v239
    %v270 = vld [vmem:[#allocation7] sm:$0xff]
    %v271 = vld [vmem:[#allocation7 + $0x8] sm:$0xff]
    %v272 = vld [vmem:[#allocation7 + $0x10] sm:$0xff]
    %v273 = vld [vmem:[#allocation7 + $0x18] sm:$0xff]
    %v274 = vld [vmem:[#allocation7 + $0x20] sm:$0xff]
    %v275 = vld [vmem:[#allocation7 + $0x28] sm:$0xff]
    %v276 = vld [vmem:[#allocation7 + $0x30] sm:$0xff]
    %v277 = vld [vmem:[#allocation7 + $0x38] sm:$0xff]
    %v278 = vld [vmem:[#allocation7 + $0x40] sm:$0xff]
    %v279 = vld [vmem:[#allocation7 + $0x48] sm:$0xff]
    %v280 = vld [vmem:[#allocation7 + $0x50] sm:$0xff]
    %v281 = vld [vmem:[#allocation7 + $0x58] sm:$0xff]
    %v282 = vld [vmem:[#allocation7 + $0x60] sm:$0xff]
    %v283 = vld [vmem:[#allocation7 + $0x68] sm:$0xff]
    %v284 = vld [vmem:[#allocation7 + $0x70] sm:$0xff]
    %v285 = vld [vmem:[#allocation7 + $0x78] sm:$0xff]
    %v286 = vld [vmem:[#allocation7 + $0x80] sm:$0xff]
    %v287 = vld [vmem:[#allocation7 + $0x88] sm:$0xff]
    %v288 = vld [vmem:[#allocation7 + $0x90] sm:$0xff]
    %v289 = vld [vmem:[#allocation7 + $0x98] sm:$0xff]
    %v290 = vld [vmem:[#allocation7 + $0xa0] sm:$0xff]
    %v291 = vld [vmem:[#allocation7 + $0xa8] sm:$0xff]
    %v292 = vld [vmem:[#allocation7 + $0xb0] sm:$0xff]
    %v293 = vld [vmem:[#allocation7 + $0xb8] sm:$0xff]
    %v294 = vld [vmem:[#allocation7 + $0xc0] sm:$0xff]
    %v295 = vld [vmem:[#allocation7 + $0xc8] sm:$0xff]
    %v296 = vld [vmem:[#allocation7 + $0xd0] sm:$0xff]
    %v297 = vld [vmem:[#allocation7 + $0xd8] sm:$0xff]
    %v298 = vld [vmem:[#allocation7 + $0xe0] sm:$0xff]
    %v299 = vld [vmem:[#allocation7 + $0xe8] sm:$0xff]
    %v300 = vld [vmem:[#allocation7 + $0xf0] sm:$0xff]
    %v301 = vld [vmem:[#allocation7 + $0xf8] sm:$0xff]
    %v302 = vld [vmem:[#allocation7 + $0x100] sm:$0xff]
    %v303 = vld [vmem:[#allocation7 + $0x108] sm:$0xff]
    %v304 = vld [vmem:[#allocation7 + $0x110] sm:$0xff]
    %v305 = vld [vmem:[#allocation7 + $0x118] sm:$0xff]
    %v306 = vld [vmem:[#allocation7 + $0x120] sm:$0xff]
    %v307 = vld [vmem:[#allocation7 + $0x128] sm:$0xff]
    %v308 = vld [vmem:[#allocation7 + $0x130] sm:$0xff]
    %v309 = vld [vmem:[#allocation7 + $0x138] sm:$0xff]
    %v310 = vld [vmem:[#allocation7 + $0x140] sm:$0xff]
    %v311 = vld [vmem:[#allocation7 + $0x148] sm:$0xff]
    %v312 = vld [vmem:[#allocation7 + $0x150] sm:$0xff]
    %v313 = vld [vmem:[#allocation7 + $0x158] sm:$0xff]
    %v314 = vld [vmem:[#allocation7 + $0x160] sm:$0xff]
    %v315 = vld [vmem:[#allocation7 + $0x168] sm:$0xff]
    %v316 = vld [vmem:[#allocation7 + $0x170] sm:$0xff]
    %v317 = vld [vmem:[#allocation7 + $0x178] sm:$0xff]
    %v318 = vld [vmem:[#allocation7 + $0x180] sm:$0xff]
    %v319 = vld [vmem:[#allocation7 + $0x188] sm:$0xff]
    %v320 = vld [vmem:[#allocation7 + $0x190] sm:$0xff]
    %v321 = vld [vmem:[#allocation7 + $0x198] sm:$0xff]
    %v322 = vld [vmem:[#allocation7 + $0x1a0] sm:$0xff]
    %v323 = vld [vmem:[#allocation7 + $0x1a8] sm:$0xff]
    %v324 = vld [vmem:[#allocation7 + $0x1b0] sm:$0xff]
    %v325 = vld [vmem:[#allocation7 + $0x1b8] sm:$0xff]
    %v326 = vld [vmem:[#allocation7 + $0x1c0] sm:$0xff]
    %v327 = vld [vmem:[#allocation7 + $0x1c8] sm:$0xff]
    %v328 = vld [vmem:[#allocation7 + $0x1d0] sm:$0xff]
    %v329 = vld [vmem:[#allocation7 + $0x1d8] sm:$0xff]
    %v330 = vld [vmem:[#allocation7 + $0x1e0] sm:$0xff]
    %v331 = vld [vmem:[#allocation7 + $0x1e8] sm:$0xff]
    %v332 = vld [vmem:[#allocation7 + $0x1f0] sm:$0xff]
    %v333 = vld [vmem:[#allocation7 + $0x1f8] sm:$0xff]
    %v334 = vld [vmem:[#allocation7 + $0x200] sm:$0xff]
    %v335 = vld [vmem:[#allocation7 + $0x208] sm:$0xff]
    %v336 = vld [vmem:[#allocation7 + $0x210] sm:$0xff]
    %v337 = vld [vmem:[#allocation7 + $0x218] sm:$0xff]
    %v338 = vld [vmem:[#allocation7 + $0x220] sm:$0xff]
    %v339 = vld [vmem:[#allocation7 + $0x228] sm:$0xff]
    %v340 = vld [vmem:[#allocation7 + $0x230] sm:$0xff]
    %v341 = vld [vmem:[#allocation7 + $0x238] sm:$0xff]
    %v342 = vld [vmem:[#allocation7 + $0x240] sm:$0xff]
    %v343 = vld [vmem:[#allocation7 + $0x248] sm:$0xff]
    %v344 = vld [vmem:[#allocation7 + $0x250] sm:$0xff]
    %v345 = vld [vmem:[#allocation7 + $0x258] sm:$0xff]
    %v346 = vld [vmem:[#allocation7 + $0x260] sm:$0xff]
    %v347 = vld [vmem:[#allocation7 + $0x268] sm:$0xff]
    %v348 = vld [vmem:[#allocation7 + $0x270] sm:$0xff]
    %v349 = vld [vmem:[#allocation7 + $0x278] sm:$0xff]
    %v350 = vld [vmem:[#allocation7 + $0x280] sm:$0xff]
    %v351 = vld [vmem:[#allocation7 + $0x288] sm:$0xff]
    %v352 = vld [vmem:[#allocation7 + $0x290] sm:$0xff]
    %v353 = vld [vmem:[#allocation7 + $0x298] sm:$0xff]
    %v354 = vld [vmem:[#allocation7 + $0x2a0] sm:$0xff]
    %v355 = vld [vmem:[#allocation7 + $0x2a8] sm:$0xff]
    %v356 = vld [vmem:[#allocation7 + $0x2b0] sm:$0xff]
    %v357 = vld [vmem:[#allocation7 + $0x2b8] sm:$0xff]
    %v358 = vld [vmem:[#allocation7 + $0x2c0] sm:$0xff]
    %v359 = vld [vmem:[#allocation7 + $0x2c8] sm:$0xff]
    %v360 = vld [vmem:[#allocation7 + $0x2d0] sm:$0xff]
    %v361 = vld [vmem:[#allocation7 + $0x2d8] sm:$0xff]
    %v362 = vld [vmem:[#allocation7 + $0x2e0] sm:$0xff]
    %v363 = vld [vmem:[#allocation7 + $0x2e8] sm:$0xff]
    %v364 = vld [vmem:[#allocation7 + $0x2f0] sm:$0xff]
    %v365 = vld [vmem:[#allocation7 + $0x2f8] sm:$0xff]
    %v366 = vld [vmem:[#allocation7 + $0x300] sm:$0xff]
    %v367 = vld [vmem:[#allocation7 + $0x308] sm:$0xff]
    %v368 = vld [vmem:[#allocation7 + $0x310] sm:$0xff]
    %v369 = vld [vmem:[#allocation7 + $0x318] sm:$0xff]
    %v370 = vld [vmem:[#allocation7 + $0x320] sm:$0xff]
    %v371 = vld [vmem:[#allocation7 + $0x328] sm:$0xff]
    %v372 = vld [vmem:[#allocation7 + $0x330] sm:$0xff]
    %v373 = vld [vmem:[#allocation7 + $0x338] sm:$0xff]
    %v374 = vld [vmem:[#allocation7 + $0x340] sm:$0xff]
    %v375 = vld [vmem:[#allocation7 + $0x348] sm:$0xff]
    %v376 = vld [vmem:[#allocation7 + $0x350] sm:$0xff]
    %v377 = vld [vmem:[#allocation7 + $0x358] sm:$0xff]
    %v378 = vld [vmem:[#allocation7 + $0x360] sm:$0xff]
    %v379 = vld [vmem:[#allocation7 + $0x368] sm:$0xff]
    %v380 = vld [vmem:[#allocation7 + $0x370] sm:$0xff]
    %v381 = vld [vmem:[#allocation7 + $0x378] sm:$0xff]
    %v382 = vld [vmem:[#allocation7 + $0x380] sm:$0xff]
    %v383 = vld [vmem:[#allocation7 + $0x388] sm:$0xff]
    %v384 = vld [vmem:[#allocation7 + $0x390] sm:$0xff]
    %v385 = vld [vmem:[#allocation7 + $0x398] sm:$0xff]
    %v386 = vld [vmem:[#allocation7 + $0x3a0] sm:$0xff]
    %v387 = vld [vmem:[#allocation7 + $0x3a8] sm:$0xff]
    %v388 = vld [vmem:[#allocation7 + $0x3b0] sm:$0xff]
    %v389 = vld [vmem:[#allocation7 + $0x3b8] sm:$0xff]
    %v390 = vld [vmem:[#allocation7 + $0x3c0] sm:$0xff]
    %v391 = vld [vmem:[#allocation7 + $0x3c8] sm:$0xff]
    %v392 = vld [vmem:[#allocation7 + $0x3d0] sm:$0xff]
    %v393 = vld [vmem:[#allocation7 + $0x3d8] sm:$0xff]
    %v394 = vld [vmem:[#allocation7 + $0x3e0] sm:$0xff]
    %v395 = vld [vmem:[#allocation7 + $0x3e8] sm:$0xff]
    %v396 = vld [vmem:[#allocation7 + $0x3f0] sm:$0xff]
    %v397 = vld [vmem:[#allocation7 + $0x3f8] sm:$0xff]
    %v398 = vld [vmem:[#allocation7 + $0x400] sm:$0xff]
    %v399 = vld [vmem:[#allocation7 + $0x408] sm:$0xff]
    %v400 = vld [vmem:[#allocation7 + $0x410] sm:$0xff]
    %v401 = vld [vmem:[#allocation7 + $0x418] sm:$0xff]
    %v402 = vld [vmem:[#allocation7 + $0x420] sm:$0xff]
    %v403 = vld [vmem:[#allocation7 + $0x428] sm:$0xff]
    %v404 = vld [vmem:[#allocation7 + $0x430] sm:$0xff]
    %v405 = vld [vmem:[#allocation7 + $0x438] sm:$0xff]
    %v406 = vld [vmem:[#allocation7 + $0x440] sm:$0xff]
    %v407 = vld [vmem:[#allocation7 + $0x448] sm:$0xff]
    %v408 = vld [vmem:[#allocation7 + $0x450] sm:$0xff]
    %v409 = vld [vmem:[#allocation7 + $0x458] sm:$0xff]
    %v410 = vld [vmem:[#allocation7 + $0x460] sm:$0xff]
    %v411 = vld [vmem:[#allocation7 + $0x468] sm:$0xff]
    %v412 = vld [vmem:[#allocation7 + $0x470] sm:$0xff]
    %v413 = vld [vmem:[#allocation7 + $0x478] sm:$0xff]
    %v414 = vld [vmem:[#allocation7 + $0x480] sm:$0xff]
    %v415 = vld [vmem:[#allocation7 + $0x488] sm:$0xff]
    %v416 = vld [vmem:[#allocation7 + $0x490] sm:$0xff]
    %v417 = vld [vmem:[#allocation7 + $0x498] sm:$0xff]
    %v418 = vld [vmem:[#allocation7 + $0x4a0] sm:$0xff]
    %v419 = vld [vmem:[#allocation7 + $0x4a8] sm:$0xff]
    %v420 = vld [vmem:[#allocation7 + $0x4b0] sm:$0xff]
    %v421 = vld [vmem:[#allocation7 + $0x4b8] sm:$0xff]
    %v422 = vld [vmem:[#allocation7 + $0x4c0] sm:$0xff]
    %v423 = vld [vmem:[#allocation7 + $0x4c8] sm:$0xff]
    %v424 = vld [vmem:[#allocation7 + $0x4d0] sm:$0xff]
    %v425 = vld [vmem:[#allocation7 + $0x4d8] sm:$0xff]
    %v426 = vld [vmem:[#allocation7 + $0x4e0] sm:$0xff]
    %v427 = vld [vmem:[#allocation7 + $0x4e8] sm:$0xff]
    %v428 = vld [vmem:[#allocation7 + $0x4f0] sm:$0xff]
    %v429 = vld [vmem:[#allocation7 + $0x4f8] sm:$0xff]
    %v430 = vld [vmem:[#allocation7 + $0x500] sm:$0xff]
    %v431 = vld [vmem:[#allocation7 + $0x508] sm:$0xff]
    %v432 = vld [vmem:[#allocation7 + $0x510] sm:$0xff]
    %v433 = vld [vmem:[#allocation7 + $0x518] sm:$0xff]
    %v434 = vld [vmem:[#allocation7 + $0x520] sm:$0xff]
    %v435 = vld [vmem:[#allocation7 + $0x528] sm:$0xff]
    %v436 = vld [vmem:[#allocation7 + $0x530] sm:$0xff]
    %v437 = vld [vmem:[#allocation7 + $0x538] sm:$0xff]
    %v438 = vld [vmem:[#allocation7 + $0x540] sm:$0xff]
    %v439 = vld [vmem:[#allocation7 + $0x548] sm:$0xff]
    %v440 = vld [vmem:[#allocation7 + $0x550] sm:$0xff]
    %v441 = vld [vmem:[#allocation7 + $0x558] sm:$0xff]
    %v442 = vld [vmem:[#allocation7 + $0x560] sm:$0xff]
    %v443 = vld [vmem:[#allocation7 + $0x568] sm:$0xff]
    %v444 = vld [vmem:[#allocation7 + $0x570] sm:$0xff]
    %v445 = vld [vmem:[#allocation7 + $0x578] sm:$0xff]
    %v446 = vld [vmem:[#allocation7 + $0x580] sm:$0xff]
    %v447 = vld [vmem:[#allocation7 + $0x588] sm:$0xff]
    %v448 = vld [vmem:[#allocation7 + $0x590] sm:$0xff]
    %v449 = vld [vmem:[#allocation7 + $0x598] sm:$0xff]
    %v450 = vld [vmem:[#allocation7 + $0x5a0] sm:$0xff]
    %v451 = vld [vmem:[#allocation7 + $0x5a8] sm:$0xff]
    %v452 = vld [vmem:[#allocation7 + $0x5b0] sm:$0xff]
    %v453 = vld [vmem:[#allocation7 + $0x5b8] sm:$0xff]
    %v454 = vld [vmem:[#allocation7 + $0x5c0] sm:$0xff]
    %v455 = vld [vmem:[#allocation7 + $0x5c8] sm:$0xff]
    %v456 = vld [vmem:[#allocation7 + $0x5d0] sm:$0xff]
    %v457 = vld [vmem:[#allocation7 + $0x5d8] sm:$0xff]
    %v458 = vld [vmem:[#allocation7 + $0x5e0] sm:$0xff]
    %v459 = vld [vmem:[#allocation7 + $0x5e8] sm:$0xff]
    %v460 = vld [vmem:[#allocation7 + $0x5f0] sm:$0xff]
    %v461 = vld [vmem:[#allocation7 + $0x5f8] sm:$0xff]
    %v462 = vld [vmem:[#allocation7 + $0x600] sm:$0xff]
    %v463 = vld [vmem:[#allocation7 + $0x608] sm:$0xff]
    %v464 = vld [vmem:[#allocation7 + $0x610] sm:$0xff]
    %v465 = vld [vmem:[#allocation7 + $0x618] sm:$0xff]
    %v466 = vld [vmem:[#allocation7 + $0x620] sm:$0xff]
    %v467 = vld [vmem:[#allocation7 + $0x628] sm:$0xff]
    %v468 = vld [vmem:[#allocation7 + $0x630] sm:$0xff]
    %v469 = vld [vmem:[#allocation7 + $0x638] sm:$0xff]
    %v470 = vld [vmem:[#allocation7 + $0x640] sm:$0xff]
    %v471 = vld [vmem:[#allocation7 + $0x648] sm:$0xff]
    %v472 = vld [vmem:[#allocation7 + $0x650] sm:$0xff]
    %v473 = vld [vmem:[#allocation7 + $0x658] sm:$0xff]
    %v474 = vld [vmem:[#allocation7 + $0x660] sm:$0xff]
    %v475 = vld [vmem:[#allocation7 + $0x668] sm:$0xff]
    %v476 = vld [vmem:[#allocation7 + $0x670] sm:$0xff]
    %v477 = vld [vmem:[#allocation7 + $0x678] sm:$0xff]
    %v478 = vld [vmem:[#allocation7 + $0x680] sm:$0xff]
    %v479 = vld [vmem:[#allocation7 + $0x688] sm:$0xff]
    %v480 = vld [vmem:[#allocation7 + $0x690] sm:$0xff]
    %v481 = vld [vmem:[#allocation7 + $0x698] sm:$0xff]
    %v482 = vld [vmem:[#allocation7 + $0x6a0] sm:$0xff]
    %v483 = vld [vmem:[#allocation7 + $0x6a8] sm:$0xff]
    %v484 = vld [vmem:[#allocation7 + $0x6b0] sm:$0xff]
    %v485 = vld [vmem:[#allocation7 + $0x6b8] sm:$0xff]
    %v486 = vld [vmem:[#allocation7 + $0x6c0] sm:$0xff]
    %v487 = vld [vmem:[#allocation7 + $0x6c8] sm:$0xff]
    %v488 = vld [vmem:[#allocation7 + $0x6d0] sm:$0xff]
    %v489 = vld [vmem:[#allocation7 + $0x6d8] sm:$0xff]
    %v490 = vld [vmem:[#allocation7 + $0x6e0] sm:$0xff]
    %v491 = vld [vmem:[#allocation7 + $0x6e8] sm:$0xff]
    %v492 = vld [vmem:[#allocation7 + $0x6f0] sm:$0xff]
    %v493 = vld [vmem:[#allocation7 + $0x6f8] sm:$0xff]
    %v494 = vld [vmem:[#allocation7 + $0x700] sm:$0xff]
    %v495 = vld [vmem:[#allocation7 + $0x708] sm:$0xff]
    %v496 = vld [vmem:[#allocation7 + $0x710] sm:$0xff]
    %v497 = vld [vmem:[#allocation7 + $0x718] sm:$0xff]
    %v498 = vld [vmem:[#allocation7 + $0x720] sm:$0xff]
    %v499 = vld [vmem:[#allocation7 + $0x728] sm:$0xff]
    %v500 = vld [vmem:[#allocation7 + $0x730] sm:$0xff]
    %v501 = vld [vmem:[#allocation7 + $0x738] sm:$0xff]
    %v502 = vld [vmem:[#allocation7 + $0x740] sm:$0xff]
    %v503 = vld [vmem:[#allocation7 + $0x748] sm:$0xff]
    %v504 = vld [vmem:[#allocation7 + $0x750] sm:$0xff]
    %v505 = vld [vmem:[#allocation7 + $0x758] sm:$0xff]
    %v506 = vld [vmem:[#allocation7 + $0x760] sm:$0xff]
    %v507 = vld [vmem:[#allocation7 + $0x768] sm:$0xff]
    %v508 = vld [vmem:[#allocation7 + $0x770] sm:$0xff]
    %v509 = vld [vmem:[#allocation7 + $0x778] sm:$0xff]
    %v510 = vld [vmem:[#allocation7 + $0x780] sm:$0xff]
    %v511 = vld [vmem:[#allocation7 + $0x788] sm:$0xff]
    %v512 = vld [vmem:[#allocation7 + $0x790] sm:$0xff]
    %v513 = vld [vmem:[#allocation7 + $0x798] sm:$0xff]
    %v514 = vld [vmem:[#allocation7 + $0x7a0] sm:$0xff]
    %v515 = vld [vmem:[#allocation7 + $0x7a8] sm:$0xff]
    %v516 = vld [vmem:[#allocation7 + $0x7b0] sm:$0xff]
    %v517 = vld [vmem:[#allocation7 + $0x7b8] sm:$0xff]
    %v518 = vld [vmem:[#allocation7 + $0x7c0] sm:$0xff]
    %v519 = vld [vmem:[#allocation7 + $0x7c8] sm:$0xff]
    %v520 = vld [vmem:[#allocation7 + $0x7d0] sm:$0xff]
    %v521 = vld [vmem:[#allocation7 + $0x7d8] sm:$0xff]
    %v522 = vld [vmem:[#allocation7 + $0x7e0] sm:$0xff]
    %v523 = vld [vmem:[#allocation7 + $0x7e8] sm:$0xff]
    %v524 = vld [vmem:[#allocation7 + $0x7f0] sm:$0xff]
    %v525 = vld [vmem:[#allocation7 + $0x7f8] sm:$0xff]
    %v526 = vld [vmem:[#allocation7 + $0x800] sm:$0xff]
    %v527 = vld [vmem:[#allocation7 + $0x808] sm:$0xff]
    %v528 = vld [vmem:[#allocation7 + $0x810] sm:$0xff]
    %v529 = vld [vmem:[#allocation7 + $0x818] sm:$0xff]
    %v530 = vld [vmem:[#allocation7 + $0x820] sm:$0xff]
    %v531 = vld [vmem:[#allocation7 + $0x828] sm:$0xff]
    %v532 = vld [vmem:[#allocation7 + $0x830] sm:$0xff]
    %v533 = vld [vmem:[#allocation7 + $0x838] sm:$0xff]
    %v534 = vld [vmem:[#allocation7 + $0x840] sm:$0xff]
    %v535 = vld [vmem:[#allocation7 + $0x848] sm:$0xff]
    %v536 = vld [vmem:[#allocation7 + $0x850] sm:$0xff]
    %v537 = vld [vmem:[#allocation7 + $0x858] sm:$0xff]
    %v538 = vld [vmem:[#allocation7 + $0x860] sm:$0xff]
    %v539 = vld [vmem:[#allocation7 + $0x868] sm:$0xff]
    %v540 = vld [vmem:[#allocation7 + $0x870] sm:$0xff]
    %v541 = vld [vmem:[#allocation7 + $0x878] sm:$0xff]
    %v542 = vld [vmem:[#allocation7 + $0x880] sm:$0xff]
    %v543 = vld [vmem:[#allocation7 + $0x888] sm:$0xff]
    %v544 = vld [vmem:[#allocation7 + $0x890] sm:$0xff]
    %v545 = vld [vmem:[#allocation7 + $0x898] sm:$0xff]
    %v546 = vld [vmem:[#allocation7 + $0x8a0] sm:$0xff]
    %v547 = vld [vmem:[#allocation7 + $0x8a8] sm:$0xff]
    %v548 = vld [vmem:[#allocation7 + $0x8b0] sm:$0xff]
    %v549 = vld [vmem:[#allocation7 + $0x8b8] sm:$0xff]
    %v550 = vld [vmem:[#allocation7 + $0x8c0] sm:$0xff]
    %v551 = vld [vmem:[#allocation7 + $0x8c8] sm:$0xff]
    %v552 = vld [vmem:[#allocation7 + $0x8d0] sm:$0xff]
    %v553 = vld [vmem:[#allocation7 + $0x8d8] sm:$0xff]
    %v554 = vld [vmem:[#allocation7 + $0x8e0] sm:$0xff]
    %v555 = vld [vmem:[#allocation7 + $0x8e8] sm:$0xff]
    %v556 = vld [vmem:[#allocation7 + $0x8f0] sm:$0xff]
    %v557 = vld [vmem:[#allocation7 + $0x8f8] sm:$0xff]
    %v846 = vunpack.c.l.b16 %v270
    %v847 = vunpack.c.h.b16 %v270
    %v848 = vunpack.c.l.b16 %v271
    %v849 = vunpack.c.h.b16 %v271
    %v850 = vunpack.c.l.b16 %v272
    %v851 = vunpack.c.h.b16 %v272
    %v852 = vunpack.c.l.b16 %v273
    %v853 = vunpack.c.h.b16 %v273
    %v854 = vunpack.c.l.b16 %v274
    %v855 = vunpack.c.h.b16 %v274
    %v856 = vunpack.c.l.b16 %v275
    %v857 = vunpack.c.h.b16 %v275
    %v858 = vunpack.c.l.b16 %v276
    %v859 = vunpack.c.h.b16 %v276
    %v860 = vunpack.c.l.b16 %v277
    %v861 = vunpack.c.h.b16 %v277
    %v862 = vunpack.c.l.b16 %v278
    %v863 = vunpack.c.h.b16 %v278
    %v864 = vunpack.c.l.b16 %v279
    %v865 = vunpack.c.h.b16 %v279
    %v866 = vunpack.c.l.b16 %v280
    %v867 = vunpack.c.h.b16 %v280
    %v868 = vunpack.c.l.b16 %v281
    %v869 = vunpack.c.h.b16 %v281
    %v870 = vunpack.c.l.b16 %v282
    %v871 = vunpack.c.h.b16 %v282
    %v872 = vunpack.c.l.b16 %v283
    %v873 = vunpack.c.h.b16 %v283
    %v874 = vunpack.c.l.b16 %v284
    %v875 = vunpack.c.h.b16 %v284
    %v876 = vunpack.c.l.b16 %v285
    %v877 = vunpack.c.h.b16 %v285
    %v878 = vunpack.c.l.b16 %v286
    %v879 = vunpack.c.h.b16 %v286
    %v880 = vunpack.c.l.b16 %v287
    %v881 = vunpack.c.h.b16 %v287
    %v882 = vunpack.c.l.b16 %v288
    %v883 = vunpack.c.h.b16 %v288
    %v884 = vunpack.c.l.b16 %v289
    %v885 = vunpack.c.h.b16 %v289
    %v886 = vunpack.c.l.b16 %v290
    %v887 = vunpack.c.h.b16 %v290
    %v888 = vunpack.c.l.b16 %v291
    %v889 = vunpack.c.h.b16 %v291
    %v890 = vunpack.c.l.b16 %v292
    %v891 = vunpack.c.h.b16 %v292
    %v892 = vunpack.c.l.b16 %v293
    %v893 = vunpack.c.h.b16 %v293
    %v894 = vunpack.c.l.b16 %v294
    %v895 = vunpack.c.h.b16 %v294
    %v896 = vunpack.c.l.b16 %v295
    %v897 = vunpack.c.h.b16 %v295
    %v898 = vunpack.c.l.b16 %v296
    %v899 = vunpack.c.h.b16 %v296
    %v900 = vunpack.c.l.b16 %v297
    %v901 = vunpack.c.h.b16 %v297
    %v902 = vunpack.c.l.b16 %v298
    %v903 = vunpack.c.h.b16 %v298
    %v904 = vunpack.c.l.b16 %v299
    %v905 = vunpack.c.h.b16 %v299
    %v906 = vunpack.c.l.b16 %v300
    %v907 = vunpack.c.h.b16 %v300
    %v908 = vunpack.c.l.b16 %v301
    %v909 = vunpack.c.h.b16 %v301
    %v910 = vunpack.c.l.b16 %v302
    %v911 = vunpack.c.h.b16 %v302
    %v912 = vunpack.c.l.b16 %v303
    %v913 = vunpack.c.h.b16 %v303
    %v914 = vunpack.c.l.b16 %v304
    %v915 = vunpack.c.h.b16 %v304
    %v916 = vunpack.c.l.b16 %v305
    %v917 = vunpack.c.h.b16 %v305
    %v918 = vunpack.c.l.b16 %v306
    %v919 = vunpack.c.h.b16 %v306
    %v920 = vunpack.c.l.b16 %v307
    %v921 = vunpack.c.h.b16 %v307
    %v922 = vunpack.c.l.b16 %v308
    %v923 = vunpack.c.h.b16 %v308
    %v924 = vunpack.c.l.b16 %v309
    %v925 = vunpack.c.h.b16 %v309
    %v926 = vunpack.c.l.b16 %v310
    %v927 = vunpack.c.h.b16 %v310
    %v928 = vunpack.c.l.b16 %v311
    %v929 = vunpack.c.h.b16 %v311
    %v930 = vunpack.c.l.b16 %v312
    %v931 = vunpack.c.h.b16 %v312
    %v932 = vunpack.c.l.b16 %v313
    %v933 = vunpack.c.h.b16 %v313
    %v934 = vunpack.c.l.b16 %v314
    %v935 = vunpack.c.h.b16 %v314
    %v936 = vunpack.c.l.b16 %v315
    %v937 = vunpack.c.h.b16 %v315
    %v938 = vunpack.c.l.b16 %v316
    %v939 = vunpack.c.h.b16 %v316
    %v940 = vunpack.c.l.b16 %v317
    %v941 = vunpack.c.h.b16 %v317
    %v942 = vunpack.c.l.b16 %v318
    %v943 = vunpack.c.h.b16 %v318
    %v944 = vunpack.c.l.b16 %v319
    %v945 = vunpack.c.h.b16 %v319
    %v946 = vunpack.c.l.b16 %v320
    %v947 = vunpack.c.h.b16 %v320
    %v948 = vunpack.c.l.b16 %v321
    %v949 = vunpack.c.h.b16 %v321
    %v950 = vunpack.c.l.b16 %v322
    %v951 = vunpack.c.h.b16 %v322
    %v952 = vunpack.c.l.b16 %v323
    %v953 = vunpack.c.h.b16 %v323
    %v954 = vunpack.c.l.b16 %v324
    %v955 = vunpack.c.h.b16 %v324
    %v956 = vunpack.c.l.b16 %v325
    %v957 = vunpack.c.h.b16 %v325
    %v958 = vunpack.c.l.b16 %v326
    %v959 = vunpack.c.h.b16 %v326
    %v960 = vunpack.c.l.b16 %v327
    %v961 = vunpack.c.h.b16 %v327
    %v962 = vunpack.c.l.b16 %v328
    %v963 = vunpack.c.h.b16 %v328
    %v964 = vunpack.c.l.b16 %v329
    %v965 = vunpack.c.h.b16 %v329
    %v966 = vunpack.c.l.b16 %v330
    %v967 = vunpack.c.h.b16 %v330
    %v968 = vunpack.c.l.b16 %v331
    %v969 = vunpack.c.h.b16 %v331
    %v970 = vunpack.c.l.b16 %v332
    %v971 = vunpack.c.h.b16 %v332
    %v972 = vunpack.c.l.b16 %v333
    %v973 = vunpack.c.h.b16 %v333
    %v974 = vunpack.c.l.b16 %v334
    %v975 = vunpack.c.h.b16 %v334
    %v976 = vunpack.c.l.b16 %v335
    %v977 = vunpack.c.h.b16 %v335
    %v978 = vunpack.c.l.b16 %v336
    %v979 = vunpack.c.h.b16 %v336
    %v980 = vunpack.c.l.b16 %v337
    %v981 = vunpack.c.h.b16 %v337
    %v982 = vunpack.c.l.b16 %v338
    %v983 = vunpack.c.h.b16 %v338
    %v984 = vunpack.c.l.b16 %v339
    %v985 = vunpack.c.h.b16 %v339
    %v986 = vunpack.c.l.b16 %v340
    %v987 = vunpack.c.h.b16 %v340
    %v988 = vunpack.c.l.b16 %v341
    %v989 = vunpack.c.h.b16 %v341
    %v990 = vunpack.c.l.b16 %v342
    %v991 = vunpack.c.h.b16 %v342
    %v992 = vunpack.c.l.b16 %v343
    %v993 = vunpack.c.h.b16 %v343
    %v994 = vunpack.c.l.b16 %v344
    %v995 = vunpack.c.h.b16 %v344
    %v996 = vunpack.c.l.b16 %v345
    %v997 = vunpack.c.h.b16 %v345
    %v998 = vunpack.c.l.b16 %v346
    %v999 = vunpack.c.h.b16 %v346
    %v1000 = vunpack.c.l.b16 %v347
    %v1001 = vunpack.c.h.b16 %v347
    %v1002 = vunpack.c.l.b16 %v348
    %v1003 = vunpack.c.h.b16 %v348
    %v1004 = vunpack.c.l.b16 %v349
    %v1005 = vunpack.c.h.b16 %v349
    %v1006 = vunpack.c.l.b16 %v350
    %v1007 = vunpack.c.h.b16 %v350
    %v1008 = vunpack.c.l.b16 %v351
    %v1009 = vunpack.c.h.b16 %v351
    %v1010 = vunpack.c.l.b16 %v352
    %v1011 = vunpack.c.h.b16 %v352
    %v1012 = vunpack.c.l.b16 %v353
    %v1013 = vunpack.c.h.b16 %v353
    %v1014 = vunpack.c.l.b16 %v354
    %v1015 = vunpack.c.h.b16 %v354
    %v1016 = vunpack.c.l.b16 %v355
    %v1017 = vunpack.c.h.b16 %v355
    %v1018 = vunpack.c.l.b16 %v356
    %v1019 = vunpack.c.h.b16 %v356
    %v1020 = vunpack.c.l.b16 %v357
    %v1021 = vunpack.c.h.b16 %v357
    %v1022 = vunpack.c.l.b16 %v358
    %v1023 = vunpack.c.h.b16 %v358
    %v1024 = vunpack.c.l.b16 %v359
    %v1025 = vunpack.c.h.b16 %v359
    %v1026 = vunpack.c.l.b16 %v360
    %v1027 = vunpack.c.h.b16 %v360
    %v1028 = vunpack.c.l.b16 %v361
    %v1029 = vunpack.c.h.b16 %v361
    %v1030 = vunpack.c.l.b16 %v362
    %v1031 = vunpack.c.h.b16 %v362
    %v1032 = vunpack.c.l.b16 %v363
    %v1033 = vunpack.c.h.b16 %v363
    %v1034 = vunpack.c.l.b16 %v364
    %v1035 = vunpack.c.h.b16 %v364
    %v1036 = vunpack.c.l.b16 %v365
    %v1037 = vunpack.c.h.b16 %v365
    %v1038 = vunpack.c.l.b16 %v366
    %v1039 = vunpack.c.h.b16 %v366
    %v1040 = vunpack.c.l.b16 %v367
    %v1041 = vunpack.c.h.b16 %v367
    %v1042 = vunpack.c.l.b16 %v368
    %v1043 = vunpack.c.h.b16 %v368
    %v1044 = vunpack.c.l.b16 %v369
    %v1045 = vunpack.c.h.b16 %v369
    %v1046 = vunpack.c.l.b16 %v370
    %v1047 = vunpack.c.h.b16 %v370
    %v1048 = vunpack.c.l.b16 %v371
    %v1049 = vunpack.c.h.b16 %v371
    %v1050 = vunpack.c.l.b16 %v372
    %v1051 = vunpack.c.h.b16 %v372
    %v1052 = vunpack.c.l.b16 %v373
    %v1053 = vunpack.c.h.b16 %v373
    %v1054 = vunpack.c.l.b16 %v374
    %v1055 = vunpack.c.h.b16 %v374
    %v1056 = vunpack.c.l.b16 %v375
    %v1057 = vunpack.c.h.b16 %v375
    %v1058 = vunpack.c.l.b16 %v376
    %v1059 = vunpack.c.h.b16 %v376
    %v1060 = vunpack.c.l.b16 %v377
    %v1061 = vunpack.c.h.b16 %v377
    %v1062 = vunpack.c.l.b16 %v378
    %v1063 = vunpack.c.h.b16 %v378
    %v1064 = vunpack.c.l.b16 %v379
    %v1065 = vunpack.c.h.b16 %v379
    %v1066 = vunpack.c.l.b16 %v380
    %v1067 = vunpack.c.h.b16 %v380
    %v1068 = vunpack.c.l.b16 %v381
    %v1069 = vunpack.c.h.b16 %v381
    %v1070 = vunpack.c.l.b16 %v382
    %v1071 = vunpack.c.h.b16 %v382
    %v1072 = vunpack.c.l.b16 %v383
    %v1073 = vunpack.c.h.b16 %v383
    %v1074 = vunpack.c.l.b16 %v384
    %v1075 = vunpack.c.h.b16 %v384
    %v1076 = vunpack.c.l.b16 %v385
    %v1077 = vunpack.c.h.b16 %v385
    %v1078 = vunpack.c.l.b16 %v386
    %v1079 = vunpack.c.h.b16 %v386
    %v1080 = vunpack.c.l.b16 %v387
    %v1081 = vunpack.c.h.b16 %v387
    %v1082 = vunpack.c.l.b16 %v388
    %v1083 = vunpack.c.h.b16 %v388
    %v1084 = vunpack.c.l.b16 %v389
    %v1085 = vunpack.c.h.b16 %v389
    %v1086 = vunpack.c.l.b16 %v390
    %v1087 = vunpack.c.h.b16 %v390
    %v1088 = vunpack.c.l.b16 %v391
    %v1089 = vunpack.c.h.b16 %v391
    %v1090 = vunpack.c.l.b16 %v392
    %v1091 = vunpack.c.h.b16 %v392
    %v1092 = vunpack.c.l.b16 %v393
    %v1093 = vunpack.c.h.b16 %v393
    %v1094 = vunpack.c.l.b16 %v394
    %v1095 = vunpack.c.h.b16 %v394
    %v1096 = vunpack.c.l.b16 %v395
    %v1097 = vunpack.c.h.b16 %v395
    %v1098 = vunpack.c.l.b16 %v396
    %v1099 = vunpack.c.h.b16 %v396
    %v1100 = vunpack.c.l.b16 %v397
    %v1101 = vunpack.c.h.b16 %v397
    %v1102 = vunpack.c.l.b16 %v398
    %v1103 = vunpack.c.h.b16 %v398
    %v1104 = vunpack.c.l.b16 %v399
    %v1105 = vunpack.c.h.b16 %v399
    %v1106 = vunpack.c.l.b16 %v400
    %v1107 = vunpack.c.h.b16 %v400
    %v1108 = vunpack.c.l.b16 %v401
    %v1109 = vunpack.c.h.b16 %v401
    %v1110 = vunpack.c.l.b16 %v402
    %v1111 = vunpack.c.h.b16 %v402
    %v1112 = vunpack.c.l.b16 %v403
    %v1113 = vunpack.c.h.b16 %v403
    %v1114 = vunpack.c.l.b16 %v404
    %v1115 = vunpack.c.h.b16 %v404
    %v1116 = vunpack.c.l.b16 %v405
    %v1117 = vunpack.c.h.b16 %v405
    %v1118 = vunpack.c.l.b16 %v406
    %v1119 = vunpack.c.h.b16 %v406
    %v1120 = vunpack.c.l.b16 %v407
    %v1121 = vunpack.c.h.b16 %v407
    %v1122 = vunpack.c.l.b16 %v408
    %v1123 = vunpack.c.h.b16 %v408
    %v1124 = vunpack.c.l.b16 %v409
    %v1125 = vunpack.c.h.b16 %v409
    %v1126 = vunpack.c.l.b16 %v410
    %v1127 = vunpack.c.h.b16 %v410
    %v1128 = vunpack.c.l.b16 %v411
    %v1129 = vunpack.c.h.b16 %v411
    %v1130 = vunpack.c.l.b16 %v412
    %v1131 = vunpack.c.h.b16 %v412
    %v1132 = vunpack.c.l.b16 %v413
    %v1133 = vunpack.c.h.b16 %v413
    %v1134 = vunpack.c.l.b16 %v414
    %v1135 = vunpack.c.h.b16 %v414
    %v1136 = vunpack.c.l.b16 %v415
    %v1137 = vunpack.c.h.b16 %v415
    %v1138 = vunpack.c.l.b16 %v416
    %v1139 = vunpack.c.h.b16 %v416
    %v1140 = vunpack.c.l.b16 %v417
    %v1141 = vunpack.c.h.b16 %v417
    %v1142 = vunpack.c.l.b16 %v418
    %v1143 = vunpack.c.h.b16 %v418
    %v1144 = vunpack.c.l.b16 %v419
    %v1145 = vunpack.c.h.b16 %v419
    %v1146 = vunpack.c.l.b16 %v420
    %v1147 = vunpack.c.h.b16 %v420
    %v1148 = vunpack.c.l.b16 %v421
    %v1149 = vunpack.c.h.b16 %v421
    %v1150 = vunpack.c.l.b16 %v422
    %v1151 = vunpack.c.h.b16 %v422
    %v1152 = vunpack.c.l.b16 %v423
    %v1153 = vunpack.c.h.b16 %v423
    %v1154 = vunpack.c.l.b16 %v424
    %v1155 = vunpack.c.h.b16 %v424
    %v1156 = vunpack.c.l.b16 %v425
    %v1157 = vunpack.c.h.b16 %v425
    %v1158 = vunpack.c.l.b16 %v426
    %v1159 = vunpack.c.h.b16 %v426
    %v1160 = vunpack.c.l.b16 %v427
    %v1161 = vunpack.c.h.b16 %v427
    %v1162 = vunpack.c.l.b16 %v428
    %v1163 = vunpack.c.h.b16 %v428
    %v1164 = vunpack.c.l.b16 %v429
    %v1165 = vunpack.c.h.b16 %v429
    %v1166 = vunpack.c.l.b16 %v430
    %v1167 = vunpack.c.h.b16 %v430
    %v1168 = vunpack.c.l.b16 %v431
    %v1169 = vunpack.c.h.b16 %v431
    %v1170 = vunpack.c.l.b16 %v432
    %v1171 = vunpack.c.h.b16 %v432
    %v1172 = vunpack.c.l.b16 %v433
    %v1173 = vunpack.c.h.b16 %v433
    %v1174 = vunpack.c.l.b16 %v434
    %v1175 = vunpack.c.h.b16 %v434
    %v1176 = vunpack.c.l.b16 %v435
    %v1177 = vunpack.c.h.b16 %v435
    %v1178 = vunpack.c.l.b16 %v436
    %v1179 = vunpack.c.h.b16 %v436
    %v1180 = vunpack.c.l.b16 %v437
    %v1181 = vunpack.c.h.b16 %v437
    %v1182 = vunpack.c.l.b16 %v438
    %v1183 = vunpack.c.h.b16 %v438
    %v1184 = vunpack.c.l.b16 %v439
    %v1185 = vunpack.c.h.b16 %v439
    %v1186 = vunpack.c.l.b16 %v440
    %v1187 = vunpack.c.h.b16 %v440
    %v1188 = vunpack.c.l.b16 %v441
    %v1189 = vunpack.c.h.b16 %v441
    %v1190 = vunpack.c.l.b16 %v442
    %v1191 = vunpack.c.h.b16 %v442
    %v1192 = vunpack.c.l.b16 %v443
    %v1193 = vunpack.c.h.b16 %v443
    %v1194 = vunpack.c.l.b16 %v444
    %v1195 = vunpack.c.h.b16 %v444
    %v1196 = vunpack.c.l.b16 %v445
    %v1197 = vunpack.c.h.b16 %v445
    %v1198 = vunpack.c.l.b16 %v446
    %v1199 = vunpack.c.h.b16 %v446
    %v1200 = vunpack.c.l.b16 %v447
    %v1201 = vunpack.c.h.b16 %v447
    %v1202 = vunpack.c.l.b16 %v448
    %v1203 = vunpack.c.h.b16 %v448
    %v1204 = vunpack.c.l.b16 %v449
    %v1205 = vunpack.c.h.b16 %v449
    %v1206 = vunpack.c.l.b16 %v450
    %v1207 = vunpack.c.h.b16 %v450
    %v1208 = vunpack.c.l.b16 %v451
    %v1209 = vunpack.c.h.b16 %v451
    %v1210 = vunpack.c.l.b16 %v452
    %v1211 = vunpack.c.h.b16 %v452
    %v1212 = vunpack.c.l.b16 %v453
    %v1213 = vunpack.c.h.b16 %v453
    %v1214 = vunpack.c.l.b16 %v454
    %v1215 = vunpack.c.h.b16 %v454
    %v1216 = vunpack.c.l.b16 %v455
    %v1217 = vunpack.c.h.b16 %v455
    %v1218 = vunpack.c.l.b16 %v456
    %v1219 = vunpack.c.h.b16 %v456
    %v1220 = vunpack.c.l.b16 %v457
    %v1221 = vunpack.c.h.b16 %v457
    %v1222 = vunpack.c.l.b16 %v458
    %v1223 = vunpack.c.h.b16 %v458
    %v1224 = vunpack.c.l.b16 %v459
    %v1225 = vunpack.c.h.b16 %v459
    %v1226 = vunpack.c.l.b16 %v460
    %v1227 = vunpack.c.h.b16 %v460
    %v1228 = vunpack.c.l.b16 %v461
    %v1229 = vunpack.c.h.b16 %v461
    %v1230 = vunpack.c.l.b16 %v462
    %v1231 = vunpack.c.h.b16 %v462
    %v1232 = vunpack.c.l.b16 %v463
    %v1233 = vunpack.c.h.b16 %v463
    %v1234 = vunpack.c.l.b16 %v464
    %v1235 = vunpack.c.h.b16 %v464
    %v1236 = vunpack.c.l.b16 %v465
    %v1237 = vunpack.c.h.b16 %v465
    %v1238 = vunpack.c.l.b16 %v466
    %v1239 = vunpack.c.h.b16 %v466
    %v1240 = vunpack.c.l.b16 %v467
    %v1241 = vunpack.c.h.b16 %v467
    %v1242 = vunpack.c.l.b16 %v468
    %v1243 = vunpack.c.h.b16 %v468
    %v1244 = vunpack.c.l.b16 %v469
    %v1245 = vunpack.c.h.b16 %v469
    %v1246 = vunpack.c.l.b16 %v470
    %v1247 = vunpack.c.h.b16 %v470
    %v1248 = vunpack.c.l.b16 %v471
    %v1249 = vunpack.c.h.b16 %v471
    %v1250 = vunpack.c.l.b16 %v472
    %v1251 = vunpack.c.h.b16 %v472
    %v1252 = vunpack.c.l.b16 %v473
    %v1253 = vunpack.c.h.b16 %v473
    %v1254 = vunpack.c.l.b16 %v474
    %v1255 = vunpack.c.h.b16 %v474
    %v1256 = vunpack.c.l.b16 %v475
    %v1257 = vunpack.c.h.b16 %v475
    %v1258 = vunpack.c.l.b16 %v476
    %v1259 = vunpack.c.h.b16 %v476
    %v1260 = vunpack.c.l.b16 %v477
    %v1261 = vunpack.c.h.b16 %v477
    %v1262 = vunpack.c.l.b16 %v478
    %v1263 = vunpack.c.h.b16 %v478
    %v1264 = vunpack.c.l.b16 %v479
    %v1265 = vunpack.c.h.b16 %v479
    %v1266 = vunpack.c.l.b16 %v480
    %v1267 = vunpack.c.h.b16 %v480
    %v1268 = vunpack.c.l.b16 %v481
    %v1269 = vunpack.c.h.b16 %v481
    %v1270 = vunpack.c.l.b16 %v482
    %v1271 = vunpack.c.h.b16 %v482
    %v1272 = vunpack.c.l.b16 %v483
    %v1273 = vunpack.c.h.b16 %v483
    %v1274 = vunpack.c.l.b16 %v484
    %v1275 = vunpack.c.h.b16 %v484
    %v1276 = vunpack.c.l.b16 %v485
    %v1277 = vunpack.c.h.b16 %v485
    %v1278 = vunpack.c.l.b16 %v486
    %v1279 = vunpack.c.h.b16 %v486
    %v1280 = vunpack.c.l.b16 %v487
    %v1281 = vunpack.c.h.b16 %v487
    %v1282 = vunpack.c.l.b16 %v488
    %v1283 = vunpack.c.h.b16 %v488
    %v1284 = vunpack.c.l.b16 %v489
    %v1285 = vunpack.c.h.b16 %v489
    %v1286 = vunpack.c.l.b16 %v490
    %v1287 = vunpack.c.h.b16 %v490
    %v1288 = vunpack.c.l.b16 %v491
    %v1289 = vunpack.c.h.b16 %v491
    %v1290 = vunpack.c.l.b16 %v492
    %v1291 = vunpack.c.h.b16 %v492
    %v1292 = vunpack.c.l.b16 %v493
    %v1293 = vunpack.c.h.b16 %v493
    %v1294 = vunpack.c.l.b16 %v494
    %v1295 = vunpack.c.h.b16 %v494
    %v1296 = vunpack.c.l.b16 %v495
    %v1297 = vunpack.c.h.b16 %v495
    %v1298 = vunpack.c.l.b16 %v496
    %v1299 = vunpack.c.h.b16 %v496
    %v1300 = vunpack.c.l.b16 %v497
    %v1301 = vunpack.c.h.b16 %v497
    %v1302 = vunpack.c.l.b16 %v498
    %v1303 = vunpack.c.h.b16 %v498
    %v1304 = vunpack.c.l.b16 %v499
    %v1305 = vunpack.c.h.b16 %v499
    %v1306 = vunpack.c.l.b16 %v500
    %v1307 = vunpack.c.h.b16 %v500
    %v1308 = vunpack.c.l.b16 %v501
    %v1309 = vunpack.c.h.b16 %v501
    %v1310 = vunpack.c.l.b16 %v502
    %v1311 = vunpack.c.h.b16 %v502
    %v1312 = vunpack.c.l.b16 %v503
    %v1313 = vunpack.c.h.b16 %v503
    %v1314 = vunpack.c.l.b16 %v504
    %v1315 = vunpack.c.h.b16 %v504
    %v1316 = vunpack.c.l.b16 %v505
    %v1317 = vunpack.c.h.b16 %v505
    %v1318 = vunpack.c.l.b16 %v506
    %v1319 = vunpack.c.h.b16 %v506
    %v1320 = vunpack.c.l.b16 %v507
    %v1321 = vunpack.c.h.b16 %v507
    %v1322 = vunpack.c.l.b16 %v508
    %v1323 = vunpack.c.h.b16 %v508
    %v1324 = vunpack.c.l.b16 %v509
    %v1325 = vunpack.c.h.b16 %v509
    %v1326 = vunpack.c.l.b16 %v510
    %v1327 = vunpack.c.h.b16 %v510
    %v1328 = vunpack.c.l.b16 %v511
    %v1329 = vunpack.c.h.b16 %v511
    %v1330 = vunpack.c.l.b16 %v512
    %v1331 = vunpack.c.h.b16 %v512
    %v1332 = vunpack.c.l.b16 %v513
    %v1333 = vunpack.c.h.b16 %v513
    %v1334 = vunpack.c.l.b16 %v514
    %v1335 = vunpack.c.h.b16 %v514
    %v1336 = vunpack.c.l.b16 %v515
    %v1337 = vunpack.c.h.b16 %v515
    %v1338 = vunpack.c.l.b16 %v516
    %v1339 = vunpack.c.h.b16 %v516
    %v1340 = vunpack.c.l.b16 %v517
    %v1341 = vunpack.c.h.b16 %v517
    %v1342 = vunpack.c.l.b16 %v518
    %v1343 = vunpack.c.h.b16 %v518
    %v1344 = vunpack.c.l.b16 %v519
    %v1345 = vunpack.c.h.b16 %v519
    %v1346 = vunpack.c.l.b16 %v520
    %v1347 = vunpack.c.h.b16 %v520
    %v1348 = vunpack.c.l.b16 %v521
    %v1349 = vunpack.c.h.b16 %v521
    %v1350 = vunpack.c.l.b16 %v522
    %v1351 = vunpack.c.h.b16 %v522
    %v1352 = vunpack.c.l.b16 %v523
    %v1353 = vunpack.c.h.b16 %v523
    %v1354 = vunpack.c.l.b16 %v524
    %v1355 = vunpack.c.h.b16 %v524
    %v1356 = vunpack.c.l.b16 %v525
    %v1357 = vunpack.c.h.b16 %v525
    %v1358 = vunpack.c.l.b16 %v526
    %v1359 = vunpack.c.h.b16 %v526
    %v1360 = vunpack.c.l.b16 %v527
    %v1361 = vunpack.c.h.b16 %v527
    %v1362 = vunpack.c.l.b16 %v528
    %v1363 = vunpack.c.h.b16 %v528
    %v1364 = vunpack.c.l.b16 %v529
    %v1365 = vunpack.c.h.b16 %v529
    %v1366 = vunpack.c.l.b16 %v530
    %v1367 = vunpack.c.h.b16 %v530
    %v1368 = vunpack.c.l.b16 %v531
    %v1369 = vunpack.c.h.b16 %v531
    %v1370 = vunpack.c.l.b16 %v532
    %v1371 = vunpack.c.h.b16 %v532
    %v1372 = vunpack.c.l.b16 %v533
    %v1373 = vunpack.c.h.b16 %v533
    %v1374 = vunpack.c.l.b16 %v534
    %v1375 = vunpack.c.h.b16 %v534
    %v1376 = vunpack.c.l.b16 %v535
    %v1377 = vunpack.c.h.b16 %v535
    %v1378 = vunpack.c.l.b16 %v536
    %v1379 = vunpack.c.h.b16 %v536
    %v1380 = vunpack.c.l.b16 %v537
    %v1381 = vunpack.c.h.b16 %v537
    %v1382 = vunpack.c.l.b16 %v538
    %v1383 = vunpack.c.h.b16 %v538
    %v1384 = vunpack.c.l.b16 %v539
    %v1385 = vunpack.c.h.b16 %v539
    %v1386 = vunpack.c.l.b16 %v540
    %v1387 = vunpack.c.h.b16 %v540
    %v1388 = vunpack.c.l.b16 %v541
    %v1389 = vunpack.c.h.b16 %v541
    %v1390 = vunpack.c.l.b16 %v542
    %v1391 = vunpack.c.h.b16 %v542
    %v1392 = vunpack.c.l.b16 %v543
    %v1393 = vunpack.c.h.b16 %v543
    %v1394 = vunpack.c.l.b16 %v544
    %v1395 = vunpack.c.h.b16 %v544
    %v1396 = vunpack.c.l.b16 %v545
    %v1397 = vunpack.c.h.b16 %v545
    %v1398 = vunpack.c.l.b16 %v546
    %v1399 = vunpack.c.h.b16 %v546
    %v1400 = vunpack.c.l.b16 %v547
    %v1401 = vunpack.c.h.b16 %v547
    %v1402 = vunpack.c.l.b16 %v548
    %v1403 = vunpack.c.h.b16 %v548
    %v1404 = vunpack.c.l.b16 %v549
    %v1405 = vunpack.c.h.b16 %v549
    %v1406 = vunpack.c.l.b16 %v550
    %v1407 = vunpack.c.h.b16 %v550
    %v1408 = vunpack.c.l.b16 %v551
    %v1409 = vunpack.c.h.b16 %v551
    %v1410 = vunpack.c.l.b16 %v552
    %v1411 = vunpack.c.h.b16 %v552
    %v1412 = vunpack.c.l.b16 %v553
    %v1413 = vunpack.c.h.b16 %v553
    %v1414 = vunpack.c.l.b16 %v554
    %v1415 = vunpack.c.h.b16 %v554
    %v1416 = vunpack.c.l.b16 %v555
    %v1417 = vunpack.c.h.b16 %v555
    %v1418 = vunpack.c.l.b16 %v556
    %v1419 = vunpack.c.h.b16 %v556
    %v1420 = vunpack.c.l.b16 %v557
    %v1421 = vunpack.c.h.b16 %v557
    %v1422 = vpack.c.b16 %v852, %v846
    %v1423 = vpack.c.b16 %v853, %v847
    %v1424 = vpack.c.b16 %v854, %v848
    %v1425 = vpack.c.b16 %v855, %v849
    %v1426 = vpack.c.b16 %v856, %v850
    %v1427 = vpack.c.b16 %v857, %v851
    %v1428 = vpack.c.b16 %v864, %v858
    %v1429 = vpack.c.b16 %v865, %v859
    %v1430 = vpack.c.b16 %v866, %v860
    %v1431 = vpack.c.b16 %v867, %v861
    %v1432 = vpack.c.b16 %v868, %v862
    %v1433 = vpack.c.b16 %v869, %v863
    %v1434 = vpack.c.b16 %v876, %v870
    %v1435 = vpack.c.b16 %v877, %v871
    %v1436 = vpack.c.b16 %v878, %v872
    %v1437 = vpack.c.b16 %v879, %v873
    %v1438 = vpack.c.b16 %v880, %v874
    %v1439 = vpack.c.b16 %v881, %v875
    %v1440 = vpack.c.b16 %v888, %v882
    %v1441 = vpack.c.b16 %v889, %v883
    %v1442 = vpack.c.b16 %v890, %v884
    %v1443 = vpack.c.b16 %v891, %v885
    %v1444 = vpack.c.b16 %v892, %v886
    %v1445 = vpack.c.b16 %v893, %v887
    %v1446 = vpack.c.b16 %v900, %v894
    %v1447 = vpack.c.b16 %v901, %v895
    %v1448 = vpack.c.b16 %v902, %v896
    %v1449 = vpack.c.b16 %v903, %v897
    %v1450 = vpack.c.b16 %v904, %v898
    %v1451 = vpack.c.b16 %v905, %v899
    %v1452 = vpack.c.b16 %v912, %v906
    %v1453 = vpack.c.b16 %v913, %v907
    %v1454 = vpack.c.b16 %v914, %v908
    %v1455 = vpack.c.b16 %v915, %v909
    %v1456 = vpack.c.b16 %v916, %v910
    %v1457 = vpack.c.b16 %v917, %v911
    %v1458 = vpack.c.b16 %v924, %v918
    %v1459 = vpack.c.b16 %v925, %v919
    %v1460 = vpack.c.b16 %v926, %v920
    %v1461 = vpack.c.b16 %v927, %v921
    %v1462 = vpack.c.b16 %v928, %v922
    %v1463 = vpack.c.b16 %v929, %v923
    %v1464 = vpack.c.b16 %v936, %v930
    %v1465 = vpack.c.b16 %v937, %v931
    %v1466 = vpack.c.b16 %v938, %v932
    %v1467 = vpack.c.b16 %v939, %v933
    %v1468 = vpack.c.b16 %v940, %v934
    %v1469 = vpack.c.b16 %v941, %v935
    %v1470 = vpack.c.b16 %v948, %v942
    %v1471 = vpack.c.b16 %v949, %v943
    %v1472 = vpack.c.b16 %v950, %v944
    %v1473 = vpack.c.b16 %v951, %v945
    %v1474 = vpack.c.b16 %v952, %v946
    %v1475 = vpack.c.b16 %v953, %v947
    %v1476 = vpack.c.b16 %v960, %v954
    %v1477 = vpack.c.b16 %v961, %v955
    %v1478 = vpack.c.b16 %v962, %v956
    %v1479 = vpack.c.b16 %v963, %v957
    %v1480 = vpack.c.b16 %v964, %v958
    %v1481 = vpack.c.b16 %v965, %v959
    %v1482 = vpack.c.b16 %v972, %v966
    %v1483 = vpack.c.b16 %v973, %v967
    %v1484 = vpack.c.b16 %v974, %v968
    %v1485 = vpack.c.b16 %v975, %v969
    %v1486 = vpack.c.b16 %v976, %v970
    %v1487 = vpack.c.b16 %v977, %v971
    %v1488 = vpack.c.b16 %v984, %v978
    %v1489 = vpack.c.b16 %v985, %v979
    %v1490 = vpack.c.b16 %v986, %v980
    %v1491 = vpack.c.b16 %v987, %v981
    %v1492 = vpack.c.b16 %v988, %v982
    %v1493 = vpack.c.b16 %v989, %v983
    %v1494 = vpack.c.b16 %v996, %v990
    %v1495 = vpack.c.b16 %v997, %v991
    %v1496 = vpack.c.b16 %v998, %v992
    %v1497 = vpack.c.b16 %v999, %v993
    %v1498 = vpack.c.b16 %v1000, %v994
    %v1499 = vpack.c.b16 %v1001, %v995
    %v1500 = vpack.c.b16 %v1008, %v1002
    %v1501 = vpack.c.b16 %v1009, %v1003
    %v1502 = vpack.c.b16 %v1010, %v1004
    %v1503 = vpack.c.b16 %v1011, %v1005
    %v1504 = vpack.c.b16 %v1012, %v1006
    %v1505 = vpack.c.b16 %v1013, %v1007
    %v1506 = vpack.c.b16 %v1020, %v1014
    %v1507 = vpack.c.b16 %v1021, %v1015
    %v1508 = vpack.c.b16 %v1022, %v1016
    %v1509 = vpack.c.b16 %v1023, %v1017
    %v1510 = vpack.c.b16 %v1024, %v1018
    %v1511 = vpack.c.b16 %v1025, %v1019
    %v1512 = vpack.c.b16 %v1032, %v1026
    %v1513 = vpack.c.b16 %v1033, %v1027
    %v1514 = vpack.c.b16 %v1034, %v1028
    %v1515 = vpack.c.b16 %v1035, %v1029
    %v1516 = vpack.c.b16 %v1036, %v1030
    %v1517 = vpack.c.b16 %v1037, %v1031
    %v1518 = vpack.c.b16 %v1044, %v1038
    %v1519 = vpack.c.b16 %v1045, %v1039
    %v1520 = vpack.c.b16 %v1046, %v1040
    %v1521 = vpack.c.b16 %v1047, %v1041
    %v1522 = vpack.c.b16 %v1048, %v1042
    %v1523 = vpack.c.b16 %v1049, %v1043
    %v1524 = vpack.c.b16 %v1056, %v1050
    %v1525 = vpack.c.b16 %v1057, %v1051
    %v1526 = vpack.c.b16 %v1058, %v1052
    %v1527 = vpack.c.b16 %v1059, %v1053
    %v1528 = vpack.c.b16 %v1060, %v1054
    %v1529 = vpack.c.b16 %v1061, %v1055
    %v1530 = vpack.c.b16 %v1068, %v1062
    %v1531 = vpack.c.b16 %v1069, %v1063
    %v1532 = vpack.c.b16 %v1070, %v1064
    %v1533 = vpack.c.b16 %v1071, %v1065
    %v1534 = vpack.c.b16 %v1072, %v1066
    %v1535 = vpack.c.b16 %v1073, %v1067
    %v1536 = vpack.c.b16 %v1080, %v1074
    %v1537 = vpack.c.b16 %v1081, %v1075
    %v1538 = vpack.c.b16 %v1082, %v1076
    %v1539 = vpack.c.b16 %v1083, %v1077
    %v1540 = vpack.c.b16 %v1084, %v1078
    %v1541 = vpack.c.b16 %v1085, %v1079
    %v1542 = vpack.c.b16 %v1092, %v1086
    %v1543 = vpack.c.b16 %v1093, %v1087
    %v1544 = vpack.c.b16 %v1094, %v1088
    %v1545 = vpack.c.b16 %v1095, %v1089
    %v1546 = vpack.c.b16 %v1096, %v1090
    %v1547 = vpack.c.b16 %v1097, %v1091
    %v1548 = vpack.c.b16 %v1104, %v1098
    %v1549 = vpack.c.b16 %v1105, %v1099
    %v1550 = vpack.c.b16 %v1106, %v1100
    %v1551 = vpack.c.b16 %v1107, %v1101
    %v1552 = vpack.c.b16 %v1108, %v1102
    %v1553 = vpack.c.b16 %v1109, %v1103
    %v1554 = vpack.c.b16 %v1116, %v1110
    %v1555 = vpack.c.b16 %v1117, %v1111
    %v1556 = vpack.c.b16 %v1118, %v1112
    %v1557 = vpack.c.b16 %v1119, %v1113
    %v1558 = vpack.c.b16 %v1120, %v1114
    %v1559 = vpack.c.b16 %v1121, %v1115
    %v1560 = vpack.c.b16 %v1128, %v1122
    %v1561 = vpack.c.b16 %v1129, %v1123
    %v1562 = vpack.c.b16 %v1130, %v1124
    %v1563 = vpack.c.b16 %v1131, %v1125
    %v1564 = vpack.c.b16 %v1132, %v1126
    %v1565 = vpack.c.b16 %v1133, %v1127
    %v1566 = vpack.c.b16 %v1140, %v1134
    %v1567 = vpack.c.b16 %v1141, %v1135
    %v1568 = vpack.c.b16 %v1142, %v1136
    %v1569 = vpack.c.b16 %v1143, %v1137
    %v1570 = vpack.c.b16 %v1144, %v1138
    %v1571 = vpack.c.b16 %v1145, %v1139
    %v1572 = vpack.c.b16 %v1152, %v1146
    %v1573 = vpack.c.b16 %v1153, %v1147
    %v1574 = vpack.c.b16 %v1154, %v1148
    %v1575 = vpack.c.b16 %v1155, %v1149
    %v1576 = vpack.c.b16 %v1156, %v1150
    %v1577 = vpack.c.b16 %v1157, %v1151
    %v1578 = vpack.c.b16 %v1164, %v1158
    %v1579 = vpack.c.b16 %v1165, %v1159
    %v1580 = vpack.c.b16 %v1166, %v1160
    %v1581 = vpack.c.b16 %v1167, %v1161
    %v1582 = vpack.c.b16 %v1168, %v1162
    %v1583 = vpack.c.b16 %v1169, %v1163
    %v1584 = vpack.c.b16 %v1176, %v1170
    %v1585 = vpack.c.b16 %v1177, %v1171
    %v1586 = vpack.c.b16 %v1178, %v1172
    %v1587 = vpack.c.b16 %v1179, %v1173
    %v1588 = vpack.c.b16 %v1180, %v1174
    %v1589 = vpack.c.b16 %v1181, %v1175
    %v1590 = vpack.c.b16 %v1188, %v1182
    %v1591 = vpack.c.b16 %v1189, %v1183
    %v1592 = vpack.c.b16 %v1190, %v1184
    %v1593 = vpack.c.b16 %v1191, %v1185
    %v1594 = vpack.c.b16 %v1192, %v1186
    %v1595 = vpack.c.b16 %v1193, %v1187
    %v1596 = vpack.c.b16 %v1200, %v1194
    %v1597 = vpack.c.b16 %v1201, %v1195
    %v1598 = vpack.c.b16 %v1202, %v1196
    %v1599 = vpack.c.b16 %v1203, %v1197
    %v1600 = vpack.c.b16 %v1204, %v1198
    %v1601 = vpack.c.b16 %v1205, %v1199
    %v1602 = vpack.c.b16 %v1212, %v1206
    %v1603 = vpack.c.b16 %v1213, %v1207
    %v1604 = vpack.c.b16 %v1214, %v1208
    %v1605 = vpack.c.b16 %v1215, %v1209
    %v1606 = vpack.c.b16 %v1216, %v1210
    %v1607 = vpack.c.b16 %v1217, %v1211
    %v1608 = vpack.c.b16 %v1224, %v1218
    %v1609 = vpack.c.b16 %v1225, %v1219
    %v1610 = vpack.c.b16 %v1226, %v1220
    %v1611 = vpack.c.b16 %v1227, %v1221
    %v1612 = vpack.c.b16 %v1228, %v1222
    %v1613 = vpack.c.b16 %v1229, %v1223
    %v1614 = vpack.c.b16 %v1236, %v1230
    %v1615 = vpack.c.b16 %v1237, %v1231
    %v1616 = vpack.c.b16 %v1238, %v1232
    %v1617 = vpack.c.b16 %v1239, %v1233
    %v1618 = vpack.c.b16 %v1240, %v1234
    %v1619 = vpack.c.b16 %v1241, %v1235
    %v1620 = vpack.c.b16 %v1248, %v1242
    %v1621 = vpack.c.b16 %v1249, %v1243
    %v1622 = vpack.c.b16 %v1250, %v1244
    %v1623 = vpack.c.b16 %v1251, %v1245
    %v1624 = vpack.c.b16 %v1252, %v1246
    %v1625 = vpack.c.b16 %v1253, %v1247
    %v1626 = vpack.c.b16 %v1260, %v1254
    %v1627 = vpack.c.b16 %v1261, %v1255
    %v1628 = vpack.c.b16 %v1262, %v1256
    %v1629 = vpack.c.b16 %v1263, %v1257
    %v1630 = vpack.c.b16 %v1264, %v1258
    %v1631 = vpack.c.b16 %v1265, %v1259
    %v1632 = vpack.c.b16 %v1272, %v1266
    %v1633 = vpack.c.b16 %v1273, %v1267
    %v1634 = vpack.c.b16 %v1274, %v1268
    %v1635 = vpack.c.b16 %v1275, %v1269
    %v1636 = vpack.c.b16 %v1276, %v1270
    %v1637 = vpack.c.b16 %v1277, %v1271
    %v1638 = vpack.c.b16 %v1284, %v1278
    %v1639 = vpack.c.b16 %v1285, %v1279
    %v1640 = vpack.c.b16 %v1286, %v1280
    %v1641 = vpack.c.b16 %v1287, %v1281
    %v1642 = vpack.c.b16 %v1288, %v1282
    %v1643 = vpack.c.b16 %v1289, %v1283
    %v1644 = vpack.c.b16 %v1296, %v1290
    %v1645 = vpack.c.b16 %v1297, %v1291
    %v1646 = vpack.c.b16 %v1298, %v1292
    %v1647 = vpack.c.b16 %v1299, %v1293
    %v1648 = vpack.c.b16 %v1300, %v1294
    %v1649 = vpack.c.b16 %v1301, %v1295
    %v1650 = vpack.c.b16 %v1308, %v1302
    %v1651 = vpack.c.b16 %v1309, %v1303
    %v1652 = vpack.c.b16 %v1310, %v1304
    %v1653 = vpack.c.b16 %v1311, %v1305
    %v1654 = vpack.c.b16 %v1312, %v1306
    %v1655 = vpack.c.b16 %v1313, %v1307
    %v1656 = vpack.c.b16 %v1320, %v1314
    %v1657 = vpack.c.b16 %v1321, %v1315
    %v1658 = vpack.c.b16 %v1322, %v1316
    %v1659 = vpack.c.b16 %v1323, %v1317
    %v1660 = vpack.c.b16 %v1324, %v1318
    %v1661 = vpack.c.b16 %v1325, %v1319
    %v1662 = vpack.c.b16 %v1332, %v1326
    %v1663 = vpack.c.b16 %v1333, %v1327
    %v1664 = vpack.c.b16 %v1334, %v1328
    %v1665 = vpack.c.b16 %v1335, %v1329
    %v1666 = vpack.c.b16 %v1336, %v1330
    %v1667 = vpack.c.b16 %v1337, %v1331
    %v1668 = vpack.c.b16 %v1344, %v1338
    %v1669 = vpack.c.b16 %v1345, %v1339
    %v1670 = vpack.c.b16 %v1346, %v1340
    %v1671 = vpack.c.b16 %v1347, %v1341
    %v1672 = vpack.c.b16 %v1348, %v1342
    %v1673 = vpack.c.b16 %v1349, %v1343
    %v1674 = vpack.c.b16 %v1356, %v1350
    %v1675 = vpack.c.b16 %v1357, %v1351
    %v1676 = vpack.c.b16 %v1358, %v1352
    %v1677 = vpack.c.b16 %v1359, %v1353
    %v1678 = vpack.c.b16 %v1360, %v1354
    %v1679 = vpack.c.b16 %v1361, %v1355
    %v1680 = vpack.c.b16 %v1368, %v1362
    %v1681 = vpack.c.b16 %v1369, %v1363
    %v1682 = vpack.c.b16 %v1370, %v1364
    %v1683 = vpack.c.b16 %v1371, %v1365
    %v1684 = vpack.c.b16 %v1372, %v1366
    %v1685 = vpack.c.b16 %v1373, %v1367
    %v1686 = vpack.c.b16 %v1380, %v1374
    %v1687 = vpack.c.b16 %v1381, %v1375
    %v1688 = vpack.c.b16 %v1382, %v1376
    %v1689 = vpack.c.b16 %v1383, %v1377
    %v1690 = vpack.c.b16 %v1384, %v1378
    %v1691 = vpack.c.b16 %v1385, %v1379
    %v1692 = vpack.c.b16 %v1392, %v1386
    %v1693 = vpack.c.b16 %v1393, %v1387
    %v1694 = vpack.c.b16 %v1394, %v1388
    %v1695 = vpack.c.b16 %v1395, %v1389
    %v1696 = vpack.c.b16 %v1396, %v1390
    %v1697 = vpack.c.b16 %v1397, %v1391
    %v1698 = vpack.c.b16 %v1404, %v1398
    %v1699 = vpack.c.b16 %v1405, %v1399
    %v1700 = vpack.c.b16 %v1406, %v1400
    %v1701 = vpack.c.b16 %v1407, %v1401
    %v1702 = vpack.c.b16 %v1408, %v1402
    %v1703 = vpack.c.b16 %v1409, %v1403
    %v1704 = vpack.c.b16 %v1416, %v1410
    %v1705 = vpack.c.b16 %v1417, %v1411
    %v1706 = vpack.c.b16 %v1418, %v1412
    %v1707 = vpack.c.b16 %v1419, %v1413
    %v1708 = vpack.c.b16 %v1420, %v1414
    %v1709 = vpack.c.b16 %v1421, %v1415
    %1998 = vmatprep.subr.bf16.mxu0 %v1423
    %1999 = vmatpush1.bf16.msra.mxu0 %v1422
    %2000 = vmatprep.subr.bf16.mxu0 %v1429
    %2001 = vmatpush1.bf16.msra.mxu0 %v1428
    %2002 = vmatprep.subr.bf16.mxu0 %v1435
    %2003 = vmatpush1.bf16.msra.mxu0 %v1434
    %2004 = vmatprep.subr.bf16.mxu0 %v1441
    %2005 = vmatpush1.bf16.msra.mxu0 %v1440
    %2006 = vmatprep.subr.bf16.mxu0 %v1447
    %2007 = vmatpush1.bf16.msra.mxu0 %v1446
    %2008 = vmatprep.subr.bf16.mxu0 %v1453
    %2009 = vmatpush1.bf16.msra.mxu0 %v1452
    %2010 = vmatprep.subr.bf16.mxu0 %v1459
    %2011 = vmatpush1.bf16.msra.mxu0 %v1458
    %2012 = vmatprep.subr.bf16.mxu0 %v1465
    %2013 = vmatpush1.bf16.msra.mxu0 %v1464
    %2014 = vmatprep.subr.bf16.mxu0 %v1471
    %2015 = vmatpush1.bf16.msra.mxu0 %v1470
    %2016 = vmatprep.subr.bf16.mxu0 %v1477
    %2017 = vmatpush1.bf16.msra.mxu0 %v1476
    %2018 = vmatprep.subr.bf16.mxu0 %v1483
    %2019 = vmatpush1.bf16.msra.mxu0 %v1482
    %2020 = vmatprep.subr.bf16.mxu0 %v1489
    %2021 = vmatpush1.bf16.msra.mxu0 %v1488
    %2022 = vmatprep.subr.bf16.mxu0 %v1495
    %2023 = vmatpush1.bf16.msra.mxu0 %v1494
    %2024 = vmatprep.subr.bf16.mxu0 %v1501
    %2025 = vmatpush1.bf16.msra.mxu0 %v1500
    %2026 = vmatprep.subr.bf16.mxu0 %v1507
    %2027 = vmatpush1.bf16.msra.mxu0 %v1506
    %2028 = vmatprep.subr.bf16.mxu0 %v1513
    %2029 = vmatpush1.bf16.msra.mxu0 %v1512
    %2030 = vmatprep.mubr.bf16.mxu0 %v247
    %2031 = vmatmul.mubr.bf16.gmra.mrb[0].mxu0 %v246
    %v2032 = vpop.f32.mrb[0].mxu0
    %v2033 = vadd.f32 0.0, %v2032
    %v2034 = vpop.f32.mrb[0].mxu0
    %v2035 = vadd.f32 0.0, %v2034
    %v2036 = vpop.f32.mrb[0].mxu0
    %v2037 = vadd.f32 0.0, %v2036
    %v2038 = vpop.f32.mrb[0].mxu0
    %v2039 = vadd.f32 0.0, %v2038
    %2040 = vmatprep.mubr.bf16.mxu0 %v253
    %2041 = vmatmul.mubr.bf16.gmra.mrb[0].mxu0 %v252
    %v2042 = vpop.f32.mrb[0].mxu0
    %v2043 = vadd.f32 0.0, %v2042
    %v2044 = vpop.f32.mrb[0].mxu0
    %v2045 = vadd.f32 0.0, %v2044
    %v2046 = vpop.f32.mrb[0].mxu0
    %v2047 = vadd.f32 0.0, %v2046
    %v2048 = vpop.f32.mrb[0].mxu0
    %v2049 = vadd.f32 0.0, %v2048
    %2050 = vmatprep.mubr.bf16.mxu0 %v259
    %2051 = vmatmul.mubr.bf16.gmra.mrb[0].mxu0 %v258
    %v2052 = vpop.f32.mrb[0].mxu0
    %v2053 = vadd.f32 0.0, %v2052
    %v2054 = vpop.f32.mrb[0].mxu0
    %v2055 = vadd.f32 0.0, %v2054
    %v2056 = vpop.f32.mrb[0].mxu0
    %v2057 = vadd.f32 0.0, %v2056
    %v2058 = vpop.f32.mrb[0].mxu0
    %v2059 = vadd.f32 0.0, %v2058
    %2060 = vmatprep.mubr.bf16.mxu0 %v265
    %2061 = vmatmul.mubr.bf16.gmra.mrb[0].mxu0 %v264
    %v2062 = vpop.f32.mrb[0].mxu0
    %v2063 = vadd.f32 0.0, %v2062
    %v2064 = vpop.f32.mrb[0].mxu0
    %v2065 = vadd.f32 0.0, %v2064
    %v2066 = vpop.f32.mrb[0].mxu0
    %v2067 = vadd.f32 0.0, %v2066
    %v2068 = vpop.f32.mrb[0].mxu0
    %v2069 = vadd.f32 0.0, %v2068
    %2070 = vdwg.mxu0
    %2071 = vmatprep.subr.bf16.mxu0 %v1519
    %2072 = vmatpush1.bf16.msra.mxu0 %v1518
    %2073 = vmatprep.subr.bf16.mxu0 %v1525
    %2074 = vmatpush1.bf16.msra.mxu0 %v1524
    %2075 = vmatprep.subr.bf16.mxu0 %v1531
    %2076 = vmatpush1.bf16.msra.mxu0 %v1530
    %2077 = vmatprep.subr.bf16.mxu0 %v1537
    %2078 = vmatpush1.bf16.msra.mxu0 %v1536
    %2079 = vmatprep.subr.bf16.mxu0 %v1543
    %2080 = vmatpush1.bf16.msra.mxu0 %v1542
    %2081 = vmatprep.subr.bf16.mxu0 %v1549
    %2082 = vmatpush1.bf16.msra.mxu0 %v1548
    %2083 = vmatprep.subr.bf16.mxu0 %v1555
    %2084 = vmatpush1.bf16.msra.mxu0 %v1554
    %2085 = vmatprep.subr.bf16.mxu0 %v1561
    %2086 = vmatpush1.bf16.msra.mxu0 %v1560
    %2087 = vmatprep.subr.bf16.mxu0 %v1567
    %2088 = vmatpush1.bf16.msra.mxu0 %v1566
    %2089 = vmatprep.subr.bf16.mxu0 %v1573
    %2090 = vmatpush1.bf16.msra.mxu0 %v1572
    %2091 = vmatprep.subr.bf16.mxu0 %v1579
    %2092 = vmatpush1.bf16.msra.mxu0 %v1578
    %2093 = vmatprep.subr.bf16.mxu0 %v1585
    %2094 = vmatpush1.bf16.msra.mxu0 %v1584
    %2095 = vmatprep.subr.bf16.mxu0 %v1591
    %2096 = vmatpush1.bf16.msra.mxu0 %v1590
    %2097 = vmatprep.subr.bf16.mxu0 %v1597
    %2098 = vmatpush1.bf16.msra.mxu0 %v1596
    %2099 = vmatprep.subr.bf16.mxu0 %v1603
    %2100 = vmatpush1.bf16.msra.mxu0 %v1602
    %2101 = vmatprep.subr.bf16.mxu0 %v1609
    %2102 = vmatpush1.bf16.msra.mxu0 %v1608
    %2103 = vmatprep.mubr.bf16.mxu0 %v249
    %2104 = vmatmul.mubr.bf16.gmra.mrb[0].mxu0 %v248
    %v2105 = vpop.f32.mrb[0].mxu0
    %v2106 = vadd.f32 %v2033, %v2105
    %v2107 = vpop.f32.mrb[0].mxu0
    %v2108 = vadd.f32 %v2035, %v2107
    %v2109 = vpop.f32.mrb[0].mxu0
    %v2110 = vadd.f32 %v2037, %v2109
    %v2111 = vpop.f32.mrb[0].mxu0
    %v2112 = vadd.f32 %v2039, %v2111
    %2113 = vmatprep.mubr.bf16.mxu0 %v255
    %2114 = vmatmul.mubr.bf16.gmra.mrb[0].mxu0 %v254
    %v2115 = vpop.f32.mrb[0].mxu0
    %v2116 = vadd.f32 %v2043, %v2115
    %v2117 = vpop.f32.mrb[0].mxu0
    %v2118 = vadd.f32 %v2045, %v2117
    %v2119 = vpop.f32.mrb[0].mxu0
    %v2120 = vadd.f32 %v2047, %v2119
    %v2121 = vpop.f32.mrb[0].mxu0
    %v2122 = vadd.f32 %v2049, %v2121
    %2123 = vmatprep.mubr.bf16.mxu0 %v261
    %2124 = vmatmul.mubr.bf16.gmra.mrb[0].mxu0 %v260
    %v2125 = vpop.f32.mrb[0].mxu0
    %v2126 = vadd.f32 %v2053, %v2125
    %v2127 = vpop.f32.mrb[0].mxu0
    %v2128 = vadd.f32 %v2055, %v2127
    %v2129 = vpop.f32.mrb[0].mxu0
    %v2130 = vadd.f32 %v2057, %v2129
    %v2131 = vpop.f32.mrb[0].mxu0
    %v2132 = vadd.f32 %v2059, %v2131
    %2133 = vmatprep.mubr.bf16.mxu0 %v267
    %2134 = vmatmul.mubr.bf16.gmra.mrb[0].mxu0 %v266
    %v2135 = vpop.f32.mrb[0].mxu0
    %v2136 = vadd.f32 %v2063, %v2135
    %v2137 = vpop.f32.mrb[0].mxu0
    %v2138 = vadd.f32 %v2065, %v2137
    %v2139 = vpop.f32.mrb[0].mxu0
    %v2140 = vadd.f32 %v2067, %v2139
    %v2141 = vpop.f32.mrb[0].mxu0
    %v2142 = vadd.f32 %v2069, %v2141
    %2143 = vdwg.mxu0
    %2144 = vmatprep.subr.bf16.mxu0 %v1615
    %2145 = vmatpush1.bf16.msra.mxu0 %v1614
    %2146 = vmatprep.subr.bf16.mxu0 %v1621
    %2147 = vmatpush1.bf16.msra.mxu0 %v1620
    %2148 = vmatprep.subr.bf16.mxu0 %v1627
    %2149 = vmatpush1.bf16.msra.mxu0 %v1626
    %2150 = vmatprep.subr.bf16.mxu0 %v1633
    %2151 = vmatpush1.bf16.msra.mxu0 %v1632
    %2152 = vmatprep.subr.bf16.mxu0 %v1639
    %2153 = vmatpush1.bf16.msra.mxu0 %v1638
    %2154 = vmatprep.subr.bf16.mxu0 %v1645
    %2155 = vmatpush1.bf16.msra.mxu0 %v1644
    %2156 = vmatprep.subr.bf16.mxu0 %v1651
    %2157 = vmatpush1.bf16.msra.mxu0 %v1650
    %2158 = vmatprep.subr.bf16.mxu0 %v1657
    %2159 = vmatpush1.bf16.msra.mxu0 %v1656
    %2160 = vmatprep.subr.bf16.mxu0 %v1663
    %2161 = vmatpush1.bf16.msra.mxu0 %v1662
    %2162 = vmatprep.subr.bf16.mxu0 %v1669
    %2163 = vmatpush1.bf16.msra.mxu0 %v1668
    %2164 = vmatprep.subr.bf16.mxu0 %v1675
    %2165 = vmatpush1.bf16.msra.mxu0 %v1674
    %2166 = vmatprep.subr.bf16.mxu0 %v1681
    %2167 = vmatpush1.bf16.msra.mxu0 %v1680
    %2168 = vmatprep.subr.bf16.mxu0 %v1687
    %2169 = vmatpush1.bf16.msra.mxu0 %v1686
    %2170 = vmatprep.subr.bf16.mxu0 %v1693
    %2171 = vmatpush1.bf16.msra.mxu0 %v1692
    %2172 = vmatprep.subr.bf16.mxu0 %v1699
    %2173 = vmatpush1.bf16.msra.mxu0 %v1698
    %2174 = vmatprep.subr.bf16.mxu0 %v1705
    %2175 = vmatpush1.bf16.msra.mxu0 %v1704
    %2176 = vmatprep.mubr.bf16.mxu0 %v251
    %2177 = vmatmul.mubr.bf16.gmra.mrb[0].mxu0 %v250
    %v2178 = vpop.f32.mrb[0].mxu0
    %v2179 = vadd.f32 %v2106, %v2178
    %v2180 = vpop.f32.mrb[0].mxu0
    %v2181 = vadd.f32 %v2108, %v2180
    %v2182 = vpop.f32.mrb[0].mxu0
    %v2183 = vadd.f32 %v2110, %v2182
    %v2184 = vpop.f32.mrb[0].mxu0
    %v2185 = vadd.f32 %v2112, %v2184
    %2186 = vmatprep.mubr.bf16.mxu0 %v257
    %2187 = vmatmul.mubr.bf16.gmra.mrb[0].mxu0 %v256
    %v2188 = vpop.f32.mrb[0].mxu0
    %v2189 = vadd.f32 %v2116, %v2188
    %v2190 = vpop.f32.mrb[0].mxu0
    %v2191 = vadd.f32 %v2118, %v2190
    %v2192 = vpop.f32.mrb[0].mxu0
    %v2193 = vadd.f32 %v2120, %v2192
    %v2194 = vpop.f32.mrb[0].mxu0
    %v2195 = vadd.f32 %v2122, %v2194
    %2196 = vmatprep.mubr.bf16.mxu0 %v263
    %2197 = vmatmul.mubr.bf16.gmra.mrb[0].mxu0 %v262
    %v2198 = vpop.f32.mrb[0].mxu0
    %v2199 = vadd.f32 %v2126, %v2198
    %v2200 = vpop.f32.mrb[0].mxu0
    %v2201 = vadd.f32 %v2128, %v2200
    %v2202 = vpop.f32.mrb[0].mxu0
    %v2203 = vadd.f32 %v2130, %v2202
    %v2204 = vpop.f32.mrb[0].mxu0
    %v2205 = vadd.f32 %v2132, %v2204
    %2206 = vmatprep.mubr.bf16.mxu0 %v269
    %2207 = vmatmul.mubr.bf16.gmra.mrb[0].mxu0 %v268
    %v2208 = vpop.f32.mrb[0].mxu0
    %v2209 = vadd.f32 %v2136, %v2208
    %v2210 = vpop.f32.mrb[0].mxu0
    %v2211 = vadd.f32 %v2138, %v2210
    %v2212 = vpop.f32.mrb[0].mxu0
    %v2213 = vadd.f32 %v2140, %v2212
    %v2214 = vpop.f32.mrb[0].mxu0
    %v2215 = vadd.f32 %v2142, %v2214
    %2216 = vdwg.mxu0
    %2217 = vmatprep.subr.bf16.mxu0 %v1425
    %2218 = vmatpush1.bf16.msra.mxu0 %v1424
    %2219 = vmatprep.subr.bf16.mxu0 %v1431
    %2220 = vmatpush1.bf16.msra.mxu0 %v1430
    %2221 = vmatprep.subr.bf16.mxu0 %v1437
    %2222 = vmatpush1.bf16.msra.mxu0 %v1436
    %2223 = vmatprep.subr.bf16.mxu0 %v1443
    %2224 = vmatpush1.bf16.msra.mxu0 %v1442
    %2225 = vmatprep.subr.bf16.mxu0 %v1449
    %2226 = vmatpush1.bf16.msra.mxu0 %v1448
    %2227 = vmatprep.subr.bf16.mxu0 %v1455
    %2228 = vmatpush1.bf16.msra.mxu0 %v1454
    %2229 = vmatprep.subr.bf16.mxu0 %v1461
    %2230 = vmatpush1.bf16.msra.mxu0 %v1460
    %2231 = vmatprep.subr.bf16.mxu0 %v1467
    %2232 = vmatpush1.bf16.msra.mxu0 %v1466
    %2233 = vmatprep.subr.bf16.mxu0 %v1473
    %2234 = vmatpush1.bf16.msra.mxu0 %v1472
    %2235 = vmatprep.subr.bf16.mxu0 %v1479
    %2236 = vmatpush1.bf16.msra.mxu0 %v1478
    %2237 = vmatprep.subr.bf16.mxu0 %v1485
    %2238 = vmatpush1.bf16.msra.mxu0 %v1484
    %2239 = vmatprep.subr.bf16.mxu0 %v1491
    %2240 = vmatpush1.bf16.msra.mxu0 %v1490
    %2241 = vmatprep.subr.bf16.mxu0 %v1497
    %2242 = vmatpush1.bf16.msra.mxu0 %v1496
    %2243 = vmatprep.subr.bf16.mxu0 %v1503
    %2244 = vmatpush1.bf16.msra.mxu0 %v1502
    %2245 = vmatprep.subr.bf16.mxu0 %v1509
    %2246 = vmatpush1.bf16.msra.mxu0 %v1508
    %2247 = vmatprep.subr.bf16.mxu0 %v1515
    %2248 = vmatpush1.bf16.msra.mxu0 %v1514
    %2249 = vmatprep.mubr.bf16.mxu0 %v247
    %2250 = vmatmul.mubr.bf16.gmra.mrb[0].mxu0 %v246
    %v2251 = vpop.f32.mrb[0].mxu0
    %v2252 = vadd.f32 0.0, %v2251
    %v2253 = vpop.f32.mrb[0].mxu0
    %v2254 = vadd.f32 0.0, %v2253
    %v2255 = vpop.f32.mrb[0].mxu0
    %v2256 = vadd.f32 0.0, %v2255
    %v2257 = vpop.f32.mrb[0].mxu0
    %v2258 = vadd.f32 0.0, %v2257
    %2259 = vmatprep.mubr.bf16.mxu0 %v253
    %2260 = vmatmul.mubr.bf16.gmra.mrb[0].mxu0 %v252
    %v2261 = vpop.f32.mrb[0].mxu0
    %v2262 = vadd.f32 0.0, %v2261
    %v2263 = vpop.f32.mrb[0].mxu0
    %v2264 = vadd.f32 0.0, %v2263
    %v2265 = vpop.f32.mrb[0].mxu0
    %v2266 = vadd.f32 0.0, %v2265
    %v2267 = vpop.f32.mrb[0].mxu0
    %v2268 = vadd.f32 0.0, %v2267
    %2269 = vmatprep.mubr.bf16.mxu0 %v259
    %2270 = vmatmul.mubr.bf16.gmra.mrb[0].mxu0 %v258
    %v2271 = vpop.f32.mrb[0].mxu0
    %v2272 = vadd.f32 0.0, %v2271
    %v2273 = vpop.f32.mrb[0].mxu0
    %v2274 = vadd.f32 0.0, %v2273
    %v2275 = vpop.f32.mrb[0].mxu0
    %v2276 = vadd.f32 0.0, %v2275
    %v2277 = vpop.f32.mrb[0].mxu0
    %v2278 = vadd.f32 0.0, %v2277
    %2279 = vmatprep.mubr.bf16.mxu0 %v265
    %2280 = vmatmul.mubr.bf16.gmra.mrb[0].mxu0 %v264
    %v2281 = vpop.f32.mrb[0].mxu0
    %v2282 = vadd.f32 0.0, %v2281
    %v2283 = vpop.f32.mrb[0].mxu0
    %v2284 = vadd.f32 0.0, %v2283
    %v2285 = vpop.f32.mrb[0].mxu0
    %v2286 = vadd.f32 0.0, %v2285
    %v2287 = vpop.f32.mrb[0].mxu0
    %v2288 = vadd.f32 0.0, %v2287
    %2289 = vdwg.mxu0
    %2290 = vmatprep.subr.bf16.mxu0 %v1521
    %2291 = vmatpush1.bf16.msra.mxu0 %v1520
    %2292 = vmatprep.subr.bf16.mxu0 %v1527
    %2293 = vmatpush1.bf16.msra.mxu0 %v1526
    %2294 = vmatprep.subr.bf16.mxu0 %v1533
    %2295 = vmatpush1.bf16.msra.mxu0 %v1532
    %2296 = vmatprep.subr.bf16.mxu0 %v1539
    %2297 = vmatpush1.bf16.msra.mxu0 %v1538
    %2298 = vmatprep.subr.bf16.mxu0 %v1545
    %2299 = vmatpush1.bf16.msra.mxu0 %v1544
    %2300 = vmatprep.subr.bf16.mxu0 %v1551
    %2301 = vmatpush1.bf16.msra.mxu0 %v1550
    %2302 = vmatprep.subr.bf16.mxu0 %v1557
    %2303 = vmatpush1.bf16.msra.mxu0 %v1556
    %2304 = vmatprep.subr.bf16.mxu0 %v1563
    %2305 = vmatpush1.bf16.msra.mxu0 %v1562
    %2306 = vmatprep.subr.bf16.mxu0 %v1569
    %2307 = vmatpush1.bf16.msra.mxu0 %v1568
    %2308 = vmatprep.subr.bf16.mxu0 %v1575
    %2309 = vmatpush1.bf16.msra.mxu0 %v1574
    %2310 = vmatprep.subr.bf16.mxu0 %v1581
    %2311 = vmatpush1.bf16.msra.mxu0 %v1580
    %2312 = vmatprep.subr.bf16.mxu0 %v1587
    %2313 = vmatpush1.bf16.msra.mxu0 %v1586
    %2314 = vmatprep.subr.bf16.mxu0 %v1593
    %2315 = vmatpush1.bf16.msra.mxu0 %v1592
    %2316 = vmatprep.subr.bf16.mxu0 %v1599
    %2317 = vmatpush1.bf16.msra.mxu0 %v1598
    %2318 = vmatprep.subr.bf16.mxu0 %v1605
    %2319 = vmatpush1.bf16.msra.mxu0 %v1604
    %2320 = vmatprep.subr.bf16.mxu0 %v1611
    %2321 = vmatpush1.bf16.msra.mxu0 %v1610
    %2322 = vmatprep.mubr.bf16.mxu0 %v249
    %2323 = vmatmul.mubr.bf16.gmra.mrb[0].mxu0 %v248
    %v2324 = vpop.f32.mrb[0].mxu0
    %v2325 = vadd.f32 %v2252, %v2324
    %v2326 = vpop.f32.mrb[0].mxu0
    %v2327 = vadd.f32 %v2254, %v2326
    %v2328 = vpop.f32.mrb[0].mxu0
    %v2329 = vadd.f32 %v2256, %v2328
    %v2330 = vpop.f32.mrb[0].mxu0
    %v2331 = vadd.f32 %v2258, %v2330
    %2332 = vmatprep.mubr.bf16.mxu0 %v255
    %2333 = vmatmul.mubr.bf16.gmra.mrb[0].mxu0 %v254
    %v2334 = vpop.f32.mrb[0].mxu0
    %v2335 = vadd.f32 %v2262, %v2334
    %v2336 = vpop.f32.mrb[0].mxu0
    %v2337 = vadd.f32 %v2264, %v2336
    %v2338 = vpop.f32.mrb[0].mxu0
    %v2339 = vadd.f32 %v2266, %v2338
    %v2340 = vpop.f32.mrb[0].mxu0
    %v2341 = vadd.f32 %v2268, %v2340
    %2342 = vmatprep.mubr.bf16.mxu0 %v261
    %2343 = vmatmul.mubr.bf16.gmra.mrb[0].mxu0 %v260
    %v2344 = vpop.f32.mrb[0].mxu0
    %v2345 = vadd.f32 %v2272, %v2344
    %v2346 = vpop.f32.mrb[0].mxu0
    %v2347 = vadd.f32 %v2274, %v2346
    %v2348 = vpop.f32.mrb[0].mxu0
    %v2349 = vadd.f32 %v2276, %v2348
    %v2350 = vpop.f32.mrb[0].mxu0
    %v2351 = vadd.f32 %v2278, %v2350
    %2352 = vmatprep.mubr.bf16.mxu0 %v267
    %2353 = vmatmul.mubr.bf16.gmra.mrb[0].mxu0 %v266
    %v2354 = vpop.f32.mrb[0].mxu0
    %v2355 = vadd.f32 %v2282, %v2354
    %v2356 = vpop.f32.mrb[0].mxu0
    %v2357 = vadd.f32 %v2284, %v2356
    %v2358 = vpop.f32.mrb[0].mxu0
    %v2359 = vadd.f32 %v2286, %v2358
    %v2360 = vpop.f32.mrb[0].mxu0
    %v2361 = vadd.f32 %v2288, %v2360
    %2362 = vdwg.mxu0
    %2363 = vmatprep.subr.bf16.mxu0 %v1617
    %2364 = vmatpush1.bf16.msra.mxu0 %v1616
    %2365 = vmatprep.subr.bf16.mxu0 %v1623
    %2366 = vmatpush1.bf16.msra.mxu0 %v1622
    %2367 = vmatprep.subr.bf16.mxu0 %v1629
    %2368 = vmatpush1.bf16.msra.mxu0 %v1628
    %2369 = vmatprep.subr.bf16.mxu0 %v1635
    %2370 = vmatpush1.bf16.msra.mxu0 %v1634
    %2371 = vmatprep.subr.bf16.mxu0 %v1641
    %2372 = vmatpush1.bf16.msra.mxu0 %v1640
    %2373 = vmatprep.subr.bf16.mxu0 %v1647
    %2374 = vmatpush1.bf16.msra.mxu0 %v1646
    %2375 = vmatprep.subr.bf16.mxu0 %v1653
    %2376 = vmatpush1.bf16.msra.mxu0 %v1652
    %2377 = vmatprep.subr.bf16.mxu0 %v1659
    %2378 = vmatpush1.bf16.msra.mxu0 %v1658
    %2379 = vmatprep.subr.bf16.mxu0 %v1665
    %2380 = vmatpush1.bf16.msra.mxu0 %v1664
    %2381 = vmatprep.subr.bf16.mxu0 %v1671
    %2382 = vmatpush1.bf16.msra.mxu0 %v1670
    %2383 = vmatprep.subr.bf16.mxu0 %v1677
    %2384 = vmatpush1.bf16.msra.mxu0 %v1676
    %2385 = vmatprep.subr.bf16.mxu0 %v1683
    %2386 = vmatpush1.bf16.msra.mxu0 %v1682
    %2387 = vmatprep.subr.bf16.mxu0 %v1689
    %2388 = vmatpush1.bf16.msra.mxu0 %v1688
    %2389 = vmatprep.subr.bf16.mxu0 %v1695
    %2390 = vmatpush1.bf16.msra.mxu0 %v1694
    %2391 = vmatprep.subr.bf16.mxu0 %v1701
    %2392 = vmatpush1.bf16.msra.mxu0 %v1700
    %2393 = vmatprep.subr.bf16.mxu0 %v1707
    %2394 = vmatpush1.bf16.msra.mxu0 %v1706
    %2395 = vmatprep.mubr.bf16.mxu0 %v251
    %2396 = vmatmul.mubr.bf16.gmra.mrb[0].mxu0 %v250
    %v2397 = vpop.f32.mrb[0].mxu0
    %v2398 = vadd.f32 %v2325, %v2397
    %v2399 = vpop.f32.mrb[0].mxu0
    %v2400 = vadd.f32 %v2327, %v2399
    %v2401 = vpop.f32.mrb[0].mxu0
    %v2402 = vadd.f32 %v2329, %v2401
    %v2403 = vpop.f32.mrb[0].mxu0
    %v2404 = vadd.f32 %v2331, %v2403
    %2405 = vmatprep.mubr.bf16.mxu0 %v257
    %2406 = vmatmul.mubr.bf16.gmra.mrb[0].mxu0 %v256
    %v2407 = vpop.f32.mrb[0].mxu0
    %v2408 = vadd.f32 %v2335, %v2407
    %v2409 = vpop.f32.mrb[0].mxu0
    %v2410 = vadd.f32 %v2337, %v2409
    %v2411 = vpop.f32.mrb[0].mxu0
    %v2412 = vadd.f32 %v2339, %v2411
    %v2413 = vpop.f32.mrb[0].mxu0
    %v2414 = vadd.f32 %v2341, %v2413
    %2415 = vmatprep.mubr.bf16.mxu0 %v263
    %2416 = vmatmul.mubr.bf16.gmra.mrb[0].mxu0 %v262
    %v2417 = vpop.f32.mrb[0].mxu0
    %v2418 = vadd.f32 %v2345, %v2417
    %v2419 = vpop.f32.mrb[0].mxu0
    %v2420 = vadd.f32 %v2347, %v2419
    %v2421 = vpop.f32.mrb[0].mxu0
    %v2422 = vadd.f32 %v2349, %v2421
    %v2423 = vpop.f32.mrb[0].mxu0
    %v2424 = vadd.f32 %v2351, %v2423
    %2425 = vmatprep.mubr.bf16.mxu0 %v269
    %2426 = vmatmul.mubr.bf16.gmra.mrb[0].mxu0 %v268
    %v2427 = vpop.f32.mrb[0].mxu0
    %v2428 = vadd.f32 %v2355, %v2427
    %v2429 = vpop.f32.mrb[0].mxu0
    %v2430 = vadd.f32 %v2357, %v2429
    %v2431 = vpop.f32.mrb[0].mxu0
    %v2432 = vadd.f32 %v2359, %v2431
    %v2433 = vpop.f32.mrb[0].mxu0
    %v2434 = vadd.f32 %v2361, %v2433
    %2435 = vdwg.mxu0
    %2436 = vmatprep.subr.bf16.mxu0 %v1427
    %2437 = vmatpush1.bf16.msra.mxu0 %v1426
    %2438 = vmatprep.subr.bf16.mxu0 %v1433
    %2439 = vmatpush1.bf16.msra.mxu0 %v1432
    %2440 = vmatprep.subr.bf16.mxu0 %v1439
    %2441 = vmatpush1.bf16.msra.mxu0 %v1438
    %2442 = vmatprep.subr.bf16.mxu0 %v1445
    %2443 = vmatpush1.bf16.msra.mxu0 %v1444
    %2444 = vmatprep.subr.bf16.mxu0 %v1451
    %2445 = vmatpush1.bf16.msra.mxu0 %v1450
    %2446 = vmatprep.subr.bf16.mxu0 %v1457
    %2447 = vmatpush1.bf16.msra.mxu0 %v1456
    %2448 = vmatprep.subr.bf16.mxu0 %v1463
    %2449 = vmatpush1.bf16.msra.mxu0 %v1462
    %2450 = vmatprep.subr.bf16.mxu0 %v1469
    %2451 = vmatpush1.bf16.msra.mxu0 %v1468
    %2452 = vmatprep.subr.bf16.mxu0 %v1475
    %2453 = vmatpush1.bf16.msra.mxu0 %v1474
    %2454 = vmatprep.subr.bf16.mxu0 %v1481
    %2455 = vmatpush1.bf16.msra.mxu0 %v1480
    %2456 = vmatprep.subr.bf16.mxu0 %v1487
    %2457 = vmatpush1.bf16.msra.mxu0 %v1486
    %2458 = vmatprep.subr.bf16.mxu0 %v1493
    %2459 = vmatpush1.bf16.msra.mxu0 %v1492
    %2460 = vmatprep.subr.bf16.mxu0 %v1499
    %2461 = vmatpush1.bf16.msra.mxu0 %v1498
    %2462 = vmatprep.subr.bf16.mxu0 %v1505
    %2463 = vmatpush1.bf16.msra.mxu0 %v1504
    %2464 = vmatprep.subr.bf16.mxu0 %v1511
    %2465 = vmatpush1.bf16.msra.mxu0 %v1510
    %2466 = vmatprep.subr.bf16.mxu0 %v1517
    %2467 = vmatpush1.bf16.msra.mxu0 %v1516
    %2468 = vmatprep.mubr.bf16.mxu0 %v247
    %2469 = vmatmul.mubr.bf16.gmra.mrb[0].mxu0 %v246
    %v2470 = vpop.f32.mrb[0].mxu0
    %v2471 = vadd.f32 0.0, %v2470
    %v2472 = vpop.f32.mrb[0].mxu0
    %v2473 = vadd.f32 0.0, %v2472
    %v2474 = vpop.f32.mrb[0].mxu0
    %v2475 = vadd.f32 0.0, %v2474
    %v2476 = vpop.f32.mrb[0].mxu0
    %v2477 = vadd.f32 0.0, %v2476
    %2478 = vmatprep.mubr.bf16.mxu0 %v253
    %2479 = vmatmul.mubr.bf16.gmra.mrb[0].mxu0 %v252
    %v2480 = vpop.f32.mrb[0].mxu0
    %v2481 = vadd.f32 0.0, %v2480
    %v2482 = vpop.f32.mrb[0].mxu0
    %v2483 = vadd.f32 0.0, %v2482
    %v2484 = vpop.f32.mrb[0].mxu0
    %v2485 = vadd.f32 0.0, %v2484
    %v2486 = vpop.f32.mrb[0].mxu0
    %v2487 = vadd.f32 0.0, %v2486
    %2488 = vmatprep.mubr.bf16.mxu0 %v259
    %2489 = vmatmul.mubr.bf16.gmra.mrb[0].mxu0 %v258
    %v2490 = vpop.f32.mrb[0].mxu0
    %v2491 = vadd.f32 0.0, %v2490
    %v2492 = vpop.f32.mrb[0].mxu0
    %v2493 = vadd.f32 0.0, %v2492
    %v2494 = vpop.f32.mrb[0].mxu0
    %v2495 = vadd.f32 0.0, %v2494
    %v2496 = vpop.f32.mrb[0].mxu0
    %v2497 = vadd.f32 0.0, %v2496
    %2498 = vmatprep.mubr.bf16.mxu0 %v265
    %2499 = vmatmul.mubr.bf16.gmra.mrb[0].mxu0 %v264
    %v2500 = vpop.f32.mrb[0].mxu0
    %v2501 = vadd.f32 0.0, %v2500
    %v2502 = vpop.f32.mrb[0].mxu0
    %v2503 = vadd.f32 0.0, %v2502
    %v2504 = vpop.f32.mrb[0].mxu0
    %v2505 = vadd.f32 0.0, %v2504
    %v2506 = vpop.f32.mrb[0].mxu0
    %v2507 = vadd.f32 0.0, %v2506
    %2508 = vdwg.mxu0
    %2509 = vmatprep.subr.bf16.mxu0 %v1523
    %2510 = vmatpush1.bf16.msra.mxu0 %v1522
    %2511 = vmatprep.subr.bf16.mxu0 %v1529
    %2512 = vmatpush1.bf16.msra.mxu0 %v1528
    %2513 = vmatprep.subr.bf16.mxu0 %v1535
    %2514 = vmatpush1.bf16.msra.mxu0 %v1534
    %2515 = vmatprep.subr.bf16.mxu0 %v1541
    %2516 = vmatpush1.bf16.msra.mxu0 %v1540
    %2517 = vmatprep.subr.bf16.mxu0 %v1547
    %2518 = vmatpush1.bf16.msra.mxu0 %v1546
    %2519 = vmatprep.subr.bf16.mxu0 %v1553
    %2520 = vmatpush1.bf16.msra.mxu0 %v1552
    %2521 = vmatprep.subr.bf16.mxu0 %v1559
    %2522 = vmatpush1.bf16.msra.mxu0 %v1558
    %2523 = vmatprep.subr.bf16.mxu0 %v1565
    %2524 = vmatpush1.bf16.msra.mxu0 %v1564
    %2525 = vmatprep.subr.bf16.mxu0 %v1571
    %2526 = vmatpush1.bf16.msra.mxu0 %v1570
    %2527 = vmatprep.subr.bf16.mxu0 %v1577
    %2528 = vmatpush1.bf16.msra.mxu0 %v1576
    %2529 = vmatprep.subr.bf16.mxu0 %v1583
    %2530 = vmatpush1.bf16.msra.mxu0 %v1582
    %2531 = vmatprep.subr.bf16.mxu0 %v1589
    %2532 = vmatpush1.bf16.msra.mxu0 %v1588
    %2533 = vmatprep.subr.bf16.mxu0 %v1595
    %2534 = vmatpush1.bf16.msra.mxu0 %v1594
    %2535 = vmatprep.subr.bf16.mxu0 %v1601
    %2536 = vmatpush1.bf16.msra.mxu0 %v1600
    %2537 = vmatprep.subr.bf16.mxu0 %v1607
    %2538 = vmatpush1.bf16.msra.mxu0 %v1606
    %2539 = vmatprep.subr.bf16.mxu0 %v1613
    %2540 = vmatpush1.bf16.msra.mxu0 %v1612
    %2541 = vmatprep.mubr.bf16.mxu0 %v249
    %2542 = vmatmul.mubr.bf16.gmra.mrb[0].mxu0 %v248
    %v2543 = vpop.f32.mrb[0].mxu0
    %v2544 = vadd.f32 %v2471, %v2543
    %v2545 = vpop.f32.mrb[0].mxu0
    %v2546 = vadd.f32 %v2473, %v2545
    %v2547 = vpop.f32.mrb[0].mxu0
    %v2548 = vadd.f32 %v2475, %v2547
    %v2549 = vpop.f32.mrb[0].mxu0
    %v2550 = vadd.f32 %v2477, %v2549
    %2551 = vmatprep.mubr.bf16.mxu0 %v255
    %2552 = vmatmul.mubr.bf16.gmra.mrb[0].mxu0 %v254
    %v2553 = vpop.f32.mrb[0].mxu0
    %v2554 = vadd.f32 %v2481, %v2553
    %v2555 = vpop.f32.mrb[0].mxu0
    %v2556 = vadd.f32 %v2483, %v2555
    %v2557 = vpop.f32.mrb[0].mxu0
    %v2558 = vadd.f32 %v2485, %v2557
    %v2559 = vpop.f32.mrb[0].mxu0
    %v2560 = vadd.f32 %v2487, %v2559
    %2561 = vmatprep.mubr.bf16.mxu0 %v261
    %2562 = vmatmul.mubr.bf16.gmra.mrb[0].mxu0 %v260
    %v2563 = vpop.f32.mrb[0].mxu0
    %v2564 = vadd.f32 %v2491, %v2563
    %v2565 = vpop.f32.mrb[0].mxu0
    %v2566 = vadd.f32 %v2493, %v2565
    %v2567 = vpop.f32.mrb[0].mxu0
    %v2568 = vadd.f32 %v2495, %v2567
    %v2569 = vpop.f32.mrb[0].mxu0
    %v2570 = vadd.f32 %v2497, %v2569
    %2571 = vmatprep.mubr.bf16.mxu0 %v267
    %2572 = vmatmul.mubr.bf16.gmra.mrb[0].mxu0 %v266
    %v2573 = vpop.f32.mrb[0].mxu0
    %v2574 = vadd.f32 %v2501, %v2573
    %v2575 = vpop.f32.mrb[0].mxu0
    %v2576 = vadd.f32 %v2503, %v2575
    %v2577 = vpop.f32.mrb[0].mxu0
    %v2578 = vadd.f32 %v2505, %v2577
    %v2579 = vpop.f32.mrb[0].mxu0
    %v2580 = vadd.f32 %v2507, %v2579
    %2581 = vdwg.mxu0
    %2582 = vmatprep.subr.bf16.mxu0 %v1619
    %2583 = vmatpush1.bf16.msra.mxu0 %v1618
    %2584 = vmatprep.subr.bf16.mxu0 %v1625
    %2585 = vmatpush1.bf16.msra.mxu0 %v1624
    %2586 = vmatprep.subr.bf16.mxu0 %v1631
    %2587 = vmatpush1.bf16.msra.mxu0 %v1630
    %2588 = vmatprep.subr.bf16.mxu0 %v1637
    %2589 = vmatpush1.bf16.msra.mxu0 %v1636
    %2590 = vmatprep.subr.bf16.mxu0 %v1643
    %2591 = vmatpush1.bf16.msra.mxu0 %v1642
    %2592 = vmatprep.subr.bf16.mxu0 %v1649
    %2593 = vmatpush1.bf16.msra.mxu0 %v1648
    %2594 = vmatprep.subr.bf16.mxu0 %v1655
    %2595 = vmatpush1.bf16.msra.mxu0 %v1654
    %2596 = vmatprep.subr.bf16.mxu0 %v1661
    %2597 = vmatpush1.bf16.msra.mxu0 %v1660
    %2598 = vmatprep.subr.bf16.mxu0 %v1667
    %2599 = vmatpush1.bf16.msra.mxu0 %v1666
    %2600 = vmatprep.subr.bf16.mxu0 %v1673
    %2601 = vmatpush1.bf16.msra.mxu0 %v1672
    %2602 = vmatprep.subr.bf16.mxu0 %v1679
    %2603 = vmatpush1.bf16.msra.mxu0 %v1678
    %2604 = vmatprep.subr.bf16.mxu0 %v1685
    %2605 = vmatpush1.bf16.msra.mxu0 %v1684
    %2606 = vmatprep.subr.bf16.mxu0 %v1691
    %2607 = vmatpush1.bf16.msra.mxu0 %v1690
    %2608 = vmatprep.subr.bf16.mxu0 %v1697
    %2609 = vmatpush1.bf16.msra.mxu0 %v1696
    %2610 = vmatprep.subr.bf16.mxu0 %v1703
    %2611 = vmatpush1.bf16.msra.mxu0 %v1702
    %2612 = vmatprep.subr.bf16.mxu0 %v1709
    %2613 = vmatpush1.bf16.msra.mxu0 %v1708
    %2614 = vmatprep.mubr.bf16.mxu0 %v251
    %2615 = vmatmul.mubr.bf16.gmra.mrb[0].mxu0 %v250
    %v2616 = vpop.f32.mrb[0].mxu0
    %v2617 = vadd.f32 %v2544, %v2616
    %v2618 = vpop.f32.mrb[0].mxu0
    %v2619 = vadd.f32 %v2546, %v2618
    %v2620 = vpop.f32.mrb[0].mxu0
    %v2621 = vadd.f32 %v2548, %v2620
    %v2622 = vpop.f32.mrb[0].mxu0
    %v2623 = vadd.f32 %v2550, %v2622
    %2624 = vmatprep.mubr.bf16.mxu0 %v257
    %2625 = vmatmul.mubr.bf16.gmra.mrb[0].mxu0 %v256
    %v2626 = vpop.f32.mrb[0].mxu0
    %v2627 = vadd.f32 %v2554, %v2626
    %v2628 = vpop.f32.mrb[0].mxu0
    %v2629 = vadd.f32 %v2556, %v2628
    %v2630 = vpop.f32.mrb[0].mxu0
    %v2631 = vadd.f32 %v2558, %v2630
    %v2632 = vpop.f32.mrb[0].mxu0
    %v2633 = vadd.f32 %v2560, %v2632
    %2634 = vmatprep.mubr.bf16.mxu0 %v263
    %2635 = vmatmul.mubr.bf16.gmra.mrb[0].mxu0 %v262
    %v2636 = vpop.f32.mrb[0].mxu0
    %v2637 = vadd.f32 %v2564, %v2636
    %v2638 = vpop.f32.mrb[0].mxu0
    %v2639 = vadd.f32 %v2566, %v2638
    %v2640 = vpop.f32.mrb[0].mxu0
    %v2641 = vadd.f32 %v2568, %v2640
    %v2642 = vpop.f32.mrb[0].mxu0
    %v2643 = vadd.f32 %v2570, %v2642
    %2644 = vmatprep.mubr.bf16.mxu0 %v269
    %2645 = vmatmul.mubr.bf16.gmra.mrb[0].mxu0 %v268
    %v2646 = vpop.f32.mrb[0].mxu0
    %v2647 = vadd.f32 %v2574, %v2646
    %v2648 = vpop.f32.mrb[0].mxu0
    %v2649 = vadd.f32 %v2576, %v2648
    %v2650 = vpop.f32.mrb[0].mxu0
    %v2651 = vadd.f32 %v2578, %v2650
    %v2652 = vpop.f32.mrb[0].mxu0
    %v2653 = vadd.f32 %v2580, %v2652
    %2654 = vdwg.mxu0
    %v2655 = vld [vmem:[#allocation9] sm:$0x3f]
    %v2656 = vld [vmem:[#allocation10] sm:$0x3f]
    %v2657 = vld [vmem:[#allocation12] sm:$0x3f]
    %v2659 = vlaneseq
    %v2660 = vshrl.u32 %v2659, 7
    %v2661 = vsub.s32 0, %v2660
    %v2662 = vrot.slane %v2655, %v2661
    %v2663 = vlaneseq
    %v2664 = vshrl.u32 %v2663, 7
    %v2665 = vsub.s32 1, %v2664
    %v2666 = vrot.slane %v2655, %v2665
    %v2667 = vlaneseq
    %v2668 = vshrl.u32 %v2667, 7
    %v2669 = vsub.s32 2, %v2668
    %v2670 = vrot.slane %v2655, %v2669
    %v2671 = vlaneseq
    %v2672 = vshrl.u32 %v2671, 7
    %v2673 = vsub.s32 3, %v2672
    %v2674 = vrot.slane %v2655, %v2673
    %v2675 = vlaneseq
    %v2676 = vshrl.u32 %v2675, 7
    %v2677 = vsub.s32 4, %v2676
    %v2678 = vrot.slane %v2655, %v2677
    %v2679 = vlaneseq
    %v2680 = vshrl.u32 %v2679, 7
    %v2681 = vsub.s32 5, %v2680
    %v2682 = vrot.slane %v2655, %v2681
    %v2689 = vmul.f32 %v2179, %v2662
    %v2690 = vmul.f32 %v2181, %v2666
    %v2691 = vmul.f32 %v2398, %v2670
    %v2692 = vmul.f32 %v2400, %v2674
    %v2693 = vmul.f32 %v2617, %v2678
    %v2694 = vmul.f32 %v2619, %v2682
    %v2695 = vmul.f32 %v2183, %v2662
    %v2696 = vmul.f32 %v2185, %v2666
    %v2697 = vmul.f32 %v2402, %v2670
    %v2698 = vmul.f32 %v2404, %v2674
    %v2699 = vmul.f32 %v2621, %v2678
    %v2700 = vmul.f32 %v2623, %v2682
    %v2701 = vmul.f32 %v2189, %v2662
    %v2702 = vmul.f32 %v2191, %v2666
    %v2703 = vmul.f32 %v2408, %v2670
    %v2704 = vmul.f32 %v2410, %v2674
    %v2705 = vmul.f32 %v2627, %v2678
    %v2706 = vmul.f32 %v2629, %v2682
    %v2707 = vmul.f32 %v2193, %v2662
    %v2708 = vmul.f32 %v2195, %v2666
    %v2709 = vmul.f32 %v2412, %v2670
    %v2710 = vmul.f32 %v2414, %v2674
    %v2711 = vmul.f32 %v2631, %v2678
    %v2712 = vmul.f32 %v2633, %v2682
    %v2713 = vmul.f32 %v2199, %v2662
    %v2714 = vmul.f32 %v2201, %v2666
    %v2715 = vmul.f32 %v2418, %v2670
    %v2716 = vmul.f32 %v2420, %v2674
    %v2717 = vmul.f32 %v2637, %v2678
    %v2718 = vmul.f32 %v2639, %v2682
    %v2719 = vmul.f32 %v2203, %v2662
    %v2720 = vmul.f32 %v2205, %v2666
    %v2721 = vmul.f32 %v2422, %v2670
    %v2722 = vmul.f32 %v2424, %v2674
    %v2723 = vmul.f32 %v2641, %v2678
    %v2724 = vmul.f32 %v2643, %v2682
    %v2725 = vmul.f32 %v2209, %v2662
    %v2726 = vmul.f32 %v2211, %v2666
    %v2727 = vmul.f32 %v2428, %v2670
    %v2728 = vmul.f32 %v2430, %v2674
    %v2729 = vmul.f32 %v2647, %v2678
    %v2730 = vmul.f32 %v2649, %v2682
    %v2731 = vmul.f32 %v2213, %v2662
    %v2732 = vmul.f32 %v2215, %v2666
    %v2733 = vmul.f32 %v2432, %v2670
    %v2734 = vmul.f32 %v2434, %v2674
    %v2735 = vmul.f32 %v2651, %v2678
    %v2736 = vmul.f32 %v2653, %v2682
    %v2737 = vadd.f32 %v2689, %v2690
    %v2738 = vadd.f32 %v2737, %v2691
    %v2739 = vadd.f32 %v2738, %v2692
    %v2740 = vadd.f32 %v2739, %v2693
    %v2741 = vadd.f32 %v2740, %v2694
    %2742 = vadd.xlane.f32.xlu0 %v2741
    %v2743 = vpop.xlane.xlu0 %2742
    %v2744 = vadd.f32 %v2695, %v2696
    %v2745 = vadd.f32 %v2744, %v2697
    %v2746 = vadd.f32 %v2745, %v2698
    %v2747 = vadd.f32 %v2746, %v2699
    %v2748 = vadd.f32 %v2747, %v2700
    %2749 = vadd.xlane.f32.xlu0 %v2748
    %v2750 = vpop.xlane.xlu0 %2749
    %v2751 = vadd.f32 %v2701, %v2702
    %v2752 = vadd.f32 %v2751, %v2703
    %v2753 = vadd.f32 %v2752, %v2704
    %v2754 = vadd.f32 %v2753, %v2705
    %v2755 = vadd.f32 %v2754, %v2706
    %2756 = vadd.xlane.f32.xlu0 %v2755
    %v2757 = vpop.xlane.xlu0 %2756
    %v2758 = vadd.f32 %v2707, %v2708
    %v2759 = vadd.f32 %v2758, %v2709
    %v2760 = vadd.f32 %v2759, %v2710
    %v2761 = vadd.f32 %v2760, %v2711
    %v2762 = vadd.f32 %v2761, %v2712
    %2763 = vadd.xlane.f32.xlu0 %v2762
    %v2764 = vpop.xlane.xlu0 %2763
    %v2765 = vadd.f32 %v2713, %v2714
    %v2766 = vadd.f32 %v2765, %v2715
    %v2767 = vadd.f32 %v2766, %v2716
    %v2768 = vadd.f32 %v2767, %v2717
    %v2769 = vadd.f32 %v2768, %v2718
    %2770 = vadd.xlane.f32.xlu0 %v2769
    %v2771 = vpop.xlane.xlu0 %2770
    %v2772 = vadd.f32 %v2719, %v2720
    %v2773 = vadd.f32 %v2772, %v2721
    %v2774 = vadd.f32 %v2773, %v2722
    %v2775 = vadd.f32 %v2774, %v2723
    %v2776 = vadd.f32 %v2775, %v2724
    %2777 = vadd.xlane.f32.xlu0 %v2776
    %v2778 = vpop.xlane.xlu0 %2777
    %v2779 = vadd.f32 %v2725, %v2726
    %v2780 = vadd.f32 %v2779, %v2727
    %v2781 = vadd.f32 %v2780, %v2728
    %v2782 = vadd.f32 %v2781, %v2729
    %v2783 = vadd.f32 %v2782, %v2730
    %2784 = vadd.xlane.f32.xlu0 %v2783
    %v2785 = vpop.xlane.xlu0 %2784
    %v2786 = vadd.f32 %v2731, %v2732
    %v2787 = vadd.f32 %v2786, %v2733
    %v2788 = vadd.f32 %v2787, %v2734
    %v2789 = vadd.f32 %v2788, %v2735
    %v2790 = vadd.f32 %v2789, %v2736
    %2791 = vadd.xlane.f32.xlu0 %v2790
    %v2792 = vpop.xlane.xlu0 %2791
    %v2794 = vlaneseq
    %v2795 = vshrl.u32 %v2794, 7
    %v2796 = vsub.s32 0, %v2795
    %v2797 = vrot.slane %v2656, %v2796
    %v2798 = vlaneseq
    %v2799 = vshrl.u32 %v2798, 7
    %v2800 = vsub.s32 1, %v2799
    %v2801 = vrot.slane %v2656, %v2800
    %v2802 = vlaneseq
    %v2803 = vshrl.u32 %v2802, 7
    %v2804 = vsub.s32 2, %v2803
    %v2805 = vrot.slane %v2656, %v2804
    %v2806 = vlaneseq
    %v2807 = vshrl.u32 %v2806, 7
    %v2808 = vsub.s32 3, %v2807
    %v2809 = vrot.slane %v2656, %v2808
    %v2810 = vlaneseq
    %v2811 = vshrl.u32 %v2810, 7
    %v2812 = vsub.s32 4, %v2811
    %v2813 = vrot.slane %v2656, %v2812
    %v2814 = vlaneseq
    %v2815 = vshrl.u32 %v2814, 7
    %v2816 = vsub.s32 5, %v2815
    %v2817 = vrot.slane %v2656, %v2816
    %v2824 = vmul.f32 %v2179, %v2797
    %v2825 = vmul.f32 %v2181, %v2801
    %v2826 = vmul.f32 %v2398, %v2805
    %v2827 = vmul.f32 %v2400, %v2809
    %v2828 = vmul.f32 %v2617, %v2813
    %v2829 = vmul.f32 %v2619, %v2817
    %v2830 = vmul.f32 %v2183, %v2797
    %v2831 = vmul.f32 %v2185, %v2801
    %v2832 = vmul.f32 %v2402, %v2805
    %v2833 = vmul.f32 %v2404, %v2809
    %v2834 = vmul.f32 %v2621, %v2813
    %v2835 = vmul.f32 %v2623, %v2817
    %v2836 = vmul.f32 %v2189, %v2797
    %v2837 = vmul.f32 %v2191, %v2801
    %v2838 = vmul.f32 %v2408, %v2805
    %v2839 = vmul.f32 %v2410, %v2809
    %v2840 = vmul.f32 %v2627, %v2813
    %v2841 = vmul.f32 %v2629, %v2817
    %v2842 = vmul.f32 %v2193, %v2797
    %v2843 = vmul.f32 %v2195, %v2801
    %v2844 = vmul.f32 %v2412, %v2805
    %v2845 = vmul.f32 %v2414, %v2809
    %v2846 = vmul.f32 %v2631, %v2813
    %v2847 = vmul.f32 %v2633, %v2817
    %v2848 = vmul.f32 %v2199, %v2797
    %v2849 = vmul.f32 %v2201, %v2801
    %v2850 = vmul.f32 %v2418, %v2805
    %v2851 = vmul.f32 %v2420, %v2809
    %v2852 = vmul.f32 %v2637, %v2813
    %v2853 = vmul.f32 %v2639, %v2817
    %v2854 = vmul.f32 %v2203, %v2797
    %v2855 = vmul.f32 %v2205, %v2801
    %v2856 = vmul.f32 %v2422, %v2805
    %v2857 = vmul.f32 %v2424, %v2809
    %v2858 = vmul.f32 %v2641, %v2813
    %v2859 = vmul.f32 %v2643, %v2817
    %v2860 = vmul.f32 %v2209, %v2797
    %v2861 = vmul.f32 %v2211, %v2801
    %v2862 = vmul.f32 %v2428, %v2805
    %v2863 = vmul.f32 %v2430, %v2809
    %v2864 = vmul.f32 %v2647, %v2813
    %v2865 = vmul.f32 %v2649, %v2817
    %v2866 = vmul.f32 %v2213, %v2797
    %v2867 = vmul.f32 %v2215, %v2801
    %v2868 = vmul.f32 %v2432, %v2805
    %v2869 = vmul.f32 %v2434, %v2809
    %v2870 = vmul.f32 %v2651, %v2813
    %v2871 = vmul.f32 %v2653, %v2817
    %v2872 = vadd.f32 %v2824, %v2825
    %v2873 = vadd.f32 %v2872, %v2826
    %v2874 = vadd.f32 %v2873, %v2827
    %v2875 = vadd.f32 %v2874, %v2828
    %v2876 = vadd.f32 %v2875, %v2829
    %2877 = vadd.xlane.f32.xlu0 %v2876
    %v2878 = vpop.xlane.xlu0 %2877
    %v2879 = vadd.f32 %v2830, %v2831
    %v2880 = vadd.f32 %v2879, %v2832
    %v2881 = vadd.f32 %v2880, %v2833
    %v2882 = vadd.f32 %v2881, %v2834
    %v2883 = vadd.f32 %v2882, %v2835
    %2884 = vadd.xlane.f32.xlu0 %v2883
    %v2885 = vpop.xlane.xlu0 %2884
    %v2886 = vadd.f32 %v2836, %v2837
    %v2887 = vadd.f32 %v2886, %v2838
    %v2888 = vadd.f32 %v2887, %v2839
    %v2889 = vadd.f32 %v2888, %v2840
    %v2890 = vadd.f32 %v2889, %v2841
    %2891 = vadd.xlane.f32.xlu0 %v2890
    %v2892 = vpop.xlane.xlu0 %2891
    %v2893 = vadd.f32 %v2842, %v2843
    %v2894 = vadd.f32 %v2893, %v2844
    %v2895 = vadd.f32 %v2894, %v2845
    %v2896 = vadd.f32 %v2895, %v2846
    %v2897 = vadd.f32 %v2896, %v2847
    %2898 = vadd.xlane.f32.xlu0 %v2897
    %v2899 = vpop.xlane.xlu0 %2898
    %v2900 = vadd.f32 %v2848, %v2849
    %v2901 = vadd.f32 %v2900, %v2850
    %v2902 = vadd.f32 %v2901, %v2851
    %v2903 = vadd.f32 %v2902, %v2852
    %v2904 = vadd.f32 %v2903, %v2853
    %2905 = vadd.xlane.f32.xlu0 %v2904
    %v2906 = vpop.xlane.xlu0 %2905
    %v2907 = vadd.f32 %v2854, %v2855
    %v2908 = vadd.f32 %v2907, %v2856
    %v2909 = vadd.f32 %v2908, %v2857
    %v2910 = vadd.f32 %v2909, %v2858
    %v2911 = vadd.f32 %v2910, %v2859
    %2912 = vadd.xlane.f32.xlu0 %v2911
    %v2913 = vpop.xlane.xlu0 %2912
    %v2914 = vadd.f32 %v2860, %v2861
    %v2915 = vadd.f32 %v2914, %v2862
    %v2916 = vadd.f32 %v2915, %v2863
    %v2917 = vadd.f32 %v2916, %v2864
    %v2918 = vadd.f32 %v2917, %v2865
    %2919 = vadd.xlane.f32.xlu0 %v2918
    %v2920 = vpop.xlane.xlu0 %2919
    %v2921 = vadd.f32 %v2866, %v2867
    %v2922 = vadd.f32 %v2921, %v2868
    %v2923 = vadd.f32 %v2922, %v2869
    %v2924 = vadd.f32 %v2923, %v2870
    %v2925 = vadd.f32 %v2924, %v2871
    %2926 = vadd.xlane.f32.xlu0 %v2925
    %v2927 = vpop.xlane.xlu0 %2926
    %2928 = vxpose.xlu0.b32.start [1/16] %v2743, 128
    %2929 = vxpose.xlu0.b32.cont [2/16] %v2750, 128
    %2930 = vxpose.xlu0.b32.cont [3/16] %v2757, 128
    %2931 = vxpose.xlu0.b32.cont [4/16] %v2764, 128
    %2932 = vxpose.xlu0.b32.cont [5/16] %v2771, 128
    %2933 = vxpose.xlu0.b32.cont [6/16] %v2778, 128
    %2934 = vxpose.xlu0.b32.cont [7/16] %v2785, 128
    %2935 = vxpose.xlu0.b32.cont [8/16] %v2792, 128
    %2936 = vxpose.xlu0.b32.cont [9/16] 0.0, 128
    %2937 = vxpose.xlu0.b32.cont [10/16] 0.0, 128
    %2938 = vxpose.xlu0.b32.cont [11/16] 0.0, 128
    %2939 = vxpose.xlu0.b32.cont [12/16] 0.0, 128
    %2940 = vxpose.xlu0.b32.cont [13/16] 0.0, 128
    %2941 = vxpose.xlu0.b32.cont [14/16] 0.0, 128
    %2942 = vxpose.xlu0.b32.cont [15/16] 0.0, 128
    %2943 = vxpose.xlu0.b32.end [16/16] 0.0, 128
    %v2944 = vpop.trf.xlu0
    %v2945 = vpop.trf.xlu0
    %v2946 = vpop.trf.xlu0
    %v2947 = vpop.trf.xlu0
    %v2948 = vpop.trf.xlu0
    %v2949 = vpop.trf.xlu0
    %v2950 = vpop.trf.xlu0
    %v2951 = vpop.trf.xlu0
    %v2952 = vpop.trf.xlu0
    %v2953 = vpop.trf.xlu0
    %v2954 = vpop.trf.xlu0
    %v2955 = vpop.trf.xlu0
    %v2956 = vpop.trf.xlu0
    %v2957 = vpop.trf.xlu0
    %v2958 = vpop.trf.xlu0
    %v2959 = vpop.trf.xlu0
    %v2960 = vlaneseq
    %v2961 = vshrl.u32 %v2960, 7
    %v2962 = vsub.s32 0, %v2961
    %v2963 = vrot.slane %v2944, %v2962
    %v2964 = vadd.f32 %v2878, %v2963
    %v2965 = vadd.f32 %v2885, %v2963
    %v2966 = vadd.f32 %v2892, %v2963
    %v2967 = vadd.f32 %v2899, %v2963
    %v2968 = vadd.f32 %v2906, %v2963
    %v2969 = vadd.f32 %v2913, %v2963
    %v2970 = vadd.f32 %v2920, %v2963
    %v2971 = vadd.f32 %v2927, %v2963
    %vm2972 = vcmp.gt.f32.partialorder %v2964, 0.0
    %vm2973 = vcmp.gt.f32.partialorder %v2965, 0.0
    %vm2974 = vcmp.gt.f32.partialorder %v2966, 0.0
    %vm2975 = vcmp.gt.f32.partialorder %v2967, 0.0
    %vm2976 = vcmp.gt.f32.partialorder %v2968, 0.0
    %vm2977 = vcmp.gt.f32.partialorder %v2969, 0.0
    %vm2978 = vcmp.gt.f32.partialorder %v2970, 0.0
    %vm2979 = vcmp.gt.f32.partialorder %v2971, 0.0
    %v2980 = vmul.f32 %v2964, 0.2
    %v2981 = vmul.f32 %v2965, 0.2
    %v2982 = vmul.f32 %v2966, 0.2
    %v2983 = vmul.f32 %v2967, 0.2
    %v2984 = vmul.f32 %v2968, 0.2
    %v2985 = vmul.f32 %v2969, 0.2
    %v2986 = vmul.f32 %v2970, 0.2
    %v2987 = vmul.f32 %v2971, 0.2
    %v2988 = vsel %vm2972, %v2964, %v2980
    %v2989 = vsel %vm2973, %v2965, %v2981
    %v2990 = vsel %vm2974, %v2966, %v2982
    %v2991 = vsel %vm2975, %v2967, %v2983
    %v2992 = vsel %vm2976, %v2968, %v2984
    %v2993 = vsel %vm2977, %v2969, %v2985
    %v2994 = vsel %vm2978, %v2970, %v2986
    %v2995 = vsel %vm2979, %v2971, %v2987
    %v2996 = vsel %vm190, 65537, 0
    %v2997 = vsel %vm191, 65537, 0
    %v2998 = vsel %vm192, 65537, 0
    %v2999 = vsel %vm193, 65537, 0
    %v3000 = vsel %vm194, 65537, 0
    %v3001 = vsel %vm195, 65537, 0
    %v3002 = vsel %vm196, 65537, 0
    %v3003 = vsel %vm197, 65537, 0
    %v3004 = vunpack.c.l.b16 %v2996
    %v3005 = vunpack.c.l.b16 %v2997
    %v3006 = vunpack.c.l.b16 %v2998
    %v3007 = vunpack.c.l.b16 %v2999
    %v3008 = vunpack.c.l.b16 %v3000
    %v3009 = vunpack.c.l.b16 %v3001
    %v3010 = vunpack.c.l.b16 %v3002
    %v3011 = vunpack.c.l.b16 %v3003
    %vm3012 = vcmp.ne.s32.totalorder %v3004, 0
    %vm3013 = vcmp.ne.s32.totalorder %v3005, 0
    %vm3014 = vcmp.ne.s32.totalorder %v3006, 0
    %vm3015 = vcmp.ne.s32.totalorder %v3007, 0
    %vm3016 = vcmp.ne.s32.totalorder %v3008, 0
    %vm3017 = vcmp.ne.s32.totalorder %v3009, 0
    %vm3018 = vcmp.ne.s32.totalorder %v3010, 0
    %vm3019 = vcmp.ne.s32.totalorder %v3011, 0
    %v3020 = vsel %vm3012, %v2988, -1e+30
    %v3021 = vsel %vm3013, %v2989, -1e+30
    %v3022 = vsel %vm3014, %v2990, -1e+30
    %v3023 = vsel %vm3015, %v2991, -1e+30
    %v3024 = vsel %vm3016, %v2992, -1e+30
    %v3025 = vsel %vm3017, %v2993, -1e+30
    %v3026 = vsel %vm3018, %v2994, -1e+30
    %v3027 = vsel %vm3019, %v2995, -1e+30
    %vm3028 = vcmask 523264
    %v3029 = vsel %vm3028, %v3020, -inf
    %3030 = vmax.xlane.f32.xlu0 %v3029
    %v3031 = vpop.xlane.xlu0 %3030
    %v3032 = vsel %vm3028, %v3021, -inf
    %3033 = vmax.xlane.f32.xlu0 %v3032
    %v3034 = vpop.xlane.xlu0 %3033
    %v3035 = vsel %vm3028, %v3022, -inf
    %3036 = vmax.xlane.f32.xlu0 %v3035
    %v3037 = vpop.xlane.xlu0 %3036
    %v3038 = vsel %vm3028, %v3023, -inf
    %3039 = vmax.xlane.f32.xlu0 %v3038
    %v3040 = vpop.xlane.xlu0 %3039
    %v3041 = vsel %vm3028, %v3024, -inf
    %3042 = vmax.xlane.f32.xlu0 %v3041
    %v3043 = vpop.xlane.xlu0 %3042
    %v3044 = vsel %vm3028, %v3025, -inf
    %3045 = vmax.xlane.f32.xlu0 %v3044
    %v3046 = vpop.xlane.xlu0 %3045
    %v3047 = vsel %vm3028, %v3026, -inf
    %3048 = vmax.xlane.f32.xlu0 %v3047
    %v3049 = vpop.xlane.xlu0 %3048
    %v3050 = vsel %vm3028, %v3027, -inf
    %3051 = vmax.xlane.f32.xlu0 %v3050
    %v3052 = vpop.xlane.xlu0 %3051
    %v3053 = vsub.f32 %v3020, %v3031
    %v3054 = vsub.f32 %v3021, %v3034
    %v3055 = vsub.f32 %v3022, %v3037
    %v3056 = vsub.f32 %v3023, %v3040
    %v3057 = vsub.f32 %v3024, %v3043
    %v3058 = vsub.f32 %v3025, %v3046
    %v3059 = vsub.f32 %v3026, %v3049
    %v3060 = vsub.f32 %v3027, %v3052
    %v3061 = vmul.f32 %v3053, 1.442695
    %v3062 = vpow.pop %v3061
    %v3063 = vmul.f32 %v3054, 1.442695
    %v3064 = vpow.pop %v3063
    %v3065 = vmul.f32 %v3055, 1.442695
    %v3066 = vpow.pop %v3065
    %v3067 = vmul.f32 %v3056, 1.442695
    %v3068 = vpow.pop %v3067
    %v3069 = vmul.f32 %v3057, 1.442695
    %v3070 = vpow.pop %v3069
    %v3071 = vmul.f32 %v3058, 1.442695
    %v3072 = vpow.pop %v3071
    %v3073 = vmul.f32 %v3059, 1.442695
    %v3074 = vpow.pop %v3073
    %v3075 = vmul.f32 %v3060, 1.442695
    %v3076 = vpow.pop %v3075
    %v3077 = vsel %vm3028, %v3062, 0.0
    %3078 = vadd.xlane.f32.xlu0 %v3077
    %v3079 = vpop.xlane.xlu0 %3078
    %v3080 = vsel %vm3028, %v3064, 0.0
    %3081 = vadd.xlane.f32.xlu0 %v3080
    %v3082 = vpop.xlane.xlu0 %3081
    %v3083 = vsel %vm3028, %v3066, 0.0
    %3084 = vadd.xlane.f32.xlu0 %v3083
    %v3085 = vpop.xlane.xlu0 %3084
    %v3086 = vsel %vm3028, %v3068, 0.0
    %3087 = vadd.xlane.f32.xlu0 %v3086
    %v3088 = vpop.xlane.xlu0 %3087
    %v3089 = vsel %vm3028, %v3070, 0.0
    %3090 = vadd.xlane.f32.xlu0 %v3089
    %v3091 = vpop.xlane.xlu0 %3090
    %v3092 = vsel %vm3028, %v3072, 0.0
    %3093 = vadd.xlane.f32.xlu0 %v3092
    %v3094 = vpop.xlane.xlu0 %3093
    %v3095 = vsel %vm3028, %v3074, 0.0
    %3096 = vadd.xlane.f32.xlu0 %v3095
    %v3097 = vpop.xlane.xlu0 %3096
    %v3098 = vsel %vm3028, %v3076, 0.0
    %3099 = vadd.xlane.f32.xlu0 %v3098
    %v3100 = vpop.xlane.xlu0 %3099
    %v3101 = vrcp.pop %v3079
    %v3102 = vrcp.pop %v3082
    %v3103 = vrcp.pop %v3085
    %v3104 = vrcp.pop %v3088
    %v3105 = vrcp.pop %v3091
    %v3106 = vrcp.pop %v3094
    %v3107 = vrcp.pop %v3097
    %v3108 = vrcp.pop %v3100
    %v3109 = vmul.f32 %v3062, %v3101
    %v3110 = vmul.f32 %v3064, %v3102
    %v3111 = vmul.f32 %v3066, %v3103
    %v3112 = vmul.f32 %v3068, %v3104
    %v3113 = vmul.f32 %v3070, %v3105
    %v3114 = vmul.f32 %v3072, %v3106
    %v3115 = vmul.f32 %v3074, %v3107
    %v3116 = vmul.f32 %v3076, %v3108
    %v3117 = vpack.c.bf16 %v3110, %v3109
    %v3118 = vpack.c.bf16 %v3112, %v3111
    %v3119 = vpack.c.bf16 %v3114, %v3113
    %v3120 = vpack.c.bf16 %v3116, %v3115
    %v3121 = vpack.c.bf16 %v2183, %v2179
    %v3122 = vpack.c.bf16 %v2185, %v2181
    %v3123 = vpack.c.bf16 %v2402, %v2398
    %v3124 = vpack.c.bf16 %v2404, %v2400
    %v3125 = vpack.c.bf16 %v2621, %v2617
    %v3126 = vpack.c.bf16 %v2623, %v2619
    %v3127 = vpack.c.bf16 %v2193, %v2189
    %v3128 = vpack.c.bf16 %v2195, %v2191
    %v3129 = vpack.c.bf16 %v2412, %v2408
    %v3130 = vpack.c.bf16 %v2414, %v2410
    %v3131 = vpack.c.bf16 %v2631, %v2627
    %v3132 = vpack.c.bf16 %v2633, %v2629
    %v3133 = vpack.c.bf16 %v2203, %v2199
    %v3134 = vpack.c.bf16 %v2205, %v2201
    %v3135 = vpack.c.bf16 %v2422, %v2418
    %v3136 = vpack.c.bf16 %v2424, %v2420
    %v3137 = vpack.c.bf16 %v2641, %v2637
    %v3138 = vpack.c.bf16 %v2643, %v2639
    %v3139 = vpack.c.bf16 %v2213, %v2209
    %v3140 = vpack.c.bf16 %v2215, %v2211
    %v3141 = vpack.c.bf16 %v2432, %v2428
    %v3142 = vpack.c.bf16 %v2434, %v2430
    %v3143 = vpack.c.bf16 %v2651, %v2647
    %v3144 = vpack.c.bf16 %v2653, %v2649
    %v3146 = vlaneseq
    %v3147 = vshrl.u32 %v3146, 7
    %v3148 = vsub.s32 0, %v3147
    %v3149 = vrot.slane %v2657, %v3148
    %v3150 = vlaneseq
    %v3151 = vshrl.u32 %v3150, 7
    %v3152 = vsub.s32 1, %v3151
    %v3153 = vrot.slane %v2657, %v3152
    %v3154 = vlaneseq
    %v3155 = vshrl.u32 %v3154, 7
    %v3156 = vsub.s32 2, %v3155
    %v3157 = vrot.slane %v2657, %v3156
    %v3158 = vlaneseq
    %v3159 = vshrl.u32 %v3158, 7
    %v3160 = vsub.s32 3, %v3159
    %v3161 = vrot.slane %v2657, %v3160
    %v3162 = vlaneseq
    %v3163 = vshrl.u32 %v3162, 7
    %v3164 = vsub.s32 4, %v3163
    %v3165 = vrot.slane %v2657, %v3164
    %v3166 = vlaneseq
    %v3167 = vshrl.u32 %v3166, 7
    %v3168 = vsub.s32 5, %v3167
    %v3169 = vrot.slane %v2657, %v3168
    %v3177 = vsel %vm3028, %v3117, 0
    %v3180 = vsel %vm3028, %v3118, 0
    %v3183 = vsel %vm3028, %v3119, 0
    %v3186 = vsel %vm3028, %v3120, 0
    %3188 = vmatprep.subr.bf16.mxu0 %v3122
    %3189 = vmatpush1.bf16.msra.mxu0 %v3121
    %3190 = vmatprep.subr.bf16.mxu0 %v3128
    %3191 = vmatpush1.bf16.msra.mxu0 %v3127
    %3192 = vmatprep.subr.bf16.mxu0 %v3134
    %3193 = vmatpush1.bf16.msra.mxu0 %v3133
    %3194 = vmatprep.subr.bf16.mxu0 %v3140
    %3195 = vmatpush1.bf16.msra.mxu0 %v3139
    %3196 = vmatprep.subr.bf16.mxu0 0
    %3197 = vmatpush1.bf16.msra.mxu0 0
    %3198 = vmatprep.subr.bf16.mxu0 0
    %3199 = vmatpush1.bf16.msra.mxu0 0
    %3200 = vmatprep.subr.bf16.mxu0 0
    %3201 = vmatpush1.bf16.msra.mxu0 0
    %3202 = vmatprep.subr.bf16.mxu0 0
    %3203 = vmatpush1.bf16.msra.mxu0 0
    %3204 = vmatprep.subr.bf16.mxu0 0
    %3205 = vmatpush1.bf16.msra.mxu0 0
    %3206 = vmatprep.subr.bf16.mxu0 0
    %3207 = vmatpush1.bf16.msra.mxu0 0
    %3208 = vmatprep.subr.bf16.mxu0 0
    %3209 = vmatpush1.bf16.msra.mxu0 0
    %3210 = vmatprep.subr.bf16.mxu0 0
    %3211 = vmatpush1.bf16.msra.mxu0 0
    %3212 = vmatprep.subr.bf16.mxu0 0
    %3213 = vmatpush1.bf16.msra.mxu0 0
    %3214 = vmatprep.subr.bf16.mxu0 0
    %3215 = vmatpush1.bf16.msra.mxu0 0
    %3216 = vmatprep.subr.bf16.mxu0 0
    %3217 = vmatpush1.bf16.msra.mxu0 0
    %3218 = vmatprep.subr.bf16.mxu0 0
    %3219 = vmatpush1.bf16.msra.mxu0 0
    %3220 = vmatprep.mubr.bf16.mxu0 0
    %3221 = vmatmul.mubr.bf16.gmra.mrb[0].mxu0 %v3177
    %v3222 = vpop.f32.mrb[0].mxu0
    %v3223 = vadd.f32 %v3149, %v3222
    %v3224 = vpop.f32.mrb[0].mxu0
    %v3225 = vadd.f32 %v3153, %v3224
    %v3226 = vpop.f32.mrb[0].mxu0
    %v3227 = vadd.f32 %v3149, %v3226
    %v3228 = vpop.f32.mrb[0].mxu0
    %v3229 = vadd.f32 %v3153, %v3228
    %3230 = vmatprep.mubr.bf16.mxu0 0
    %3231 = vmatmul.mubr.bf16.gmra.mrb[0].mxu0 %v3180
    %v3232 = vpop.f32.mrb[0].mxu0
    %v3233 = vadd.f32 %v3149, %v3232
    %v3234 = vpop.f32.mrb[0].mxu0
    %v3235 = vadd.f32 %v3153, %v3234
    %v3236 = vpop.f32.mrb[0].mxu0
    %v3237 = vadd.f32 %v3149, %v3236
    %v3238 = vpop.f32.mrb[0].mxu0
    %v3239 = vadd.f32 %v3153, %v3238
    %3240 = vmatprep.mubr.bf16.mxu0 0
    %3241 = vmatmul.mubr.bf16.gmra.mrb[0].mxu0 %v3183
    %v3242 = vpop.f32.mrb[0].mxu0
    %v3243 = vadd.f32 %v3149, %v3242
    %v3244 = vpop.f32.mrb[0].mxu0
    %v3245 = vadd.f32 %v3153, %v3244
    %v3246 = vpop.f32.mrb[0].mxu0
    %v3247 = vadd.f32 %v3149, %v3246
    %v3248 = vpop.f32.mrb[0].mxu0
    %v3249 = vadd.f32 %v3153, %v3248
    %3250 = vmatprep.mubr.bf16.mxu0 0
    %3251 = vmatmul.mubr.bf16.gmra.mrb[0].mxu0 %v3186
    %v3252 = vpop.f32.mrb[0].mxu0
    %v3253 = vadd.f32 %v3149, %v3252
    %v3254 = vpop.f32.mrb[0].mxu0
    %v3255 = vadd.f32 %v3153, %v3254
    %v3256 = vpop.f32.mrb[0].mxu0
    %v3257 = vadd.f32 %v3149, %v3256
    %v3258 = vpop.f32.mrb[0].mxu0
    %v3259 = vadd.f32 %v3153, %v3258
    %3260 = vdwg.mxu0
    %3261 = vmatprep.subr.bf16.mxu0 %v3124
    %3262 = vmatpush1.bf16.msra.mxu0 %v3123
    %3263 = vmatprep.subr.bf16.mxu0 %v3130
    %3264 = vmatpush1.bf16.msra.mxu0 %v3129
    %3265 = vmatprep.subr.bf16.mxu0 %v3136
    %3266 = vmatpush1.bf16.msra.mxu0 %v3135
    %3267 = vmatprep.subr.bf16.mxu0 %v3142
    %3268 = vmatpush1.bf16.msra.mxu0 %v3141
    %3269 = vmatprep.subr.bf16.mxu0 0
    %3270 = vmatpush1.bf16.msra.mxu0 0
    %3271 = vmatprep.subr.bf16.mxu0 0
    %3272 = vmatpush1.bf16.msra.mxu0 0
    %3273 = vmatprep.subr.bf16.mxu0 0
    %3274 = vmatpush1.bf16.msra.mxu0 0
    %3275 = vmatprep.subr.bf16.mxu0 0
    %3276 = vmatpush1.bf16.msra.mxu0 0
    %3277 = vmatprep.subr.bf16.mxu0 0
    %3278 = vmatpush1.bf16.msra.mxu0 0
    %3279 = vmatprep.subr.bf16.mxu0 0
    %3280 = vmatpush1.bf16.msra.mxu0 0
    %3281 = vmatprep.subr.bf16.mxu0 0
    %3282 = vmatpush1.bf16.msra.mxu0 0
    %3283 = vmatprep.subr.bf16.mxu0 0
    %3284 = vmatpush1.bf16.msra.mxu0 0
    %3285 = vmatprep.subr.bf16.mxu0 0
    %3286 = vmatpush1.bf16.msra.mxu0 0
    %3287 = vmatprep.subr.bf16.mxu0 0
    %3288 = vmatpush1.bf16.msra.mxu0 0
    %3289 = vmatprep.subr.bf16.mxu0 0
    %3290 = vmatpush1.bf16.msra.mxu0 0
    %3291 = vmatprep.subr.bf16.mxu0 0
    %3292 = vmatpush1.bf16.msra.mxu0 0
    %3293 = vmatprep.mubr.bf16.mxu0 0
    %3294 = vmatmul.mubr.bf16.gmra.mrb[0].mxu0 %v3177
    %v3295 = vpop.f32.mrb[0].mxu0
    %v3296 = vadd.f32 %v3157, %v3295
    %v3297 = vpop.f32.mrb[0].mxu0
    %v3298 = vadd.f32 %v3161, %v3297
    %v3299 = vpop.f32.mrb[0].mxu0
    %v3300 = vadd.f32 %v3157, %v3299
    %v3301 = vpop.f32.mrb[0].mxu0
    %v3302 = vadd.f32 %v3161, %v3301
    %3303 = vmatprep.mubr.bf16.mxu0 0
    %3304 = vmatmul.mubr.bf16.gmra.mrb[0].mxu0 %v3180
    %v3305 = vpop.f32.mrb[0].mxu0
    %v3306 = vadd.f32 %v3157, %v3305
    %v3307 = vpop.f32.mrb[0].mxu0
    %v3308 = vadd.f32 %v3161, %v3307
    %v3309 = vpop.f32.mrb[0].mxu0
    %v3310 = vadd.f32 %v3157, %v3309
    %v3311 = vpop.f32.mrb[0].mxu0
    %v3312 = vadd.f32 %v3161, %v3311
    %3313 = vmatprep.mubr.bf16.mxu0 0
    %3314 = vmatmul.mubr.bf16.gmra.mrb[0].mxu0 %v3183
    %v3315 = vpop.f32.mrb[0].mxu0
    %v3316 = vadd.f32 %v3157, %v3315
    %v3317 = vpop.f32.mrb[0].mxu0
    %v3318 = vadd.f32 %v3161, %v3317
    %v3319 = vpop.f32.mrb[0].mxu0
    %v3320 = vadd.f32 %v3157, %v3319
    %v3321 = vpop.f32.mrb[0].mxu0
    %v3322 = vadd.f32 %v3161, %v3321
    %3323 = vmatprep.mubr.bf16.mxu0 0
    %3324 = vmatmul.mubr.bf16.gmra.mrb[0].mxu0 %v3186
    %v3325 = vpop.f32.mrb[0].mxu0
    %v3326 = vadd.f32 %v3157, %v3325
    %v3327 = vpop.f32.mrb[0].mxu0
    %v3328 = vadd.f32 %v3161, %v3327
    %v3329 = vpop.f32.mrb[0].mxu0
    %v3330 = vadd.f32 %v3157, %v3329
    %v3331 = vpop.f32.mrb[0].mxu0
    %v3332 = vadd.f32 %v3161, %v3331
    %3333 = vdwg.mxu0
    %3334 = vmatprep.subr.bf16.mxu0 %v3126
    %3335 = vmatpush1.bf16.msra.mxu0 %v3125
    %3336 = vmatprep.subr.bf16.mxu0 %v3132
    %3337 = vmatpush1.bf16.msra.mxu0 %v3131
    %3338 = vmatprep.subr.bf16.mxu0 %v3138
    %3339 = vmatpush1.bf16.msra.mxu0 %v3137
    %3340 = vmatprep.subr.bf16.mxu0 %v3144
    %3341 = vmatpush1.bf16.msra.mxu0 %v3143
    %3342 = vmatprep.subr.bf16.mxu0 0
    %3343 = vmatpush1.bf16.msra.mxu0 0
    %3344 = vmatprep.subr.bf16.mxu0 0
    %3345 = vmatpush1.bf16.msra.mxu0 0
    %3346 = vmatprep.subr.bf16.mxu0 0
    %3347 = vmatpush1.bf16.msra.mxu0 0
    %3348 = vmatprep.subr.bf16.mxu0 0
    %3349 = vmatpush1.bf16.msra.mxu0 0
    %3350 = vmatprep.subr.bf16.mxu0 0
    %3351 = vmatpush1.bf16.msra.mxu0 0
    %3352 = vmatprep.subr.bf16.mxu0 0
    %3353 = vmatpush1.bf16.msra.mxu0 0
    %3354 = vmatprep.subr.bf16.mxu0 0
    %3355 = vmatpush1.bf16.msra.mxu0 0
    %3356 = vmatprep.subr.bf16.mxu0 0
    %3357 = vmatpush1.bf16.msra.mxu0 0
    %3358 = vmatprep.subr.bf16.mxu0 0
    %3359 = vmatpush1.bf16.msra.mxu0 0
    %3360 = vmatprep.subr.bf16.mxu0 0
    %3361 = vmatpush1.bf16.msra.mxu0 0
    %3362 = vmatprep.subr.bf16.mxu0 0
    %3363 = vmatpush1.bf16.msra.mxu0 0
    %3364 = vmatprep.subr.bf16.mxu0 0
    %3365 = vmatpush1.bf16.msra.mxu0 0
    %3366 = vmatprep.mubr.bf16.mxu0 0
    %3367 = vmatmul.mubr.bf16.gmra.mrb[0].mxu0 %v3177
    %v3368 = vpop.f32.mrb[0].mxu0
    %v3369 = vadd.f32 %v3165, %v3368
    %v3370 = vpop.f32.mrb[0].mxu0
    %v3371 = vadd.f32 %v3169, %v3370
    %v3372 = vpop.f32.mrb[0].mxu0
    %v3373 = vadd.f32 %v3165, %v3372
    %v3374 = vpop.f32.mrb[0].mxu0
    %v3375 = vadd.f32 %v3169, %v3374
    %3376 = vmatprep.mubr.bf16.mxu0 0
    %3377 = vmatmul.mubr.bf16.gmra.mrb[0].mxu0 %v3180
    %v3378 = vpop.f32.mrb[0].mxu0
    %v3379 = vadd.f32 %v3165, %v3378
    %v3380 = vpop.f32.mrb[0].mxu0
    %v3381 = vadd.f32 %v3169, %v3380
    %v3382 = vpop.f32.mrb[0].mxu0
    %v3383 = vadd.f32 %v3165, %v3382
    %v3384 = vpop.f32.mrb[0].mxu0
    %v3385 = vadd.f32 %v3169, %v3384
    %3386 = vmatprep.mubr.bf16.mxu0 0
    %3387 = vmatmul.mubr.bf16.gmra.mrb[0].mxu0 %v3183
    %v3388 = vpop.f32.mrb[0].mxu0
    %v3389 = vadd.f32 %v3165, %v3388
    %v3390 = vpop.f32.mrb[0].mxu0
    %v3391 = vadd.f32 %v3169, %v3390
    %v3392 = vpop.f32.mrb[0].mxu0
    %v3393 = vadd.f32 %v3165, %v3392
    %v3394 = vpop.f32.mrb[0].mxu0
    %v3395 = vadd.f32 %v3169, %v3394
    %3396 = vmatprep.mubr.bf16.mxu0 0
    %3397 = vmatmul.mubr.bf16.gmra.mrb[0].mxu0 %v3186
    %v3398 = vpop.f32.mrb[0].mxu0
    %v3399 = vadd.f32 %v3165, %v3398
    %v3400 = vpop.f32.mrb[0].mxu0
    %v3401 = vadd.f32 %v3169, %v3400
    %v3402 = vpop.f32.mrb[0].mxu0
    %v3403 = vadd.f32 %v3165, %v3402
    %v3404 = vpop.f32.mrb[0].mxu0
    %v3405 = vadd.f32 %v3169, %v3404
    %3406 = vdwg.mxu0
    %v3407 = vmax.f32 %v3223, 0.0
    %v3408 = vmax.f32 %v3225, 0.0
    %v3409 = vmax.f32 %v3296, 0.0
    %v3410 = vmax.f32 %v3298, 0.0
    %v3411 = vmax.f32 %v3369, 0.0
    %v3412 = vmax.f32 %v3371, 0.0
    %v3413 = vmax.f32 %v3227, 0.0
    %v3414 = vmax.f32 %v3229, 0.0
    %v3415 = vmax.f32 %v3300, 0.0
    %v3416 = vmax.f32 %v3302, 0.0
    %v3417 = vmax.f32 %v3373, 0.0
    %v3418 = vmax.f32 %v3375, 0.0
    %v3419 = vmax.f32 %v3233, 0.0
    %v3420 = vmax.f32 %v3235, 0.0
    %v3421 = vmax.f32 %v3306, 0.0
    %v3422 = vmax.f32 %v3308, 0.0
    %v3423 = vmax.f32 %v3379, 0.0
    %v3424 = vmax.f32 %v3381, 0.0
    %v3425 = vmax.f32 %v3237, 0.0
    %v3426 = vmax.f32 %v3239, 0.0
    %v3427 = vmax.f32 %v3310, 0.0
    %v3428 = vmax.f32 %v3312, 0.0
    %v3429 = vmax.f32 %v3383, 0.0
    %v3430 = vmax.f32 %v3385, 0.0
    %v3431 = vmax.f32 %v3243, 0.0
    %v3432 = vmax.f32 %v3245, 0.0
    %v3433 = vmax.f32 %v3316, 0.0
    %v3434 = vmax.f32 %v3318, 0.0
    %v3435 = vmax.f32 %v3389, 0.0
    %v3436 = vmax.f32 %v3391, 0.0
    %v3437 = vmax.f32 %v3247, 0.0
    %v3438 = vmax.f32 %v3249, 0.0
    %v3439 = vmax.f32 %v3320, 0.0
    %v3440 = vmax.f32 %v3322, 0.0
    %v3441 = vmax.f32 %v3393, 0.0
    %v3442 = vmax.f32 %v3395, 0.0
    %v3443 = vmax.f32 %v3253, 0.0
    %v3444 = vmax.f32 %v3255, 0.0
    %v3445 = vmax.f32 %v3326, 0.0
    %v3446 = vmax.f32 %v3328, 0.0
    %v3447 = vmax.f32 %v3399, 0.0
    %v3448 = vmax.f32 %v3401, 0.0
    %v3449 = vmax.f32 %v3257, 0.0
    %v3450 = vmax.f32 %v3259, 0.0
    %v3451 = vmax.f32 %v3330, 0.0
    %v3452 = vmax.f32 %v3332, 0.0
    %v3453 = vmax.f32 %v3403, 0.0
    %v3454 = vmax.f32 %v3405, 0.0
    %s3455 = smul.u32 4, 96
    %s3456 = smul.u32 %s3455, 6
    %s3457 = sshll.u32 %s3456, 4
    %3458 = dma.done [#allocation3], %s3457
    %v3459 = vpack.c.bf16 %v3413, %v3407
    %v3460 = vpack.c.bf16 %v3414, %v3408
    %v3461 = vpack.c.bf16 %v3415, %v3409
    %v3462 = vpack.c.bf16 %v3416, %v3410
    %v3463 = vpack.c.bf16 %v3417, %v3411
    %v3464 = vpack.c.bf16 %v3418, %v3412
    %v3465 = vpack.c.bf16 %v3425, %v3419
    %v3466 = vpack.c.bf16 %v3426, %v3420
    %v3467 = vpack.c.bf16 %v3427, %v3421
    %v3468 = vpack.c.bf16 %v3428, %v3422
    %v3469 = vpack.c.bf16 %v3429, %v3423
    %v3470 = vpack.c.bf16 %v3430, %v3424
    %v3471 = vpack.c.bf16 %v3437, %v3431
    %v3472 = vpack.c.bf16 %v3438, %v3432
    %v3473 = vpack.c.bf16 %v3439, %v3433
    %v3474 = vpack.c.bf16 %v3440, %v3434
    %v3475 = vpack.c.bf16 %v3441, %v3435
    %v3476 = vpack.c.bf16 %v3442, %v3436
    %v3477 = vpack.c.bf16 %v3449, %v3443
    %v3478 = vpack.c.bf16 %v3450, %v3444
    %v3479 = vpack.c.bf16 %v3451, %v3445
    %v3480 = vpack.c.bf16 %v3452, %v3446
    %v3481 = vpack.c.bf16 %v3453, %v3447
    %v3482 = vpack.c.bf16 %v3454, %v3448
    %v3483 = vld [vmem:[#allocation2] sm:$0xff]
    %v3484 = vld [vmem:[#allocation2 + $0x8] sm:$0xff]
    %v3485 = vld [vmem:[#allocation2 + $0x10] sm:$0xff]
    %v3486 = vld [vmem:[#allocation2 + $0x18] sm:$0xff]
    %v3487 = vld [vmem:[#allocation2 + $0x20] sm:$0xff]
    %v3488 = vld [vmem:[#allocation2 + $0x28] sm:$0xff]
    %v3489 = vld [vmem:[#allocation2 + $0x30] sm:$0xff]
    %v3490 = vld [vmem:[#allocation2 + $0x38] sm:$0xff]
    %v3491 = vld [vmem:[#allocation2 + $0x40] sm:$0xff]
    %v3492 = vld [vmem:[#allocation2 + $0x48] sm:$0xff]
    %v3493 = vld [vmem:[#allocation2 + $0x50] sm:$0xff]
    %v3494 = vld [vmem:[#allocation2 + $0x58] sm:$0xff]
    %v3495 = vld [vmem:[#allocation2 + $0x60] sm:$0xff]
    %v3496 = vld [vmem:[#allocation2 + $0x68] sm:$0xff]
    %v3497 = vld [vmem:[#allocation2 + $0x70] sm:$0xff]
    %v3498 = vld [vmem:[#allocation2 + $0x78] sm:$0xff]
    %v3499 = vld [vmem:[#allocation2 + $0x80] sm:$0xff]
    %v3500 = vld [vmem:[#allocation2 + $0x88] sm:$0xff]
    %v3501 = vld [vmem:[#allocation2 + $0x90] sm:$0xff]
    %v3502 = vld [vmem:[#allocation2 + $0x98] sm:$0xff]
    %v3503 = vld [vmem:[#allocation2 + $0xa0] sm:$0xff]
    %v3504 = vld [vmem:[#allocation2 + $0xa8] sm:$0xff]
    %v3505 = vld [vmem:[#allocation2 + $0xb0] sm:$0xff]
    %v3506 = vld [vmem:[#allocation2 + $0xb8] sm:$0xff]
    %v3507 = vld [vmem:[#allocation2 + $0xc0] sm:$0xff]
    %v3508 = vld [vmem:[#allocation2 + $0xc8] sm:$0xff]
    %v3509 = vld [vmem:[#allocation2 + $0xd0] sm:$0xff]
    %v3510 = vld [vmem:[#allocation2 + $0xd8] sm:$0xff]
    %v3511 = vld [vmem:[#allocation2 + $0xe0] sm:$0xff]
    %v3512 = vld [vmem:[#allocation2 + $0xe8] sm:$0xff]
    %v3513 = vld [vmem:[#allocation2 + $0xf0] sm:$0xff]
    %v3514 = vld [vmem:[#allocation2 + $0xf8] sm:$0xff]
    %v3515 = vld [vmem:[#allocation2 + $0x100] sm:$0xff]
    %v3516 = vld [vmem:[#allocation2 + $0x108] sm:$0xff]
    %v3517 = vld [vmem:[#allocation2 + $0x110] sm:$0xff]
    %v3518 = vld [vmem:[#allocation2 + $0x118] sm:$0xff]
    %v3519 = vld [vmem:[#allocation2 + $0x120] sm:$0xff]
    %v3520 = vld [vmem:[#allocation2 + $0x128] sm:$0xff]
    %v3521 = vld [vmem:[#allocation2 + $0x130] sm:$0xff]
    %v3522 = vld [vmem:[#allocation2 + $0x138] sm:$0xff]
    %v3523 = vld [vmem:[#allocation2 + $0x140] sm:$0xff]
    %v3524 = vld [vmem:[#allocation2 + $0x148] sm:$0xff]
    %v3525 = vld [vmem:[#allocation2 + $0x150] sm:$0xff]
    %v3526 = vld [vmem:[#allocation2 + $0x158] sm:$0xff]
    %v3527 = vld [vmem:[#allocation2 + $0x160] sm:$0xff]
    %v3528 = vld [vmem:[#allocation2 + $0x168] sm:$0xff]
    %v3529 = vld [vmem:[#allocation2 + $0x170] sm:$0xff]
    %v3530 = vld [vmem:[#allocation2 + $0x178] sm:$0xff]
    %v3531 = vld [vmem:[#allocation2 + $0x180] sm:$0xff]
    %v3532 = vld [vmem:[#allocation2 + $0x188] sm:$0xff]
    %v3533 = vld [vmem:[#allocation2 + $0x190] sm:$0xff]
    %v3534 = vld [vmem:[#allocation2 + $0x198] sm:$0xff]
    %v3535 = vld [vmem:[#allocation2 + $0x1a0] sm:$0xff]
    %v3536 = vld [vmem:[#allocation2 + $0x1a8] sm:$0xff]
    %v3537 = vld [vmem:[#allocation2 + $0x1b0] sm:$0xff]
    %v3538 = vld [vmem:[#allocation2 + $0x1b8] sm:$0xff]
    %v3539 = vld [vmem:[#allocation2 + $0x1c0] sm:$0xff]
    %v3540 = vld [vmem:[#allocation2 + $0x1c8] sm:$0xff]
    %v3541 = vld [vmem:[#allocation2 + $0x1d0] sm:$0xff]
    %v3542 = vld [vmem:[#allocation2 + $0x1d8] sm:$0xff]
    %v3543 = vld [vmem:[#allocation2 + $0x1e0] sm:$0xff]
    %v3544 = vld [vmem:[#allocation2 + $0x1e8] sm:$0xff]
    %v3545 = vld [vmem:[#allocation2 + $0x1f0] sm:$0xff]
    %v3546 = vld [vmem:[#allocation2 + $0x1f8] sm:$0xff]
    %v3547 = vld [vmem:[#allocation2 + $0x200] sm:$0xff]
    %v3548 = vld [vmem:[#allocation2 + $0x208] sm:$0xff]
    %v3549 = vld [vmem:[#allocation2 + $0x210] sm:$0xff]
    %v3550 = vld [vmem:[#allocation2 + $0x218] sm:$0xff]
    %v3551 = vld [vmem:[#allocation2 + $0x220] sm:$0xff]
    %v3552 = vld [vmem:[#allocation2 + $0x228] sm:$0xff]
    %v3553 = vld [vmem:[#allocation2 + $0x230] sm:$0xff]
    %v3554 = vld [vmem:[#allocation2 + $0x238] sm:$0xff]
    %v3555 = vld [vmem:[#allocation2 + $0x240] sm:$0xff]
    %v3556 = vld [vmem:[#allocation2 + $0x248] sm:$0xff]
    %v3557 = vld [vmem:[#allocation2 + $0x250] sm:$0xff]
    %v3558 = vld [vmem:[#allocation2 + $0x258] sm:$0xff]
    %v3559 = vld [vmem:[#allocation2 + $0x260] sm:$0xff]
    %v3560 = vld [vmem:[#allocation2 + $0x268] sm:$0xff]
    %v3561 = vld [vmem:[#allocation2 + $0x270] sm:$0xff]
    %v3562 = vld [vmem:[#allocation2 + $0x278] sm:$0xff]
    %v3563 = vld [vmem:[#allocation2 + $0x280] sm:$0xff]
    %v3564 = vld [vmem:[#allocation2 + $0x288] sm:$0xff]
    %v3565 = vld [vmem:[#allocation2 + $0x290] sm:$0xff]
    %v3566 = vld [vmem:[#allocation2 + $0x298] sm:$0xff]
    %v3567 = vld [vmem:[#allocation2 + $0x2a0] sm:$0xff]
    %v3568 = vld [vmem:[#allocation2 + $0x2a8] sm:$0xff]
    %v3569 = vld [vmem:[#allocation2 + $0x2b0] sm:$0xff]
    %v3570 = vld [vmem:[#allocation2 + $0x2b8] sm:$0xff]
    %v3571 = vld [vmem:[#allocation2 + $0x2c0] sm:$0xff]
    %v3572 = vld [vmem:[#allocation2 + $0x2c8] sm:$0xff]
    %v3573 = vld [vmem:[#allocation2 + $0x2d0] sm:$0xff]
    %v3574 = vld [vmem:[#allocation2 + $0x2d8] sm:$0xff]
    %v3575 = vld [vmem:[#allocation2 + $0x2e0] sm:$0xff]
    %v3576 = vld [vmem:[#allocation2 + $0x2e8] sm:$0xff]
    %v3577 = vld [vmem:[#allocation2 + $0x2f0] sm:$0xff]
    %v3578 = vld [vmem:[#allocation2 + $0x2f8] sm:$0xff]
    %v3579 = vld [vmem:[#allocation2 + $0x300] sm:$0xff]
    %v3580 = vld [vmem:[#allocation2 + $0x308] sm:$0xff]
    %v3581 = vld [vmem:[#allocation2 + $0x310] sm:$0xff]
    %v3582 = vld [vmem:[#allocation2 + $0x318] sm:$0xff]
    %v3583 = vld [vmem:[#allocation2 + $0x320] sm:$0xff]
    %v3584 = vld [vmem:[#allocation2 + $0x328] sm:$0xff]
    %v3585 = vld [vmem:[#allocation2 + $0x330] sm:$0xff]
    %v3586 = vld [vmem:[#allocation2 + $0x338] sm:$0xff]
    %v3587 = vld [vmem:[#allocation2 + $0x340] sm:$0xff]
    %v3588 = vld [vmem:[#allocation2 + $0x348] sm:$0xff]
    %v3589 = vld [vmem:[#allocation2 + $0x350] sm:$0xff]
    %v3590 = vld [vmem:[#allocation2 + $0x358] sm:$0xff]
    %v3591 = vld [vmem:[#allocation2 + $0x360] sm:$0xff]
    %v3592 = vld [vmem:[#allocation2 + $0x368] sm:$0xff]
    %v3593 = vld [vmem:[#allocation2 + $0x370] sm:$0xff]
    %v3594 = vld [vmem:[#allocation2 + $0x378] sm:$0xff]
    %v3595 = vld [vmem:[#allocation2 + $0x380] sm:$0xff]
    %v3596 = vld [vmem:[#allocation2 + $0x388] sm:$0xff]
    %v3597 = vld [vmem:[#allocation2 + $0x390] sm:$0xff]
    %v3598 = vld [vmem:[#allocation2 + $0x398] sm:$0xff]
    %v3599 = vld [vmem:[#allocation2 + $0x3a0] sm:$0xff]
    %v3600 = vld [vmem:[#allocation2 + $0x3a8] sm:$0xff]
    %v3601 = vld [vmem:[#allocation2 + $0x3b0] sm:$0xff]
    %v3602 = vld [vmem:[#allocation2 + $0x3b8] sm:$0xff]
    %v3603 = vld [vmem:[#allocation2 + $0x3c0] sm:$0xff]
    %v3604 = vld [vmem:[#allocation2 + $0x3c8] sm:$0xff]
    %v3605 = vld [vmem:[#allocation2 + $0x3d0] sm:$0xff]
    %v3606 = vld [vmem:[#allocation2 + $0x3d8] sm:$0xff]
    %v3607 = vld [vmem:[#allocation2 + $0x3e0] sm:$0xff]
    %v3608 = vld [vmem:[#allocation2 + $0x3e8] sm:$0xff]
    %v3609 = vld [vmem:[#allocation2 + $0x3f0] sm:$0xff]
    %v3610 = vld [vmem:[#allocation2 + $0x3f8] sm:$0xff]
    %v3611 = vld [vmem:[#allocation2 + $0x400] sm:$0xff]
    %v3612 = vld [vmem:[#allocation2 + $0x408] sm:$0xff]
    %v3613 = vld [vmem:[#allocation2 + $0x410] sm:$0xff]
    %v3614 = vld [vmem:[#allocation2 + $0x418] sm:$0xff]
    %v3615 = vld [vmem:[#allocation2 + $0x420] sm:$0xff]
    %v3616 = vld [vmem:[#allocation2 + $0x428] sm:$0xff]
    %v3617 = vld [vmem:[#allocation2 + $0x430] sm:$0xff]
    %v3618 = vld [vmem:[#allocation2 + $0x438] sm:$0xff]
    %v3619 = vld [vmem:[#allocation2 + $0x440] sm:$0xff]
    %v3620 = vld [vmem:[#allocation2 + $0x448] sm:$0xff]
    %v3621 = vld [vmem:[#allocation2 + $0x450] sm:$0xff]
    %v3622 = vld [vmem:[#allocation2 + $0x458] sm:$0xff]
    %v3623 = vld [vmem:[#allocation2 + $0x460] sm:$0xff]
    %v3624 = vld [vmem:[#allocation2 + $0x468] sm:$0xff]
    %v3625 = vld [vmem:[#allocation2 + $0x470] sm:$0xff]
    %v3626 = vld [vmem:[#allocation2 + $0x478] sm:$0xff]
    %v3627 = vld [vmem:[#allocation2 + $0x480] sm:$0xff]
    %v3628 = vld [vmem:[#allocation2 + $0x488] sm:$0xff]
    %v3629 = vld [vmem:[#allocation2 + $0x490] sm:$0xff]
    %v3630 = vld [vmem:[#allocation2 + $0x498] sm:$0xff]
    %v3631 = vld [vmem:[#allocation2 + $0x4a0] sm:$0xff]
    %v3632 = vld [vmem:[#allocation2 + $0x4a8] sm:$0xff]
    %v3633 = vld [vmem:[#allocation2 + $0x4b0] sm:$0xff]
    %v3634 = vld [vmem:[#allocation2 + $0x4b8] sm:$0xff]
    %v3635 = vld [vmem:[#allocation2 + $0x4c0] sm:$0xff]
    %v3636 = vld [vmem:[#allocation2 + $0x4c8] sm:$0xff]
    %v3637 = vld [vmem:[#allocation2 + $0x4d0] sm:$0xff]
    %v3638 = vld [vmem:[#allocation2 + $0x4d8] sm:$0xff]
    %v3639 = vld [vmem:[#allocation2 + $0x4e0] sm:$0xff]
    %v3640 = vld [vmem:[#allocation2 + $0x4e8] sm:$0xff]
    %v3641 = vld [vmem:[#allocation2 + $0x4f0] sm:$0xff]
    %v3642 = vld [vmem:[#allocation2 + $0x4f8] sm:$0xff]
    %v3643 = vld [vmem:[#allocation2 + $0x500] sm:$0xff]
    %v3644 = vld [vmem:[#allocation2 + $0x508] sm:$0xff]
    %v3645 = vld [vmem:[#allocation2 + $0x510] sm:$0xff]
    %v3646 = vld [vmem:[#allocation2 + $0x518] sm:$0xff]
    %v3647 = vld [vmem:[#allocation2 + $0x520] sm:$0xff]
    %v3648 = vld [vmem:[#allocation2 + $0x528] sm:$0xff]
    %v3649 = vld [vmem:[#allocation2 + $0x530] sm:$0xff]
    %v3650 = vld [vmem:[#allocation2 + $0x538] sm:$0xff]
    %v3651 = vld [vmem:[#allocation2 + $0x540] sm:$0xff]
    %v3652 = vld [vmem:[#allocation2 + $0x548] sm:$0xff]
    %v3653 = vld [vmem:[#allocation2 + $0x550] sm:$0xff]
    %v3654 = vld [vmem:[#allocation2 + $0x558] sm:$0xff]
    %v3655 = vld [vmem:[#allocation2 + $0x560] sm:$0xff]
    %v3656 = vld [vmem:[#allocation2 + $0x568] sm:$0xff]
    %v3657 = vld [vmem:[#allocation2 + $0x570] sm:$0xff]
    %v3658 = vld [vmem:[#allocation2 + $0x578] sm:$0xff]
    %v3659 = vld [vmem:[#allocation2 + $0x580] sm:$0xff]
    %v3660 = vld [vmem:[#allocation2 + $0x588] sm:$0xff]
    %v3661 = vld [vmem:[#allocation2 + $0x590] sm:$0xff]
    %v3662 = vld [vmem:[#allocation2 + $0x598] sm:$0xff]
    %v3663 = vld [vmem:[#allocation2 + $0x5a0] sm:$0xff]
    %v3664 = vld [vmem:[#allocation2 + $0x5a8] sm:$0xff]
    %v3665 = vld [vmem:[#allocation2 + $0x5b0] sm:$0xff]
    %v3666 = vld [vmem:[#allocation2 + $0x5b8] sm:$0xff]
    %v3667 = vld [vmem:[#allocation2 + $0x5c0] sm:$0xff]
    %v3668 = vld [vmem:[#allocation2 + $0x5c8] sm:$0xff]
    %v3669 = vld [vmem:[#allocation2 + $0x5d0] sm:$0xff]
    %v3670 = vld [vmem:[#allocation2 + $0x5d8] sm:$0xff]
    %v3671 = vld [vmem:[#allocation2 + $0x5e0] sm:$0xff]
    %v3672 = vld [vmem:[#allocation2 + $0x5e8] sm:$0xff]
    %v3673 = vld [vmem:[#allocation2 + $0x5f0] sm:$0xff]
    %v3674 = vld [vmem:[#allocation2 + $0x5f8] sm:$0xff]
    %v3675 = vld [vmem:[#allocation2 + $0x600] sm:$0xff]
    %v3676 = vld [vmem:[#allocation2 + $0x608] sm:$0xff]
    %v3677 = vld [vmem:[#allocation2 + $0x610] sm:$0xff]
    %v3678 = vld [vmem:[#allocation2 + $0x618] sm:$0xff]
    %v3679 = vld [vmem:[#allocation2 + $0x620] sm:$0xff]
    %v3680 = vld [vmem:[#allocation2 + $0x628] sm:$0xff]
    %v3681 = vld [vmem:[#allocation2 + $0x630] sm:$0xff]
    %v3682 = vld [vmem:[#allocation2 + $0x638] sm:$0xff]
    %v3683 = vld [vmem:[#allocation2 + $0x640] sm:$0xff]
    %v3684 = vld [vmem:[#allocation2 + $0x648] sm:$0xff]
    %v3685 = vld [vmem:[#allocation2 + $0x650] sm:$0xff]
    %v3686 = vld [vmem:[#allocation2 + $0x658] sm:$0xff]
    %v3687 = vld [vmem:[#allocation2 + $0x660] sm:$0xff]
    %v3688 = vld [vmem:[#allocation2 + $0x668] sm:$0xff]
    %v3689 = vld [vmem:[#allocation2 + $0x670] sm:$0xff]
    %v3690 = vld [vmem:[#allocation2 + $0x678] sm:$0xff]
    %v3691 = vld [vmem:[#allocation2 + $0x680] sm:$0xff]
    %v3692 = vld [vmem:[#allocation2 + $0x688] sm:$0xff]
    %v3693 = vld [vmem:[#allocation2 + $0x690] sm:$0xff]
    %v3694 = vld [vmem:[#allocation2 + $0x698] sm:$0xff]
    %v3695 = vld [vmem:[#allocation2 + $0x6a0] sm:$0xff]
    %v3696 = vld [vmem:[#allocation2 + $0x6a8] sm:$0xff]
    %v3697 = vld [vmem:[#allocation2 + $0x6b0] sm:$0xff]
    %v3698 = vld [vmem:[#allocation2 + $0x6b8] sm:$0xff]
    %v3699 = vld [vmem:[#allocation2 + $0x6c0] sm:$0xff]
    %v3700 = vld [vmem:[#allocation2 + $0x6c8] sm:$0xff]
    %v3701 = vld [vmem:[#allocation2 + $0x6d0] sm:$0xff]
    %v3702 = vld [vmem:[#allocation2 + $0x6d8] sm:$0xff]
    %v3703 = vld [vmem:[#allocation2 + $0x6e0] sm:$0xff]
    %v3704 = vld [vmem:[#allocation2 + $0x6e8] sm:$0xff]
    %v3705 = vld [vmem:[#allocation2 + $0x6f0] sm:$0xff]
    %v3706 = vld [vmem:[#allocation2 + $0x6f8] sm:$0xff]
    %v3707 = vld [vmem:[#allocation2 + $0x700] sm:$0xff]
    %v3708 = vld [vmem:[#allocation2 + $0x708] sm:$0xff]
    %v3709 = vld [vmem:[#allocation2 + $0x710] sm:$0xff]
    %v3710 = vld [vmem:[#allocation2 + $0x718] sm:$0xff]
    %v3711 = vld [vmem:[#allocation2 + $0x720] sm:$0xff]
    %v3712 = vld [vmem:[#allocation2 + $0x728] sm:$0xff]
    %v3713 = vld [vmem:[#allocation2 + $0x730] sm:$0xff]
    %v3714 = vld [vmem:[#allocation2 + $0x738] sm:$0xff]
    %v3715 = vld [vmem:[#allocation2 + $0x740] sm:$0xff]
    %v3716 = vld [vmem:[#allocation2 + $0x748] sm:$0xff]
    %v3717 = vld [vmem:[#allocation2 + $0x750] sm:$0xff]
    %v3718 = vld [vmem:[#allocation2 + $0x758] sm:$0xff]
    %v3719 = vld [vmem:[#allocation2 + $0x760] sm:$0xff]
    %v3720 = vld [vmem:[#allocation2 + $0x768] sm:$0xff]
    %v3721 = vld [vmem:[#allocation2 + $0x770] sm:$0xff]
    %v3722 = vld [vmem:[#allocation2 + $0x778] sm:$0xff]
    %v3723 = vld [vmem:[#allocation2 + $0x780] sm:$0xff]
    %v3724 = vld [vmem:[#allocation2 + $0x788] sm:$0xff]
    %v3725 = vld [vmem:[#allocation2 + $0x790] sm:$0xff]
    %v3726 = vld [vmem:[#allocation2 + $0x798] sm:$0xff]
    %v3727 = vld [vmem:[#allocation2 + $0x7a0] sm:$0xff]
    %v3728 = vld [vmem:[#allocation2 + $0x7a8] sm:$0xff]
    %v3729 = vld [vmem:[#allocation2 + $0x7b0] sm:$0xff]
    %v3730 = vld [vmem:[#allocation2 + $0x7b8] sm:$0xff]
    %v3731 = vld [vmem:[#allocation2 + $0x7c0] sm:$0xff]
    %v3732 = vld [vmem:[#allocation2 + $0x7c8] sm:$0xff]
    %v3733 = vld [vmem:[#allocation2 + $0x7d0] sm:$0xff]
    %v3734 = vld [vmem:[#allocation2 + $0x7d8] sm:$0xff]
    %v3735 = vld [vmem:[#allocation2 + $0x7e0] sm:$0xff]
    %v3736 = vld [vmem:[#allocation2 + $0x7e8] sm:$0xff]
    %v3737 = vld [vmem:[#allocation2 + $0x7f0] sm:$0xff]
    %v3738 = vld [vmem:[#allocation2 + $0x7f8] sm:$0xff]
    %v3739 = vld [vmem:[#allocation2 + $0x800] sm:$0xff]
    %v3740 = vld [vmem:[#allocation2 + $0x808] sm:$0xff]
    %v3741 = vld [vmem:[#allocation2 + $0x810] sm:$0xff]
    %v3742 = vld [vmem:[#allocation2 + $0x818] sm:$0xff]
    %v3743 = vld [vmem:[#allocation2 + $0x820] sm:$0xff]
    %v3744 = vld [vmem:[#allocation2 + $0x828] sm:$0xff]
    %v3745 = vld [vmem:[#allocation2 + $0x830] sm:$0xff]
    %v3746 = vld [vmem:[#allocation2 + $0x838] sm:$0xff]
    %v3747 = vld [vmem:[#allocation2 + $0x840] sm:$0xff]
    %v3748 = vld [vmem:[#allocation2 + $0x848] sm:$0xff]
    %v3749 = vld [vmem:[#allocation2 + $0x850] sm:$0xff]
    %v3750 = vld [vmem:[#allocation2 + $0x858] sm:$0xff]
    %v3751 = vld [vmem:[#allocation2 + $0x860] sm:$0xff]
    %v3752 = vld [vmem:[#allocation2 + $0x868] sm:$0xff]
    %v3753 = vld [vmem:[#allocation2 + $0x870] sm:$0xff]
    %v3754 = vld [vmem:[#allocation2 + $0x878] sm:$0xff]
    %v3755 = vld [vmem:[#allocation2 + $0x880] sm:$0xff]
    %v3756 = vld [vmem:[#allocation2 + $0x888] sm:$0xff]
    %v3757 = vld [vmem:[#allocation2 + $0x890] sm:$0xff]
    %v3758 = vld [vmem:[#allocation2 + $0x898] sm:$0xff]
    %v3759 = vld [vmem:[#allocation2 + $0x8a0] sm:$0xff]
    %v3760 = vld [vmem:[#allocation2 + $0x8a8] sm:$0xff]
    %v3761 = vld [vmem:[#allocation2 + $0x8b0] sm:$0xff]
    %v3762 = vld [vmem:[#allocation2 + $0x8b8] sm:$0xff]
    %v3763 = vld [vmem:[#allocation2 + $0x8c0] sm:$0xff]
    %v3764 = vld [vmem:[#allocation2 + $0x8c8] sm:$0xff]
    %v3765 = vld [vmem:[#allocation2 + $0x8d0] sm:$0xff]
    %v3766 = vld [vmem:[#allocation2 + $0x8d8] sm:$0xff]
    %v3767 = vld [vmem:[#allocation2 + $0x8e0] sm:$0xff]
    %v3768 = vld [vmem:[#allocation2 + $0x8e8] sm:$0xff]
    %v3769 = vld [vmem:[#allocation2 + $0x8f0] sm:$0xff]
    %v3770 = vld [vmem:[#allocation2 + $0x8f8] sm:$0xff]
    %3771 = vmatprep.subr.bf16.mxu0 %v3484
    %3772 = vmatpush1.bf16.msra.mxu0 %v3483
    %3773 = vmatprep.subr.bf16.mxu0 %v3490
    %3774 = vmatpush1.bf16.msra.mxu0 %v3489
    %3775 = vmatprep.subr.bf16.mxu0 %v3496
    %3776 = vmatpush1.bf16.msra.mxu0 %v3495
    %3777 = vmatprep.subr.bf16.mxu0 %v3502
    %3778 = vmatpush1.bf16.msra.mxu0 %v3501
    %3779 = vmatprep.subr.bf16.mxu0 %v3508
    %3780 = vmatpush1.bf16.msra.mxu0 %v3507
    %3781 = vmatprep.subr.bf16.mxu0 %v3514
    %3782 = vmatpush1.bf16.msra.mxu0 %v3513
    %3783 = vmatprep.subr.bf16.mxu0 %v3520
    %3784 = vmatpush1.bf16.msra.mxu0 %v3519
    %3785 = vmatprep.subr.bf16.mxu0 %v3526
    %3786 = vmatpush1.bf16.msra.mxu0 %v3525
    %3787 = vmatprep.subr.bf16.mxu0 %v3532
    %3788 = vmatpush1.bf16.msra.mxu0 %v3531
    %3789 = vmatprep.subr.bf16.mxu0 %v3538
    %3790 = vmatpush1.bf16.msra.mxu0 %v3537
    %3791 = vmatprep.subr.bf16.mxu0 %v3544
    %3792 = vmatpush1.bf16.msra.mxu0 %v3543
    %3793 = vmatprep.subr.bf16.mxu0 %v3550
    %3794 = vmatpush1.bf16.msra.mxu0 %v3549
    %3795 = vmatprep.subr.bf16.mxu0 %v3556
    %3796 = vmatpush1.bf16.msra.mxu0 %v3555
    %3797 = vmatprep.subr.bf16.mxu0 %v3562
    %3798 = vmatpush1.bf16.msra.mxu0 %v3561
    %3799 = vmatprep.subr.bf16.mxu0 %v3568
    %3800 = vmatpush1.bf16.msra.mxu0 %v3567
    %3801 = vmatprep.subr.bf16.mxu0 %v3574
    %3802 = vmatpush1.bf16.msra.mxu0 %v3573
    %3803 = vmatprep.mubr.bf16.mxu0 %v3460
    %3804 = vmatmul.mubr.bf16.gmra.mrb[0].mxu0 %v3459
    %v3805 = vpop.f32.mrb[0].mxu0
    %v3806 = vadd.f32 0.0, %v3805
    %v3807 = vpop.f32.mrb[0].mxu0
    %v3808 = vadd.f32 0.0, %v3807
    %v3809 = vpop.f32.mrb[0].mxu0
    %v3810 = vadd.f32 0.0, %v3809
    %v3811 = vpop.f32.mrb[0].mxu0
    %v3812 = vadd.f32 0.0, %v3811
    %3813 = vmatprep.mubr.bf16.mxu0 %v3466
    %3814 = vmatmul.mubr.bf16.gmra.mrb[0].mxu0 %v3465
    %v3815 = vpop.f32.mrb[0].mxu0
    %v3816 = vadd.f32 0.0, %v3815
    %v3817 = vpop.f32.mrb[0].mxu0
    %v3818 = vadd.f32 0.0, %v3817
    %v3819 = vpop.f32.mrb[0].mxu0
    %v3820 = vadd.f32 0.0, %v3819
    %v3821 = vpop.f32.mrb[0].mxu0
    %v3822 = vadd.f32 0.0, %v3821
    %3823 = vmatprep.mubr.bf16.mxu0 %v3472
    %3824 = vmatmul.mubr.bf16.gmra.mrb[0].mxu0 %v3471
    %v3825 = vpop.f32.mrb[0].mxu0
    %v3826 = vadd.f32 0.0, %v3825
    %v3827 = vpop.f32.mrb[0].mxu0
    %v3828 = vadd.f32 0.0, %v3827
    %v3829 = vpop.f32.mrb[0].mxu0
    %v3830 = vadd.f32 0.0, %v3829
    %v3831 = vpop.f32.mrb[0].mxu0
    %v3832 = vadd.f32 0.0, %v3831
    %3833 = vmatprep.mubr.bf16.mxu0 %v3478
    %3834 = vmatmul.mubr.bf16.gmra.mrb[0].mxu0 %v3477
    %v3835 = vpop.f32.mrb[0].mxu0
    %v3836 = vadd.f32 0.0, %v3835
    %v3837 = vpop.f32.mrb[0].mxu0
    %v3838 = vadd.f32 0.0, %v3837
    %v3839 = vpop.f32.mrb[0].mxu0
    %v3840 = vadd.f32 0.0, %v3839
    %v3841 = vpop.f32.mrb[0].mxu0
    %v3842 = vadd.f32 0.0, %v3841
    %3843 = vdwg.mxu0
    %3844 = vmatprep.subr.bf16.mxu0 %v3580
    %3845 = vmatpush1.bf16.msra.mxu0 %v3579
    %3846 = vmatprep.subr.bf16.mxu0 %v3586
    %3847 = vmatpush1.bf16.msra.mxu0 %v3585
    %3848 = vmatprep.subr.bf16.mxu0 %v3592
    %3849 = vmatpush1.bf16.msra.mxu0 %v3591
    %3850 = vmatprep.subr.bf16.mxu0 %v3598
    %3851 = vmatpush1.bf16.msra.mxu0 %v3597
    %3852 = vmatprep.subr.bf16.mxu0 %v3604
    %3853 = vmatpush1.bf16.msra.mxu0 %v3603
    %3854 = vmatprep.subr.bf16.mxu0 %v3610
    %3855 = vmatpush1.bf16.msra.mxu0 %v3609
    %3856 = vmatprep.subr.bf16.mxu0 %v3616
    %3857 = vmatpush1.bf16.msra.mxu0 %v3615
    %3858 = vmatprep.subr.bf16.mxu0 %v3622
    %3859 = vmatpush1.bf16.msra.mxu0 %v3621
    %3860 = vmatprep.subr.bf16.mxu0 %v3628
    %3861 = vmatpush1.bf16.msra.mxu0 %v3627
    %3862 = vmatprep.subr.bf16.mxu0 %v3634
    %3863 = vmatpush1.bf16.msra.mxu0 %v3633
    %3864 = vmatprep.subr.bf16.mxu0 %v3640
    %3865 = vmatpush1.bf16.msra.mxu0 %v3639
    %3866 = vmatprep.subr.bf16.mxu0 %v3646
    %3867 = vmatpush1.bf16.msra.mxu0 %v3645
    %3868 = vmatprep.subr.bf16.mxu0 %v3652
    %3869 = vmatpush1.bf16.msra.mxu0 %v3651
    %3870 = vmatprep.subr.bf16.mxu0 %v3658
    %3871 = vmatpush1.bf16.msra.mxu0 %v3657
    %3872 = vmatprep.subr.bf16.mxu0 %v3664
    %3873 = vmatpush1.bf16.msra.mxu0 %v3663
    %3874 = vmatprep.subr.bf16.mxu0 %v3670
    %3875 = vmatpush1.bf16.msra.mxu0 %v3669
    %3876 = vmatprep.mubr.bf16.mxu0 %v3462
    %3877 = vmatmul.mubr.bf16.gmra.mrb[0].mxu0 %v3461
    %v3878 = vpop.f32.mrb[0].mxu0
    %v3879 = vadd.f32 %v3806, %v3878
    %v3880 = vpop.f32.mrb[0].mxu0
    %v3881 = vadd.f32 %v3808, %v3880
    %v3882 = vpop.f32.mrb[0].mxu0
    %v3883 = vadd.f32 %v3810, %v3882
    %v3884 = vpop.f32.mrb[0].mxu0
    %v3885 = vadd.f32 %v3812, %v3884
    %3886 = vmatprep.mubr.bf16.mxu0 %v3468
    %3887 = vmatmul.mubr.bf16.gmra.mrb[0].mxu0 %v3467
    %v3888 = vpop.f32.mrb[0].mxu0
    %v3889 = vadd.f32 %v3816, %v3888
    %v3890 = vpop.f32.mrb[0].mxu0
    %v3891 = vadd.f32 %v3818, %v3890
    %v3892 = vpop.f32.mrb[0].mxu0
    %v3893 = vadd.f32 %v3820, %v3892
    %v3894 = vpop.f32.mrb[0].mxu0
    %v3895 = vadd.f32 %v3822, %v3894
    %3896 = vmatprep.mubr.bf16.mxu0 %v3474
    %3897 = vmatmul.mubr.bf16.gmra.mrb[0].mxu0 %v3473
    %v3898 = vpop.f32.mrb[0].mxu0
    %v3899 = vadd.f32 %v3826, %v3898
    %v3900 = vpop.f32.mrb[0].mxu0
    %v3901 = vadd.f32 %v3828, %v3900
    %v3902 = vpop.f32.mrb[0].mxu0
    %v3903 = vadd.f32 %v3830, %v3902
    %v3904 = vpop.f32.mrb[0].mxu0
    %v3905 = vadd.f32 %v3832, %v3904
    %3906 = vmatprep.mubr.bf16.mxu0 %v3480
    %3907 = vmatmul.mubr.bf16.gmra.mrb[0].mxu0 %v3479
    %v3908 = vpop.f32.mrb[0].mxu0
    %v3909 = vadd.f32 %v3836, %v3908
    %v3910 = vpop.f32.mrb[0].mxu0
    %v3911 = vadd.f32 %v3838, %v3910
    %v3912 = vpop.f32.mrb[0].mxu0
    %v3913 = vadd.f32 %v3840, %v3912
    %v3914 = vpop.f32.mrb[0].mxu0
    %v3915 = vadd.f32 %v3842, %v3914
    %3916 = vdwg.mxu0
    %3917 = vmatprep.subr.bf16.mxu0 %v3676
    %3918 = vmatpush1.bf16.msra.mxu0 %v3675
    %3919 = vmatprep.subr.bf16.mxu0 %v3682
    %3920 = vmatpush1.bf16.msra.mxu0 %v3681
    %3921 = vmatprep.subr.bf16.mxu0 %v3688
    %3922 = vmatpush1.bf16.msra.mxu0 %v3687
    %3923 = vmatprep.subr.bf16.mxu0 %v3694
    %3924 = vmatpush1.bf16.msra.mxu0 %v3693
    %3925 = vmatprep.subr.bf16.mxu0 %v3700
    %3926 = vmatpush1.bf16.msra.mxu0 %v3699
    %3927 = vmatprep.subr.bf16.mxu0 %v3706
    %3928 = vmatpush1.bf16.msra.mxu0 %v3705
    %3929 = vmatprep.subr.bf16.mxu0 %v3712
    %3930 = vmatpush1.bf16.msra.mxu0 %v3711
    %3931 = vmatprep.subr.bf16.mxu0 %v3718
    %3932 = vmatpush1.bf16.msra.mxu0 %v3717
    %3933 = vmatprep.subr.bf16.mxu0 %v3724
    %3934 = vmatpush1.bf16.msra.mxu0 %v3723
    %3935 = vmatprep.subr.bf16.mxu0 %v3730
    %3936 = vmatpush1.bf16.msra.mxu0 %v3729
    %3937 = vmatprep.subr.bf16.mxu0 %v3736
    %3938 = vmatpush1.bf16.msra.mxu0 %v3735
    %3939 = vmatprep.subr.bf16.mxu0 %v3742
    %3940 = vmatpush1.bf16.msra.mxu0 %v3741
    %3941 = vmatprep.subr.bf16.mxu0 %v3748
    %3942 = vmatpush1.bf16.msra.mxu0 %v3747
    %3943 = vmatprep.subr.bf16.mxu0 %v3754
    %3944 = vmatpush1.bf16.msra.mxu0 %v3753
    %3945 = vmatprep.subr.bf16.mxu0 %v3760
    %3946 = vmatpush1.bf16.msra.mxu0 %v3759
    %3947 = vmatprep.subr.bf16.mxu0 %v3766
    %3948 = vmatpush1.bf16.msra.mxu0 %v3765
    %3949 = vmatprep.mubr.bf16.mxu0 %v3464
    %3950 = vmatmul.mubr.bf16.gmra.mrb[0].mxu0 %v3463
    %v3951 = vpop.f32.mrb[0].mxu0
    %v3952 = vadd.f32 %v3879, %v3951
    %v3953 = vpop.f32.mrb[0].mxu0
    %v3954 = vadd.f32 %v3881, %v3953
    %v3955 = vpop.f32.mrb[0].mxu0
    %v3956 = vadd.f32 %v3883, %v3955
    %v3957 = vpop.f32.mrb[0].mxu0
    %v3958 = vadd.f32 %v3885, %v3957
    %3959 = vmatprep.mubr.bf16.mxu0 %v3470
    %3960 = vmatmul.mubr.bf16.gmra.mrb[0].mxu0 %v3469
    %v3961 = vpop.f32.mrb[0].mxu0
    %v3962 = vadd.f32 %v3889, %v3961
    %v3963 = vpop.f32.mrb[0].mxu0
    %v3964 = vadd.f32 %v3891, %v3963
    %v3965 = vpop.f32.mrb[0].mxu0
    %v3966 = vadd.f32 %v3893, %v3965
    %v3967 = vpop.f32.mrb[0].mxu0
    %v3968 = vadd.f32 %v3895, %v3967
    %3969 = vmatprep.mubr.bf16.mxu0 %v3476
    %3970 = vmatmul.mubr.bf16.gmra.mrb[0].mxu0 %v3475
    %v3971 = vpop.f32.mrb[0].mxu0
    %v3972 = vadd.f32 %v3899, %v3971
    %v3973 = vpop.f32.mrb[0].mxu0
    %v3974 = vadd.f32 %v3901, %v3973
    %v3975 = vpop.f32.mrb[0].mxu0
    %v3976 = vadd.f32 %v3903, %v3975
    %v3977 = vpop.f32.mrb[0].mxu0
    %v3978 = vadd.f32 %v3905, %v3977
    %3979 = vmatprep.mubr.bf16.mxu0 %v3482
    %3980 = vmatmul.mubr.bf16.gmra.mrb[0].mxu0 %v3481
    %v3981 = vpop.f32.mrb[0].mxu0
    %v3982 = vadd.f32 %v3909, %v3981
    %v3983 = vpop.f32.mrb[0].mxu0
    %v3984 = vadd.f32 %v3911, %v3983
    %v3985 = vpop.f32.mrb[0].mxu0
    %v3986 = vadd.f32 %v3913, %v3985
    %v3987 = vpop.f32.mrb[0].mxu0
    %v3988 = vadd.f32 %v3915, %v3987
    %3989 = vdwg.mxu0
    %3990 = vmatprep.subr.bf16.mxu0 %v3486
    %3991 = vmatpush1.bf16.msra.mxu0 %v3485
    %3992 = vmatprep.subr.bf16.mxu0 %v3492
    %3993 = vmatpush1.bf16.msra.mxu0 %v3491
    %3994 = vmatprep.subr.bf16.mxu0 %v3498
    %3995 = vmatpush1.bf16.msra.mxu0 %v3497
    %3996 = vmatprep.subr.bf16.mxu0 %v3504
    %3997 = vmatpush1.bf16.msra.mxu0 %v3503
    %3998 = vmatprep.subr.bf16.mxu0 %v3510
    %3999 = vmatpush1.bf16.msra.mxu0 %v3509
    %4000 = vmatprep.subr.bf16.mxu0 %v3516
    %4001 = vmatpush1.bf16.msra.mxu0 %v3515
    %4002 = vmatprep.subr.bf16.mxu0 %v3522
    %4003 = vmatpush1.bf16.msra.mxu0 %v3521
    %4004 = vmatprep.subr.bf16.mxu0 %v3528
    %4005 = vmatpush1.bf16.msra.mxu0 %v3527
    %4006 = vmatprep.subr.bf16.mxu0 %v3534
    %4007 = vmatpush1.bf16.msra.mxu0 %v3533
    %4008 = vmatprep.subr.bf16.mxu0 %v3540
    %4009 = vmatpush1.bf16.msra.mxu0 %v3539
    %4010 = vmatprep.subr.bf16.mxu0 %v3546
    %4011 = vmatpush1.bf16.msra.mxu0 %v3545
    %4012 = vmatprep.subr.bf16.mxu0 %v3552
    %4013 = vmatpush1.bf16.msra.mxu0 %v3551
    %4014 = vmatprep.subr.bf16.mxu0 %v3558
    %4015 = vmatpush1.bf16.msra.mxu0 %v3557
    %4016 = vmatprep.subr.bf16.mxu0 %v3564
    %4017 = vmatpush1.bf16.msra.mxu0 %v3563
    %4018 = vmatprep.subr.bf16.mxu0 %v3570
    %4019 = vmatpush1.bf16.msra.mxu0 %v3569
    %4020 = vmatprep.subr.bf16.mxu0 %v3576
    %4021 = vmatpush1.bf16.msra.mxu0 %v3575
    %4022 = vmatprep.mubr.bf16.mxu0 %v3460
    %4023 = vmatmul.mubr.bf16.gmra.mrb[0].mxu0 %v3459
    %v4024 = vpop.f32.mrb[0].mxu0
    %v4025 = vadd.f32 0.0, %v4024
    %v4026 = vpop.f32.mrb[0].mxu0
    %v4027 = vadd.f32 0.0, %v4026
    %v4028 = vpop.f32.mrb[0].mxu0
    %v4029 = vadd.f32 0.0, %v4028
    %v4030 = vpop.f32.mrb[0].mxu0
    %v4031 = vadd.f32 0.0, %v4030
    %4032 = vmatprep.mubr.bf16.mxu0 %v3466
    %4033 = vmatmul.mubr.bf16.gmra.mrb[0].mxu0 %v3465
    %v4034 = vpop.f32.mrb[0].mxu0
    %v4035 = vadd.f32 0.0, %v4034
    %v4036 = vpop.f32.mrb[0].mxu0
    %v4037 = vadd.f32 0.0, %v4036
    %v4038 = vpop.f32.mrb[0].mxu0
    %v4039 = vadd.f32 0.0, %v4038
    %v4040 = vpop.f32.mrb[0].mxu0
    %v4041 = vadd.f32 0.0, %v4040
    %4042 = vmatprep.mubr.bf16.mxu0 %v3472
    %4043 = vmatmul.mubr.bf16.gmra.mrb[0].mxu0 %v3471
    %v4044 = vpop.f32.mrb[0].mxu0
    %v4045 = vadd.f32 0.0, %v4044
    %v4046 = vpop.f32.mrb[0].mxu0
    %v4047 = vadd.f32 0.0, %v4046
    %v4048 = vpop.f32.mrb[0].mxu0
    %v4049 = vadd.f32 0.0, %v4048
    %v4050 = vpop.f32.mrb[0].mxu0
    %v4051 = vadd.f32 0.0, %v4050
    %4052 = vmatprep.mubr.bf16.mxu0 %v3478
    %4053 = vmatmul.mubr.bf16.gmra.mrb[0].mxu0 %v3477
    %v4054 = vpop.f32.mrb[0].mxu0
    %v4055 = vadd.f32 0.0, %v4054
    %v4056 = vpop.f32.mrb[0].mxu0
    %v4057 = vadd.f32 0.0, %v4056
    %v4058 = vpop.f32.mrb[0].mxu0
    %v4059 = vadd.f32 0.0, %v4058
    %v4060 = vpop.f32.mrb[0].mxu0
    %v4061 = vadd.f32 0.0, %v4060
    %4062 = vdwg.mxu0
    %4063 = vmatprep.subr.bf16.mxu0 %v3582
    %4064 = vmatpush1.bf16.msra.mxu0 %v3581
    %4065 = vmatprep.subr.bf16.mxu0 %v3588
    %4066 = vmatpush1.bf16.msra.mxu0 %v3587
    %4067 = vmatprep.subr.bf16.mxu0 %v3594
    %4068 = vmatpush1.bf16.msra.mxu0 %v3593
    %4069 = vmatprep.subr.bf16.mxu0 %v3600
    %4070 = vmatpush1.bf16.msra.mxu0 %v3599
    %4071 = vmatprep.subr.bf16.mxu0 %v3606
    %4072 = vmatpush1.bf16.msra.mxu0 %v3605
    %4073 = vmatprep.subr.bf16.mxu0 %v3612
    %4074 = vmatpush1.bf16.msra.mxu0 %v3611
    %4075 = vmatprep.subr.bf16.mxu0 %v3618
    %4076 = vmatpush1.bf16.msra.mxu0 %v3617
    %4077 = vmatprep.subr.bf16.mxu0 %v3624
    %4078 = vmatpush1.bf16.msra.mxu0 %v3623
    %4079 = vmatprep.subr.bf16.mxu0 %v3630
    %4080 = vmatpush1.bf16.msra.mxu0 %v3629
    %4081 = vmatprep.subr.bf16.mxu0 %v3636
    %4082 = vmatpush1.bf16.msra.mxu0 %v3635
    %4083 = vmatprep.subr.bf16.mxu0 %v3642
    %4084 = vmatpush1.bf16.msra.mxu0 %v3641
    %4085 = vmatprep.subr.bf16.mxu0 %v3648
    %4086 = vmatpush1.bf16.msra.mxu0 %v3647
    %4087 = vmatprep.subr.bf16.mxu0 %v3654
    %4088 = vmatpush1.bf16.msra.mxu0 %v3653
    %4089 = vmatprep.subr.bf16.mxu0 %v3660
    %4090 = vmatpush1.bf16.msra.mxu0 %v3659
    %4091 = vmatprep.subr.bf16.mxu0 %v3666
    %4092 = vmatpush1.bf16.msra.mxu0 %v3665
    %4093 = vmatprep.subr.bf16.mxu0 %v3672
    %4094 = vmatpush1.bf16.msra.mxu0 %v3671
    %4095 = vmatprep.mubr.bf16.mxu0 %v3462
    %4096 = vmatmul.mubr.bf16.gmra.mrb[0].mxu0 %v3461
    %v4097 = vpop.f32.mrb[0].mxu0
    %v4098 = vadd.f32 %v4025, %v4097
    %v4099 = vpop.f32.mrb[0].mxu0
    %v4100 = vadd.f32 %v4027, %v4099
    %v4101 = vpop.f32.mrb[0].mxu0
    %v4102 = vadd.f32 %v4029, %v4101
    %v4103 = vpop.f32.mrb[0].mxu0
    %v4104 = vadd.f32 %v4031, %v4103
    %4105 = vmatprep.mubr.bf16.mxu0 %v3468
    %4106 = vmatmul.mubr.bf16.gmra.mrb[0].mxu0 %v3467
    %v4107 = vpop.f32.mrb[0].mxu0
    %v4108 = vadd.f32 %v4035, %v4107
    %v4109 = vpop.f32.mrb[0].mxu0
    %v4110 = vadd.f32 %v4037, %v4109
    %v4111 = vpop.f32.mrb[0].mxu0
    %v4112 = vadd.f32 %v4039, %v4111
    %v4113 = vpop.f32.mrb[0].mxu0
    %v4114 = vadd.f32 %v4041, %v4113
    %4115 = vmatprep.mubr.bf16.mxu0 %v3474
    %4116 = vmatmul.mubr.bf16.gmra.mrb[0].mxu0 %v3473
    %v4117 = vpop.f32.mrb[0].mxu0
    %v4118 = vadd.f32 %v4045, %v4117
    %v4119 = vpop.f32.mrb[0].mxu0
    %v4120 = vadd.f32 %v4047, %v4119
    %v4121 = vpop.f32.mrb[0].mxu0
    %v4122 = vadd.f32 %v4049, %v4121
    %v4123 = vpop.f32.mrb[0].mxu0
    %v4124 = vadd.f32 %v4051, %v4123
    %4125 = vmatprep.mubr.bf16.mxu0 %v3480
    %4126 = vmatmul.mubr.bf16.gmra.mrb[0].mxu0 %v3479
    %v4127 = vpop.f32.mrb[0].mxu0
    %v4128 = vadd.f32 %v4055, %v4127
    %v4129 = vpop.f32.mrb[0].mxu0
    %v4130 = vadd.f32 %v4057, %v4129
    %v4131 = vpop.f32.mrb[0].mxu0
    %v4132 = vadd.f32 %v4059, %v4131
    %v4133 = vpop.f32.mrb[0].mxu0
    %v4134 = vadd.f32 %v4061, %v4133
    %4135 = vdwg.mxu0
    %4136 = vmatprep.subr.bf16.mxu0 %v3678
    %4137 = vmatpush1.bf16.msra.mxu0 %v3677
    %4138 = vmatprep.subr.bf16.mxu0 %v3684
    %4139 = vmatpush1.bf16.msra.mxu0 %v3683
    %4140 = vmatprep.subr.bf16.mxu0 %v3690
    %4141 = vmatpush1.bf16.msra.mxu0 %v3689
    %4142 = vmatprep.subr.bf16.mxu0 %v3696
    %4143 = vmatpush1.bf16.msra.mxu0 %v3695
    %4144 = vmatprep.subr.bf16.mxu0 %v3702
    %4145 = vmatpush1.bf16.msra.mxu0 %v3701
    %4146 = vmatprep.subr.bf16.mxu0 %v3708
    %4147 = vmatpush1.bf16.msra.mxu0 %v3707
    %4148 = vmatprep.subr.bf16.mxu0 %v3714
    %4149 = vmatpush1.bf16.msra.mxu0 %v3713
    %4150 = vmatprep.subr.bf16.mxu0 %v3720
    %4151 = vmatpush1.bf16.msra.mxu0 %v3719
    %4152 = vmatprep.subr.bf16.mxu0 %v3726
    %4153 = vmatpush1.bf16.msra.mxu0 %v3725
    %4154 = vmatprep.subr.bf16.mxu0 %v3732
    %4155 = vmatpush1.bf16.msra.mxu0 %v3731
    %4156 = vmatprep.subr.bf16.mxu0 %v3738
    %4157 = vmatpush1.bf16.msra.mxu0 %v3737
    %4158 = vmatprep.subr.bf16.mxu0 %v3744
    %4159 = vmatpush1.bf16.msra.mxu0 %v3743
    %4160 = vmatprep.subr.bf16.mxu0 %v3750
    %4161 = vmatpush1.bf16.msra.mxu0 %v3749
    %4162 = vmatprep.subr.bf16.mxu0 %v3756
    %4163 = vmatpush1.bf16.msra.mxu0 %v3755
    %4164 = vmatprep.subr.bf16.mxu0 %v3762
    %4165 = vmatpush1.bf16.msra.mxu0 %v3761
    %4166 = vmatprep.subr.bf16.mxu0 %v3768
    %4167 = vmatpush1.bf16.msra.mxu0 %v3767
    %4168 = vmatprep.mubr.bf16.mxu0 %v3464
    %4169 = vmatmul.mubr.bf16.gmra.mrb[0].mxu0 %v3463
    %v4170 = vpop.f32.mrb[0].mxu0
    %v4171 = vadd.f32 %v4098, %v4170
    %v4172 = vpop.f32.mrb[0].mxu0
    %v4173 = vadd.f32 %v4100, %v4172
    %v4174 = vpop.f32.mrb[0].mxu0
    %v4175 = vadd.f32 %v4102, %v4174
    %v4176 = vpop.f32.mrb[0].mxu0
    %v4177 = vadd.f32 %v4104, %v4176
    %4178 = vmatprep.mubr.bf16.mxu0 %v3470
    %4179 = vmatmul.mubr.bf16.gmra.mrb[0].mxu0 %v3469
    %v4180 = vpop.f32.mrb[0].mxu0
    %v4181 = vadd.f32 %v4108, %v4180
    %v4182 = vpop.f32.mrb[0].mxu0
    %v4183 = vadd.f32 %v4110, %v4182
    %v4184 = vpop.f32.mrb[0].mxu0
    %v4185 = vadd.f32 %v4112, %v4184
    %v4186 = vpop.f32.mrb[0].mxu0
    %v4187 = vadd.f32 %v4114, %v4186
    %4188 = vmatprep.mubr.bf16.mxu0 %v3476
    %4189 = vmatmul.mubr.bf16.gmra.mrb[0].mxu0 %v3475
    %v4190 = vpop.f32.mrb[0].mxu0
    %v4191 = vadd.f32 %v4118, %v4190
    %v4192 = vpop.f32.mrb[0].mxu0
    %v4193 = vadd.f32 %v4120, %v4192
    %v4194 = vpop.f32.mrb[0].mxu0
    %v4195 = vadd.f32 %v4122, %v4194
    %v4196 = vpop.f32.mrb[0].mxu0
    %v4197 = vadd.f32 %v4124, %v4196
    %4198 = vmatprep.mubr.bf16.mxu0 %v3482
    %4199 = vmatmul.mubr.bf16.gmra.mrb[0].mxu0 %v3481
    %v4200 = vpop.f32.mrb[0].mxu0
    %v4201 = vadd.f32 %v4128, %v4200
    %v4202 = vpop.f32.mrb[0].mxu0
    %v4203 = vadd.f32 %v4130, %v4202
    %v4204 = vpop.f32.mrb[0].mxu0
    %v4205 = vadd.f32 %v4132, %v4204
    %v4206 = vpop.f32.mrb[0].mxu0
    %v4207 = vadd.f32 %v4134, %v4206
    %4208 = vdwg.mxu0
    %4209 = vmatprep.subr.bf16.mxu0 %v3488
    %4210 = vmatpush1.bf16.msra.mxu0 %v3487
    %4211 = vmatprep.subr.bf16.mxu0 %v3494
    %4212 = vmatpush1.bf16.msra.mxu0 %v3493
    %4213 = vmatprep.subr.bf16.mxu0 %v3500
    %4214 = vmatpush1.bf16.msra.mxu0 %v3499
    %4215 = vmatprep.subr.bf16.mxu0 %v3506
    %4216 = vmatpush1.bf16.msra.mxu0 %v3505
    %4217 = vmatprep.subr.bf16.mxu0 %v3512
    %4218 = vmatpush1.bf16.msra.mxu0 %v3511
    %4219 = vmatprep.subr.bf16.mxu0 %v3518
    %4220 = vmatpush1.bf16.msra.mxu0 %v3517
    %4221 = vmatprep.subr.bf16.mxu0 %v3524
    %4222 = vmatpush1.bf16.msra.mxu0 %v3523
    %4223 = vmatprep.subr.bf16.mxu0 %v3530
    %4224 = vmatpush1.bf16.msra.mxu0 %v3529
    %4225 = vmatprep.subr.bf16.mxu0 %v3536
    %4226 = vmatpush1.bf16.msra.mxu0 %v3535
    %4227 = vmatprep.subr.bf16.mxu0 %v3542
    %4228 = vmatpush1.bf16.msra.mxu0 %v3541
    %4229 = vmatprep.subr.bf16.mxu0 %v3548
    %4230 = vmatpush1.bf16.msra.mxu0 %v3547
    %4231 = vmatprep.subr.bf16.mxu0 %v3554
    %4232 = vmatpush1.bf16.msra.mxu0 %v3553
    %4233 = vmatprep.subr.bf16.mxu0 %v3560
    %4234 = vmatpush1.bf16.msra.mxu0 %v3559
    %4235 = vmatprep.subr.bf16.mxu0 %v3566
    %4236 = vmatpush1.bf16.msra.mxu0 %v3565
    %4237 = vmatprep.subr.bf16.mxu0 %v3572
    %4238 = vmatpush1.bf16.msra.mxu0 %v3571
    %4239 = vmatprep.subr.bf16.mxu0 %v3578
    %4240 = vmatpush1.bf16.msra.mxu0 %v3577
    %4241 = vmatprep.mubr.bf16.mxu0 %v3460
    %4242 = vmatmul.mubr.bf16.gmra.mrb[0].mxu0 %v3459
    %v4243 = vpop.f32.mrb[0].mxu0
    %v4244 = vadd.f32 0.0, %v4243
    %v4245 = vpop.f32.mrb[0].mxu0
    %v4246 = vadd.f32 0.0, %v4245
    %v4247 = vpop.f32.mrb[0].mxu0
    %v4248 = vadd.f32 0.0, %v4247
    %v4249 = vpop.f32.mrb[0].mxu0
    %v4250 = vadd.f32 0.0, %v4249
    %4251 = vmatprep.mubr.bf16.mxu0 %v3466
    %4252 = vmatmul.mubr.bf16.gmra.mrb[0].mxu0 %v3465
    %v4253 = vpop.f32.mrb[0].mxu0
    %v4254 = vadd.f32 0.0, %v4253
    %v4255 = vpop.f32.mrb[0].mxu0
    %v4256 = vadd.f32 0.0, %v4255
    %v4257 = vpop.f32.mrb[0].mxu0
    %v4258 = vadd.f32 0.0, %v4257
    %v4259 = vpop.f32.mrb[0].mxu0
    %v4260 = vadd.f32 0.0, %v4259
    %4261 = vmatprep.mubr.bf16.mxu0 %v3472
    %4262 = vmatmul.mubr.bf16.gmra.mrb[0].mxu0 %v3471
    %v4263 = vpop.f32.mrb[0].mxu0
    %v4264 = vadd.f32 0.0, %v4263
    %v4265 = vpop.f32.mrb[0].mxu0
    %v4266 = vadd.f32 0.0, %v4265
    %v4267 = vpop.f32.mrb[0].mxu0
    %v4268 = vadd.f32 0.0, %v4267
    %v4269 = vpop.f32.mrb[0].mxu0
    %v4270 = vadd.f32 0.0, %v4269
    %4271 = vmatprep.mubr.bf16.mxu0 %v3478
    %4272 = vmatmul.mubr.bf16.gmra.mrb[0].mxu0 %v3477
    %v4273 = vpop.f32.mrb[0].mxu0
    %v4274 = vadd.f32 0.0, %v4273
    %v4275 = vpop.f32.mrb[0].mxu0
    %v4276 = vadd.f32 0.0, %v4275
    %v4277 = vpop.f32.mrb[0].mxu0
    %v4278 = vadd.f32 0.0, %v4277
    %v4279 = vpop.f32.mrb[0].mxu0
    %v4280 = vadd.f32 0.0, %v4279
    %4281 = vdwg.mxu0
    %4282 = vmatprep.subr.bf16.mxu0 %v3584
    %4283 = vmatpush1.bf16.msra.mxu0 %v3583
    %4284 = vmatprep.subr.bf16.mxu0 %v3590
    %4285 = vmatpush1.bf16.msra.mxu0 %v3589
    %4286 = vmatprep.subr.bf16.mxu0 %v3596
    %4287 = vmatpush1.bf16.msra.mxu0 %v3595
    %4288 = vmatprep.subr.bf16.mxu0 %v3602
    %4289 = vmatpush1.bf16.msra.mxu0 %v3601
    %4290 = vmatprep.subr.bf16.mxu0 %v3608
    %4291 = vmatpush1.bf16.msra.mxu0 %v3607
    %4292 = vmatprep.subr.bf16.mxu0 %v3614
    %4293 = vmatpush1.bf16.msra.mxu0 %v3613
    %4294 = vmatprep.subr.bf16.mxu0 %v3620
    %4295 = vmatpush1.bf16.msra.mxu0 %v3619
    %4296 = vmatprep.subr.bf16.mxu0 %v3626
    %4297 = vmatpush1.bf16.msra.mxu0 %v3625
    %4298 = vmatprep.subr.bf16.mxu0 %v3632
    %4299 = vmatpush1.bf16.msra.mxu0 %v3631
    %4300 = vmatprep.subr.bf16.mxu0 %v3638
    %4301 = vmatpush1.bf16.msra.mxu0 %v3637
    %4302 = vmatprep.subr.bf16.mxu0 %v3644
    %4303 = vmatpush1.bf16.msra.mxu0 %v3643
    %4304 = vmatprep.subr.bf16.mxu0 %v3650
    %4305 = vmatpush1.bf16.msra.mxu0 %v3649
    %4306 = vmatprep.subr.bf16.mxu0 %v3656
    %4307 = vmatpush1.bf16.msra.mxu0 %v3655
    %4308 = vmatprep.subr.bf16.mxu0 %v3662
    %4309 = vmatpush1.bf16.msra.mxu0 %v3661
    %4310 = vmatprep.subr.bf16.mxu0 %v3668
    %4311 = vmatpush1.bf16.msra.mxu0 %v3667
    %4312 = vmatprep.subr.bf16.mxu0 %v3674
    %4313 = vmatpush1.bf16.msra.mxu0 %v3673
    %4314 = vmatprep.mubr.bf16.mxu0 %v3462
    %4315 = vmatmul.mubr.bf16.gmra.mrb[0].mxu0 %v3461
    %v4316 = vpop.f32.mrb[0].mxu0
    %v4317 = vadd.f32 %v4244, %v4316
    %v4318 = vpop.f32.mrb[0].mxu0
    %v4319 = vadd.f32 %v4246, %v4318
    %v4320 = vpop.f32.mrb[0].mxu0
    %v4321 = vadd.f32 %v4248, %v4320
    %v4322 = vpop.f32.mrb[0].mxu0
    %v4323 = vadd.f32 %v4250, %v4322
    %4324 = vmatprep.mubr.bf16.mxu0 %v3468
    %4325 = vmatmul.mubr.bf16.gmra.mrb[0].mxu0 %v3467
    %v4326 = vpop.f32.mrb[0].mxu0
    %v4327 = vadd.f32 %v4254, %v4326
    %v4328 = vpop.f32.mrb[0].mxu0
    %v4329 = vadd.f32 %v4256, %v4328
    %v4330 = vpop.f32.mrb[0].mxu0
    %v4331 = vadd.f32 %v4258, %v4330
    %v4332 = vpop.f32.mrb[0].mxu0
    %v4333 = vadd.f32 %v4260, %v4332
    %4334 = vmatprep.mubr.bf16.mxu0 %v3474
    %4335 = vmatmul.mubr.bf16.gmra.mrb[0].mxu0 %v3473
    %v4336 = vpop.f32.mrb[0].mxu0
    %v4337 = vadd.f32 %v4264, %v4336
    %v4338 = vpop.f32.mrb[0].mxu0
    %v4339 = vadd.f32 %v4266, %v4338
    %v4340 = vpop.f32.mrb[0].mxu0
    %v4341 = vadd.f32 %v4268, %v4340
    %v4342 = vpop.f32.mrb[0].mxu0
    %v4343 = vadd.f32 %v4270, %v4342
    %4344 = vmatprep.mubr.bf16.mxu0 %v3480
    %4345 = vmatmul.mubr.bf16.gmra.mrb[0].mxu0 %v3479
    %v4346 = vpop.f32.mrb[0].mxu0
    %v4347 = vadd.f32 %v4274, %v4346
    %v4348 = vpop.f32.mrb[0].mxu0
    %v4349 = vadd.f32 %v4276, %v4348
    %v4350 = vpop.f32.mrb[0].mxu0
    %v4351 = vadd.f32 %v4278, %v4350
    %v4352 = vpop.f32.mrb[0].mxu0
    %v4353 = vadd.f32 %v4280, %v4352
    %4354 = vdwg.mxu0
    %4355 = vmatprep.subr.bf16.mxu0 %v3680
    %4356 = vmatpush1.bf16.msra.mxu0 %v3679
    %4357 = vmatprep.subr.bf16.mxu0 %v3686
    %4358 = vmatpush1.bf16.msra.mxu0 %v3685
    %4359 = vmatprep.subr.bf16.mxu0 %v3692
    %4360 = vmatpush1.bf16.msra.mxu0 %v3691
    %4361 = vmatprep.subr.bf16.mxu0 %v3698
    %4362 = vmatpush1.bf16.msra.mxu0 %v3697
    %4363 = vmatprep.subr.bf16.mxu0 %v3704
    %4364 = vmatpush1.bf16.msra.mxu0 %v3703
    %4365 = vmatprep.subr.bf16.mxu0 %v3710
    %4366 = vmatpush1.bf16.msra.mxu0 %v3709
    %4367 = vmatprep.subr.bf16.mxu0 %v3716
    %4368 = vmatpush1.bf16.msra.mxu0 %v3715
    %4369 = vmatprep.subr.bf16.mxu0 %v3722
    %4370 = vmatpush1.bf16.msra.mxu0 %v3721
    %4371 = vmatprep.subr.bf16.mxu0 %v3728
    %4372 = vmatpush1.bf16.msra.mxu0 %v3727
    %4373 = vmatprep.subr.bf16.mxu0 %v3734
    %4374 = vmatpush1.bf16.msra.mxu0 %v3733
    %4375 = vmatprep.subr.bf16.mxu0 %v3740
    %4376 = vmatpush1.bf16.msra.mxu0 %v3739
    %4377 = vmatprep.subr.bf16.mxu0 %v3746
    %4378 = vmatpush1.bf16.msra.mxu0 %v3745
    %4379 = vmatprep.subr.bf16.mxu0 %v3752
    %4380 = vmatpush1.bf16.msra.mxu0 %v3751
    %4381 = vmatprep.subr.bf16.mxu0 %v3758
    %4382 = vmatpush1.bf16.msra.mxu0 %v3757
    %4383 = vmatprep.subr.bf16.mxu0 %v3764
    %4384 = vmatpush1.bf16.msra.mxu0 %v3763
    %4385 = vmatprep.subr.bf16.mxu0 %v3770
    %4386 = vmatpush1.bf16.msra.mxu0 %v3769
    %4387 = vmatprep.mubr.bf16.mxu0 %v3464
    %4388 = vmatmul.mubr.bf16.gmra.mrb[0].mxu0 %v3463
    %v4389 = vpop.f32.mrb[0].mxu0
    %v4390 = vadd.f32 %v4317, %v4389
    %v4391 = vpop.f32.mrb[0].mxu0
    %v4392 = vadd.f32 %v4319, %v4391
    %v4393 = vpop.f32.mrb[0].mxu0
    %v4394 = vadd.f32 %v4321, %v4393
    %v4395 = vpop.f32.mrb[0].mxu0
    %v4396 = vadd.f32 %v4323, %v4395
    %4397 = vmatprep.mubr.bf16.mxu0 %v3470
    %4398 = vmatmul.mubr.bf16.gmra.mrb[0].mxu0 %v3469
    %v4399 = vpop.f32.mrb[0].mxu0
    %v4400 = vadd.f32 %v4327, %v4399
    %v4401 = vpop.f32.mrb[0].mxu0
    %v4402 = vadd.f32 %v4329, %v4401
    %v4403 = vpop.f32.mrb[0].mxu0
    %v4404 = vadd.f32 %v4331, %v4403
    %v4405 = vpop.f32.mrb[0].mxu0
    %v4406 = vadd.f32 %v4333, %v4405
    %4407 = vmatprep.mubr.bf16.mxu0 %v3476
    %4408 = vmatmul.mubr.bf16.gmra.mrb[0].mxu0 %v3475
    %v4409 = vpop.f32.mrb[0].mxu0
    %v4410 = vadd.f32 %v4337, %v4409
    %v4411 = vpop.f32.mrb[0].mxu0
    %v4412 = vadd.f32 %v4339, %v4411
    %v4413 = vpop.f32.mrb[0].mxu0
    %v4414 = vadd.f32 %v4341, %v4413
    %v4415 = vpop.f32.mrb[0].mxu0
    %v4416 = vadd.f32 %v4343, %v4415
    %4417 = vmatprep.mubr.bf16.mxu0 %v3482
    %4418 = vmatmul.mubr.bf16.gmra.mrb[0].mxu0 %v3481
    %v4419 = vpop.f32.mrb[0].mxu0
    %v4420 = vadd.f32 %v4347, %v4419
    %v4421 = vpop.f32.mrb[0].mxu0
    %v4422 = vadd.f32 %v4349, %v4421
    %v4423 = vpop.f32.mrb[0].mxu0
    %v4424 = vadd.f32 %v4351, %v4423
    %v4425 = vpop.f32.mrb[0].mxu0
    %v4426 = vadd.f32 %v4353, %v4425
    %4427 = vdwg.mxu0
    %v4428 = vld [vmem:[#allocation15] sm:$0x3f]
    %v4429 = vld [vmem:[#allocation16] sm:$0x3f]
    %v4430 = vld [vmem:[#allocation18] sm:$0x3f]
    %v4432 = vlaneseq
    %v4433 = vshrl.u32 %v4432, 7
    %v4434 = vsub.s32 0, %v4433
    %v4435 = vrot.slane %v4428, %v4434
    %v4436 = vlaneseq
    %v4437 = vshrl.u32 %v4436, 7
    %v4438 = vsub.s32 1, %v4437
    %v4439 = vrot.slane %v4428, %v4438
    %v4440 = vlaneseq
    %v4441 = vshrl.u32 %v4440, 7
    %v4442 = vsub.s32 2, %v4441
    %v4443 = vrot.slane %v4428, %v4442
    %v4444 = vlaneseq
    %v4445 = vshrl.u32 %v4444, 7
    %v4446 = vsub.s32 3, %v4445
    %v4447 = vrot.slane %v4428, %v4446
    %v4448 = vlaneseq
    %v4449 = vshrl.u32 %v4448, 7
    %v4450 = vsub.s32 4, %v4449
    %v4451 = vrot.slane %v4428, %v4450
    %v4452 = vlaneseq
    %v4453 = vshrl.u32 %v4452, 7
    %v4454 = vsub.s32 5, %v4453
    %v4455 = vrot.slane %v4428, %v4454
    %v4462 = vmul.f32 %v3952, %v4435
    %v4463 = vmul.f32 %v3954, %v4439
    %v4464 = vmul.f32 %v4171, %v4443
    %v4465 = vmul.f32 %v4173, %v4447
    %v4466 = vmul.f32 %v4390, %v4451
    %v4467 = vmul.f32 %v4392, %v4455
    %v4468 = vmul.f32 %v3956, %v4435
    %v4469 = vmul.f32 %v3958, %v4439
    %v4470 = vmul.f32 %v4175, %v4443
    %v4471 = vmul.f32 %v4177, %v4447
    %v4472 = vmul.f32 %v4394, %v4451
    %v4473 = vmul.f32 %v4396, %v4455
    %v4474 = vmul.f32 %v3962, %v4435
    %v4475 = vmul.f32 %v3964, %v4439
    %v4476 = vmul.f32 %v4181, %v4443
    %v4477 = vmul.f32 %v4183, %v4447
    %v4478 = vmul.f32 %v4400, %v4451
    %v4479 = vmul.f32 %v4402, %v4455
    %v4480 = vmul.f32 %v3966, %v4435
    %v4481 = vmul.f32 %v3968, %v4439
    %v4482 = vmul.f32 %v4185, %v4443
    %v4483 = vmul.f32 %v4187, %v4447
    %v4484 = vmul.f32 %v4404, %v4451
    %v4485 = vmul.f32 %v4406, %v4455
    %v4486 = vmul.f32 %v3972, %v4435
    %v4487 = vmul.f32 %v3974, %v4439
    %v4488 = vmul.f32 %v4191, %v4443
    %v4489 = vmul.f32 %v4193, %v4447
    %v4490 = vmul.f32 %v4410, %v4451
    %v4491 = vmul.f32 %v4412, %v4455
    %v4492 = vmul.f32 %v3976, %v4435
    %v4493 = vmul.f32 %v3978, %v4439
    %v4494 = vmul.f32 %v4195, %v4443
    %v4495 = vmul.f32 %v4197, %v4447
    %v4496 = vmul.f32 %v4414, %v4451
    %v4497 = vmul.f32 %v4416, %v4455
    %v4498 = vmul.f32 %v3982, %v4435
    %v4499 = vmul.f32 %v3984, %v4439
    %v4500 = vmul.f32 %v4201, %v4443
    %v4501 = vmul.f32 %v4203, %v4447
    %v4502 = vmul.f32 %v4420, %v4451
    %v4503 = vmul.f32 %v4422, %v4455
    %v4504 = vmul.f32 %v3986, %v4435
    %v4505 = vmul.f32 %v3988, %v4439
    %v4506 = vmul.f32 %v4205, %v4443
    %v4507 = vmul.f32 %v4207, %v4447
    %v4508 = vmul.f32 %v4424, %v4451
    %v4509 = vmul.f32 %v4426, %v4455
    %v4510 = vadd.f32 %v4462, %v4463
    %v4511 = vadd.f32 %v4510, %v4464
    %v4512 = vadd.f32 %v4511, %v4465
    %v4513 = vadd.f32 %v4512, %v4466
    %v4514 = vadd.f32 %v4513, %v4467
    %4515 = vadd.xlane.f32.xlu0 %v4514
    %v4516 = vpop.xlane.xlu0 %4515
    %v4517 = vadd.f32 %v4468, %v4469
    %v4518 = vadd.f32 %v4517, %v4470
    %v4519 = vadd.f32 %v4518, %v4471
    %v4520 = vadd.f32 %v4519, %v4472
    %v4521 = vadd.f32 %v4520, %v4473
    %4522 = vadd.xlane.f32.xlu0 %v4521
    %v4523 = vpop.xlane.xlu0 %4522
    %v4524 = vadd.f32 %v4474, %v4475
    %v4525 = vadd.f32 %v4524, %v4476
    %v4526 = vadd.f32 %v4525, %v4477
    %v4527 = vadd.f32 %v4526, %v4478
    %v4528 = vadd.f32 %v4527, %v4479
    %4529 = vadd.xlane.f32.xlu0 %v4528
    %v4530 = vpop.xlane.xlu0 %4529
    %v4531 = vadd.f32 %v4480, %v4481
    %v4532 = vadd.f32 %v4531, %v4482
    %v4533 = vadd.f32 %v4532, %v4483
    %v4534 = vadd.f32 %v4533, %v4484
    %v4535 = vadd.f32 %v4534, %v4485
    %4536 = vadd.xlane.f32.xlu0 %v4535
    %v4537 = vpop.xlane.xlu0 %4536
    %v4538 = vadd.f32 %v4486, %v4487
    %v4539 = vadd.f32 %v4538, %v4488
    %v4540 = vadd.f32 %v4539, %v4489
    %v4541 = vadd.f32 %v4540, %v4490
    %v4542 = vadd.f32 %v4541, %v4491
    %4543 = vadd.xlane.f32.xlu0 %v4542
    %v4544 = vpop.xlane.xlu0 %4543
    %v4545 = vadd.f32 %v4492, %v4493
    %v4546 = vadd.f32 %v4545, %v4494
    %v4547 = vadd.f32 %v4546, %v4495
    %v4548 = vadd.f32 %v4547, %v4496
    %v4549 = vadd.f32 %v4548, %v4497
    %4550 = vadd.xlane.f32.xlu0 %v4549
    %v4551 = vpop.xlane.xlu0 %4550
    %v4552 = vadd.f32 %v4498, %v4499
    %v4553 = vadd.f32 %v4552, %v4500
    %v4554 = vadd.f32 %v4553, %v4501
    %v4555 = vadd.f32 %v4554, %v4502
    %v4556 = vadd.f32 %v4555, %v4503
    %4557 = vadd.xlane.f32.xlu0 %v4556
    %v4558 = vpop.xlane.xlu0 %4557
    %v4559 = vadd.f32 %v4504, %v4505
    %v4560 = vadd.f32 %v4559, %v4506
    %v4561 = vadd.f32 %v4560, %v4507
    %v4562 = vadd.f32 %v4561, %v4508
    %v4563 = vadd.f32 %v4562, %v4509
    %4564 = vadd.xlane.f32.xlu0 %v4563
    %v4565 = vpop.xlane.xlu0 %4564
    %v4567 = vlaneseq
    %v4568 = vshrl.u32 %v4567, 7
    %v4569 = vsub.s32 0, %v4568
    %v4570 = vrot.slane %v4429, %v4569
    %v4571 = vlaneseq
    %v4572 = vshrl.u32 %v4571, 7
    %v4573 = vsub.s32 1, %v4572
    %v4574 = vrot.slane %v4429, %v4573
    %v4575 = vlaneseq
    %v4576 = vshrl.u32 %v4575, 7
    %v4577 = vsub.s32 2, %v4576
    %v4578 = vrot.slane %v4429, %v4577
    %v4579 = vlaneseq
    %v4580 = vshrl.u32 %v4579, 7
    %v4581 = vsub.s32 3, %v4580
    %v4582 = vrot.slane %v4429, %v4581
    %v4583 = vlaneseq
    %v4584 = vshrl.u32 %v4583, 7
    %v4585 = vsub.s32 4, %v4584
    %v4586 = vrot.slane %v4429, %v4585
    %v4587 = vlaneseq
    %v4588 = vshrl.u32 %v4587, 7
    %v4589 = vsub.s32 5, %v4588
    %v4590 = vrot.slane %v4429, %v4589
    %v4597 = vmul.f32 %v3952, %v4570
    %v4598 = vmul.f32 %v3954, %v4574
    %v4599 = vmul.f32 %v4171, %v4578
    %v4600 = vmul.f32 %v4173, %v4582
    %v4601 = vmul.f32 %v4390, %v4586
    %v4602 = vmul.f32 %v4392, %v4590
    %v4603 = vmul.f32 %v3956, %v4570
    %v4604 = vmul.f32 %v3958, %v4574
    %v4605 = vmul.f32 %v4175, %v4578
    %v4606 = vmul.f32 %v4177, %v4582
    %v4607 = vmul.f32 %v4394, %v4586
    %v4608 = vmul.f32 %v4396, %v4590
    %v4609 = vmul.f32 %v3962, %v4570
    %v4610 = vmul.f32 %v3964, %v4574
    %v4611 = vmul.f32 %v4181, %v4578
    %v4612 = vmul.f32 %v4183, %v4582
    %v4613 = vmul.f32 %v4400, %v4586
    %v4614 = vmul.f32 %v4402, %v4590
    %v4615 = vmul.f32 %v3966, %v4570
    %v4616 = vmul.f32 %v3968, %v4574
    %v4617 = vmul.f32 %v4185, %v4578
    %v4618 = vmul.f32 %v4187, %v4582
    %v4619 = vmul.f32 %v4404, %v4586
    %v4620 = vmul.f32 %v4406, %v4590
    %v4621 = vmul.f32 %v3972, %v4570
    %v4622 = vmul.f32 %v3974, %v4574
    %v4623 = vmul.f32 %v4191, %v4578
    %v4624 = vmul.f32 %v4193, %v4582
    %v4625 = vmul.f32 %v4410, %v4586
    %v4626 = vmul.f32 %v4412, %v4590
    %v4627 = vmul.f32 %v3976, %v4570
    %v4628 = vmul.f32 %v3978, %v4574
    %v4629 = vmul.f32 %v4195, %v4578
    %v4630 = vmul.f32 %v4197, %v4582
    %v4631 = vmul.f32 %v4414, %v4586
    %v4632 = vmul.f32 %v4416, %v4590
    %v4633 = vmul.f32 %v3982, %v4570
    %v4634 = vmul.f32 %v3984, %v4574
    %v4635 = vmul.f32 %v4201, %v4578
    %v4636 = vmul.f32 %v4203, %v4582
    %v4637 = vmul.f32 %v4420, %v4586
    %v4638 = vmul.f32 %v4422, %v4590
    %v4639 = vmul.f32 %v3986, %v4570
    %v4640 = vmul.f32 %v3988, %v4574
    %v4641 = vmul.f32 %v4205, %v4578
    %v4642 = vmul.f32 %v4207, %v4582
    %v4643 = vmul.f32 %v4424, %v4586
    %v4644 = vmul.f32 %v4426, %v4590
    %v4645 = vadd.f32 %v4597, %v4598
    %v4646 = vadd.f32 %v4645, %v4599
    %v4647 = vadd.f32 %v4646, %v4600
    %v4648 = vadd.f32 %v4647, %v4601
    %v4649 = vadd.f32 %v4648, %v4602
    %4650 = vadd.xlane.f32.xlu0 %v4649
    %v4651 = vpop.xlane.xlu0 %4650
    %v4652 = vadd.f32 %v4603, %v4604
    %v4653 = vadd.f32 %v4652, %v4605
    %v4654 = vadd.f32 %v4653, %v4606
    %v4655 = vadd.f32 %v4654, %v4607
    %v4656 = vadd.f32 %v4655, %v4608
    %4657 = vadd.xlane.f32.xlu0 %v4656
    %v4658 = vpop.xlane.xlu0 %4657
    %v4659 = vadd.f32 %v4609, %v4610
    %v4660 = vadd.f32 %v4659, %v4611
    %v4661 = vadd.f32 %v4660, %v4612
    %v4662 = vadd.f32 %v4661, %v4613
    %v4663 = vadd.f32 %v4662, %v4614
    %4664 = vadd.xlane.f32.xlu0 %v4663
    %v4665 = vpop.xlane.xlu0 %4664
    %v4666 = vadd.f32 %v4615, %v4616
    %v4667 = vadd.f32 %v4666, %v4617
    %v4668 = vadd.f32 %v4667, %v4618
    %v4669 = vadd.f32 %v4668, %v4619
    %v4670 = vadd.f32 %v4669, %v4620
    %4671 = vadd.xlane.f32.xlu0 %v4670
    %v4672 = vpop.xlane.xlu0 %4671
    %v4673 = vadd.f32 %v4621, %v4622
    %v4674 = vadd.f32 %v4673, %v4623
    %v4675 = vadd.f32 %v4674, %v4624
    %v4676 = vadd.f32 %v4675, %v4625
    %v4677 = vadd.f32 %v4676, %v4626
    %4678 = vadd.xlane.f32.xlu0 %v4677
    %v4679 = vpop.xlane.xlu0 %4678
    %v4680 = vadd.f32 %v4627, %v4628
    %v4681 = vadd.f32 %v4680, %v4629
    %v4682 = vadd.f32 %v4681, %v4630
    %v4683 = vadd.f32 %v4682, %v4631
    %v4684 = vadd.f32 %v4683, %v4632
    %4685 = vadd.xlane.f32.xlu0 %v4684
    %v4686 = vpop.xlane.xlu0 %4685
    %v4687 = vadd.f32 %v4633, %v4634
    %v4688 = vadd.f32 %v4687, %v4635
    %v4689 = vadd.f32 %v4688, %v4636
    %v4690 = vadd.f32 %v4689, %v4637
    %v4691 = vadd.f32 %v4690, %v4638
    %4692 = vadd.xlane.f32.xlu0 %v4691
    %v4693 = vpop.xlane.xlu0 %4692
    %v4694 = vadd.f32 %v4639, %v4640
    %v4695 = vadd.f32 %v4694, %v4641
    %v4696 = vadd.f32 %v4695, %v4642
    %v4697 = vadd.f32 %v4696, %v4643
    %v4698 = vadd.f32 %v4697, %v4644
    %4699 = vadd.xlane.f32.xlu0 %v4698
    %v4700 = vpop.xlane.xlu0 %4699
    %4701 = vxpose.xlu0.b32.start [1/16] %v4516, 128
    %4702 = vxpose.xlu0.b32.cont [2/16] %v4523, 128
    %4703 = vxpose.xlu0.b32.cont [3/16] %v4530, 128
    %4704 = vxpose.xlu0.b32.cont [4/16] %v4537, 128
    %4705 = vxpose.xlu0.b32.cont [5/16] %v4544, 128
    %4706 = vxpose.xlu0.b32.cont [6/16] %v4551, 128
    %4707 = vxpose.xlu0.b32.cont [7/16] %v4558, 128
    %4708 = vxpose.xlu0.b32.cont [8/16] %v4565, 128
    %4709 = vxpose.xlu0.b32.cont [9/16] 0.0, 128
    %4710 = vxpose.xlu0.b32.cont [10/16] 0.0, 128
    %4711 = vxpose.xlu0.b32.cont [11/16] 0.0, 128
    %4712 = vxpose.xlu0.b32.cont [12/16] 0.0, 128
    %4713 = vxpose.xlu0.b32.cont [13/16] 0.0, 128
    %4714 = vxpose.xlu0.b32.cont [14/16] 0.0, 128
    %4715 = vxpose.xlu0.b32.cont [15/16] 0.0, 128
    %4716 = vxpose.xlu0.b32.end [16/16] 0.0, 128
    %v4717 = vpop.trf.xlu0
    %v4718 = vpop.trf.xlu0
    %v4719 = vpop.trf.xlu0
    %v4720 = vpop.trf.xlu0
    %v4721 = vpop.trf.xlu0
    %v4722 = vpop.trf.xlu0
    %v4723 = vpop.trf.xlu0
    %v4724 = vpop.trf.xlu0
    %v4725 = vpop.trf.xlu0
    %v4726 = vpop.trf.xlu0
    %v4727 = vpop.trf.xlu0
    %v4728 = vpop.trf.xlu0
    %v4729 = vpop.trf.xlu0
    %v4730 = vpop.trf.xlu0
    %v4731 = vpop.trf.xlu0
    %v4732 = vpop.trf.xlu0
    %v4733 = vlaneseq
    %v4734 = vshrl.u32 %v4733, 7
    %v4735 = vsub.s32 0, %v4734
    %v4736 = vrot.slane %v4717, %v4735
    %v4737 = vadd.f32 %v4651, %v4736
    %v4738 = vadd.f32 %v4658, %v4736
    %v4739 = vadd.f32 %v4665, %v4736
    %v4740 = vadd.f32 %v4672, %v4736
    %v4741 = vadd.f32 %v4679, %v4736
    %v4742 = vadd.f32 %v4686, %v4736
    %v4743 = vadd.f32 %v4693, %v4736
    %v4744 = vadd.f32 %v4700, %v4736
    %vm4745 = vcmp.gt.f32.partialorder %v4737, 0.0
    %vm4746 = vcmp.gt.f32.partialorder %v4738, 0.0
    %vm4747 = vcmp.gt.f32.partialorder %v4739, 0.0
    %vm4748 = vcmp.gt.f32.partialorder %v4740, 0.0
    %vm4749 = vcmp.gt.f32.partialorder %v4741, 0.0
    %vm4750 = vcmp.gt.f32.partialorder %v4742, 0.0
    %vm4751 = vcmp.gt.f32.partialorder %v4743, 0.0
    %vm4752 = vcmp.gt.f32.partialorder %v4744, 0.0
    %v4753 = vmul.f32 %v4737, 0.2
    %v4754 = vmul.f32 %v4738, 0.2
    %v4755 = vmul.f32 %v4739, 0.2
    %v4756 = vmul.f32 %v4740, 0.2
    %v4757 = vmul.f32 %v4741, 0.2
    %v4758 = vmul.f32 %v4742, 0.2
    %v4759 = vmul.f32 %v4743, 0.2
    %v4760 = vmul.f32 %v4744, 0.2
    %v4761 = vsel %vm4745, %v4737, %v4753
    %v4762 = vsel %vm4746, %v4738, %v4754
    %v4763 = vsel %vm4747, %v4739, %v4755
    %v4764 = vsel %vm4748, %v4740, %v4756
    %v4765 = vsel %vm4749, %v4741, %v4757
    %v4766 = vsel %vm4750, %v4742, %v4758
    %v4767 = vsel %vm4751, %v4743, %v4759
    %v4768 = vsel %vm4752, %v4744, %v4760
    %v4769 = vsel %vm3012, %v4761, -1e+30
    %v4770 = vsel %vm3013, %v4762, -1e+30
    %v4771 = vsel %vm3014, %v4763, -1e+30
    %v4772 = vsel %vm3015, %v4764, -1e+30
    %v4773 = vsel %vm3016, %v4765, -1e+30
    %v4774 = vsel %vm3017, %v4766, -1e+30
    %v4775 = vsel %vm3018, %v4767, -1e+30
    %v4776 = vsel %vm3019, %v4768, -1e+30
    %v4777 = vsel %vm3028, %v4769, -inf
    %4778 = vmax.xlane.f32.xlu0 %v4777
    %v4779 = vpop.xlane.xlu0 %4778
    %v4780 = vsel %vm3028, %v4770, -inf
    %4781 = vmax.xlane.f32.xlu0 %v4780
    %v4782 = vpop.xlane.xlu0 %4781
    %v4783 = vsel %vm3028, %v4771, -inf
    %4784 = vmax.xlane.f32.xlu0 %v4783
    %v4785 = vpop.xlane.xlu0 %4784
    %v4786 = vsel %vm3028, %v4772, -inf
    %4787 = vmax.xlane.f32.xlu0 %v4786
    %v4788 = vpop.xlane.xlu0 %4787
    %v4789 = vsel %vm3028, %v4773, -inf
    %4790 = vmax.xlane.f32.xlu0 %v4789
    %v4791 = vpop.xlane.xlu0 %4790
    %v4792 = vsel %vm3028, %v4774, -inf
    %4793 = vmax.xlane.f32.xlu0 %v4792
    %v4794 = vpop.xlane.xlu0 %4793
    %v4795 = vsel %vm3028, %v4775, -inf
    %4796 = vmax.xlane.f32.xlu0 %v4795
    %v4797 = vpop.xlane.xlu0 %4796
    %v4798 = vsel %vm3028, %v4776, -inf
    %4799 = vmax.xlane.f32.xlu0 %v4798
    %v4800 = vpop.xlane.xlu0 %4799
    %v4801 = vsub.f32 %v4769, %v4779
    %v4802 = vsub.f32 %v4770, %v4782
    %v4803 = vsub.f32 %v4771, %v4785
    %v4804 = vsub.f32 %v4772, %v4788
    %v4805 = vsub.f32 %v4773, %v4791
    %v4806 = vsub.f32 %v4774, %v4794
    %v4807 = vsub.f32 %v4775, %v4797
    %v4808 = vsub.f32 %v4776, %v4800
    %v4809 = vmul.f32 %v4801, 1.442695
    %v4810 = vpow.pop %v4809
    %v4811 = vmul.f32 %v4802, 1.442695
    %v4812 = vpow.pop %v4811
    %v4813 = vmul.f32 %v4803, 1.442695
    %v4814 = vpow.pop %v4813
    %v4815 = vmul.f32 %v4804, 1.442695
    %v4816 = vpow.pop %v4815
    %v4817 = vmul.f32 %v4805, 1.442695
    %v4818 = vpow.pop %v4817
    %v4819 = vmul.f32 %v4806, 1.442695
    %v4820 = vpow.pop %v4819
    %v4821 = vmul.f32 %v4807, 1.442695
    %v4822 = vpow.pop %v4821
    %v4823 = vmul.f32 %v4808, 1.442695
    %v4824 = vpow.pop %v4823
    %v4825 = vsel %vm3028, %v4810, 0.0
    %4826 = vadd.xlane.f32.xlu0 %v4825
    %v4827 = vpop.xlane.xlu0 %4826
    %v4828 = vsel %vm3028, %v4812, 0.0
    %4829 = vadd.xlane.f32.xlu0 %v4828
    %v4830 = vpop.xlane.xlu0 %4829
    %v4831 = vsel %vm3028, %v4814, 0.0
    %4832 = vadd.xlane.f32.xlu0 %v4831
    %v4833 = vpop.xlane.xlu0 %4832
    %v4834 = vsel %vm3028, %v4816, 0.0
    %4835 = vadd.xlane.f32.xlu0 %v4834
    %v4836 = vpop.xlane.xlu0 %4835
    %v4837 = vsel %vm3028, %v4818, 0.0
    %4838 = vadd.xlane.f32.xlu0 %v4837
    %v4839 = vpop.xlane.xlu0 %4838
    %v4840 = vsel %vm3028, %v4820, 0.0
    %4841 = vadd.xlane.f32.xlu0 %v4840
    %v4842 = vpop.xlane.xlu0 %4841
    %v4843 = vsel %vm3028, %v4822, 0.0
    %4844 = vadd.xlane.f32.xlu0 %v4843
    %v4845 = vpop.xlane.xlu0 %4844
    %v4846 = vsel %vm3028, %v4824, 0.0
    %4847 = vadd.xlane.f32.xlu0 %v4846
    %v4848 = vpop.xlane.xlu0 %4847
    %v4849 = vrcp.pop %v4827
    %v4850 = vrcp.pop %v4830
    %v4851 = vrcp.pop %v4833
    %v4852 = vrcp.pop %v4836
    %v4853 = vrcp.pop %v4839
    %v4854 = vrcp.pop %v4842
    %v4855 = vrcp.pop %v4845
    %v4856 = vrcp.pop %v4848
    %v4857 = vmul.f32 %v4810, %v4849
    %v4858 = vmul.f32 %v4812, %v4850
    %v4859 = vmul.f32 %v4814, %v4851
    %v4860 = vmul.f32 %v4816, %v4852
    %v4861 = vmul.f32 %v4818, %v4853
    %v4862 = vmul.f32 %v4820, %v4854
    %v4863 = vmul.f32 %v4822, %v4855
    %v4864 = vmul.f32 %v4824, %v4856
    %v4865 = vpack.c.bf16 %v4858, %v4857
    %v4866 = vpack.c.bf16 %v4860, %v4859
    %v4867 = vpack.c.bf16 %v4862, %v4861
    %v4868 = vpack.c.bf16 %v4864, %v4863
    %v4869 = vpack.c.bf16 %v3956, %v3952
    %v4870 = vpack.c.bf16 %v3958, %v3954
    %v4871 = vpack.c.bf16 %v4175, %v4171
    %v4872 = vpack.c.bf16 %v4177, %v4173
    %v4873 = vpack.c.bf16 %v4394, %v4390
    %v4874 = vpack.c.bf16 %v4396, %v4392
    %v4875 = vpack.c.bf16 %v3966, %v3962
    %v4876 = vpack.c.bf16 %v3968, %v3964
    %v4877 = vpack.c.bf16 %v4185, %v4181
    %v4878 = vpack.c.bf16 %v4187, %v4183
    %v4879 = vpack.c.bf16 %v4404, %v4400
    %v4880 = vpack.c.bf16 %v4406, %v4402
    %v4881 = vpack.c.bf16 %v3976, %v3972
    %v4882 = vpack.c.bf16 %v3978, %v3974
    %v4883 = vpack.c.bf16 %v4195, %v4191
    %v4884 = vpack.c.bf16 %v4197, %v4193
    %v4885 = vpack.c.bf16 %v4414, %v4410
    %v4886 = vpack.c.bf16 %v4416, %v4412
    %v4887 = vpack.c.bf16 %v3986, %v3982
    %v4888 = vpack.c.bf16 %v3988, %v3984
    %v4889 = vpack.c.bf16 %v4205, %v4201
    %v4890 = vpack.c.bf16 %v4207, %v4203
    %v4891 = vpack.c.bf16 %v4424, %v4420
    %v4892 = vpack.c.bf16 %v4426, %v4422
    %v4894 = vlaneseq
    %v4895 = vshrl.u32 %v4894, 7
    %v4896 = vsub.s32 0, %v4895
    %v4897 = vrot.slane %v4430, %v4896
    %v4898 = vlaneseq
    %v4899 = vshrl.u32 %v4898, 7
    %v4900 = vsub.s32 1, %v4899
    %v4901 = vrot.slane %v4430, %v4900
    %v4902 = vlaneseq
    %v4903 = vshrl.u32 %v4902, 7
    %v4904 = vsub.s32 2, %v4903
    %v4905 = vrot.slane %v4430, %v4904
    %v4906 = vlaneseq
    %v4907 = vshrl.u32 %v4906, 7
    %v4908 = vsub.s32 3, %v4907
    %v4909 = vrot.slane %v4430, %v4908
    %v4910 = vlaneseq
    %v4911 = vshrl.u32 %v4910, 7
    %v4912 = vsub.s32 4, %v4911
    %v4913 = vrot.slane %v4430, %v4912
    %v4914 = vlaneseq
    %v4915 = vshrl.u32 %v4914, 7
    %v4916 = vsub.s32 5, %v4915
    %v4917 = vrot.slane %v4430, %v4916
    %v4925 = vsel %vm3028, %v4865, 0
    %v4928 = vsel %vm3028, %v4866, 0
    %v4931 = vsel %vm3028, %v4867, 0
    %v4934 = vsel %vm3028, %v4868, 0
    %4936 = vmatprep.subr.bf16.mxu0 %v4870
    %4937 = vmatpush1.bf16.msra.mxu0 %v4869
    %4938 = vmatprep.subr.bf16.mxu0 %v4876
    %4939 = vmatpush1.bf16.msra.mxu0 %v4875
    %4940 = vmatprep.subr.bf16.mxu0 %v4882
    %4941 = vmatpush1.bf16.msra.mxu0 %v4881
    %4942 = vmatprep.subr.bf16.mxu0 %v4888
    %4943 = vmatpush1.bf16.msra.mxu0 %v4887
    %4944 = vmatprep.subr.bf16.mxu0 0
    %4945 = vmatpush1.bf16.msra.mxu0 0
    %4946 = vmatprep.subr.bf16.mxu0 0
    %4947 = vmatpush1.bf16.msra.mxu0 0
    %4948 = vmatprep.subr.bf16.mxu0 0
    %4949 = vmatpush1.bf16.msra.mxu0 0
    %4950 = vmatprep.subr.bf16.mxu0 0
    %4951 = vmatpush1.bf16.msra.mxu0 0
    %4952 = vmatprep.subr.bf16.mxu0 0
    %4953 = vmatpush1.bf16.msra.mxu0 0
    %4954 = vmatprep.subr.bf16.mxu0 0
    %4955 = vmatpush1.bf16.msra.mxu0 0
    %4956 = vmatprep.subr.bf16.mxu0 0
    %4957 = vmatpush1.bf16.msra.mxu0 0
    %4958 = vmatprep.subr.bf16.mxu0 0
    %4959 = vmatpush1.bf16.msra.mxu0 0
    %4960 = vmatprep.subr.bf16.mxu0 0
    %4961 = vmatpush1.bf16.msra.mxu0 0
    %4962 = vmatprep.subr.bf16.mxu0 0
    %4963 = vmatpush1.bf16.msra.mxu0 0
    %4964 = vmatprep.subr.bf16.mxu0 0
    %4965 = vmatpush1.bf16.msra.mxu0 0
    %4966 = vmatprep.subr.bf16.mxu0 0
    %4967 = vmatpush1.bf16.msra.mxu0 0
    %4968 = vmatprep.mubr.bf16.mxu0 0
    %4969 = vmatmul.mubr.bf16.gmra.mrb[0].mxu0 %v4925
    %v4970 = vpop.f32.mrb[0].mxu0
    %v4971 = vadd.f32 %v4897, %v4970
    %v4972 = vpop.f32.mrb[0].mxu0
    %v4973 = vadd.f32 %v4901, %v4972
    %v4974 = vpop.f32.mrb[0].mxu0
    %v4975 = vadd.f32 %v4897, %v4974
    %v4976 = vpop.f32.mrb[0].mxu0
    %v4977 = vadd.f32 %v4901, %v4976
    %4978 = vmatprep.mubr.bf16.mxu0 0
    %4979 = vmatmul.mubr.bf16.gmra.mrb[0].mxu0 %v4928
    %v4980 = vpop.f32.mrb[0].mxu0
    %v4981 = vadd.f32 %v4897, %v4980
    %v4982 = vpop.f32.mrb[0].mxu0
    %v4983 = vadd.f32 %v4901, %v4982
    %v4984 = vpop.f32.mrb[0].mxu0
    %v4985 = vadd.f32 %v4897, %v4984
    %v4986 = vpop.f32.mrb[0].mxu0
    %v4987 = vadd.f32 %v4901, %v4986
    %4988 = vmatprep.mubr.bf16.mxu0 0
    %4989 = vmatmul.mubr.bf16.gmra.mrb[0].mxu0 %v4931
    %v4990 = vpop.f32.mrb[0].mxu0
    %v4991 = vadd.f32 %v4897, %v4990
    %v4992 = vpop.f32.mrb[0].mxu0
    %v4993 = vadd.f32 %v4901, %v4992
    %v4994 = vpop.f32.mrb[0].mxu0
    %v4995 = vadd.f32 %v4897, %v4994
    %v4996 = vpop.f32.mrb[0].mxu0
    %v4997 = vadd.f32 %v4901, %v4996
    %4998 = vmatprep.mubr.bf16.mxu0 0
    %4999 = vmatmul.mubr.bf16.gmra.mrb[0].mxu0 %v4934
    %v5000 = vpop.f32.mrb[0].mxu0
    %v5001 = vadd.f32 %v4897, %v5000
    %v5002 = vpop.f32.mrb[0].mxu0
    %v5003 = vadd.f32 %v4901, %v5002
    %v5004 = vpop.f32.mrb[0].mxu0
    %v5005 = vadd.f32 %v4897, %v5004
    %v5006 = vpop.f32.mrb[0].mxu0
    %v5007 = vadd.f32 %v4901, %v5006
    %5008 = vdwg.mxu0
    %5009 = vmatprep.subr.bf16.mxu0 %v4872
    %5010 = vmatpush1.bf16.msra.mxu0 %v4871
    %5011 = vmatprep.subr.bf16.mxu0 %v4878
    %5012 = vmatpush1.bf16.msra.mxu0 %v4877
    %5013 = vmatprep.subr.bf16.mxu0 %v4884
    %5014 = vmatpush1.bf16.msra.mxu0 %v4883
    %5015 = vmatprep.subr.bf16.mxu0 %v4890
    %5016 = vmatpush1.bf16.msra.mxu0 %v4889
    %5017 = vmatprep.subr.bf16.mxu0 0
    %5018 = vmatpush1.bf16.msra.mxu0 0
    %5019 = vmatprep.subr.bf16.mxu0 0
    %5020 = vmatpush1.bf16.msra.mxu0 0
    %5021 = vmatprep.subr.bf16.mxu0 0
    %5022 = vmatpush1.bf16.msra.mxu0 0
    %5023 = vmatprep.subr.bf16.mxu0 0
    %5024 = vmatpush1.bf16.msra.mxu0 0
    %5025 = vmatprep.subr.bf16.mxu0 0
    %5026 = vmatpush1.bf16.msra.mxu0 0
    %5027 = vmatprep.subr.bf16.mxu0 0
    %5028 = vmatpush1.bf16.msra.mxu0 0
    %5029 = vmatprep.subr.bf16.mxu0 0
    %5030 = vmatpush1.bf16.msra.mxu0 0
    %5031 = vmatprep.subr.bf16.mxu0 0
    %5032 = vmatpush1.bf16.msra.mxu0 0
    %5033 = vmatprep.subr.bf16.mxu0 0
    %5034 = vmatpush1.bf16.msra.mxu0 0
    %5035 = vmatprep.subr.bf16.mxu0 0
    %5036 = vmatpush1.bf16.msra.mxu0 0
    %5037 = vmatprep.subr.bf16.mxu0 0
    %5038 = vmatpush1.bf16.msra.mxu0 0
    %5039 = vmatprep.subr.bf16.mxu0 0
    %5040 = vmatpush1.bf16.msra.mxu0 0
    %5041 = vmatprep.mubr.bf16.mxu0 0
    %5042 = vmatmul.mubr.bf16.gmra.mrb[0].mxu0 %v4925
    %v5043 = vpop.f32.mrb[0].mxu0
    %v5044 = vadd.f32 %v4905, %v5043
    %v5045 = vpop.f32.mrb[0].mxu0
    %v5046 = vadd.f32 %v4909, %v5045
    %v5047 = vpop.f32.mrb[0].mxu0
    %v5048 = vadd.f32 %v4905, %v5047
    %v5049 = vpop.f32.mrb[0].mxu0
    %v5050 = vadd.f32 %v4909, %v5049
    %5051 = vmatprep.mubr.bf16.mxu0 0
    %5052 = vmatmul.mubr.bf16.gmra.mrb[0].mxu0 %v4928
    %v5053 = vpop.f32.mrb[0].mxu0
    %v5054 = vadd.f32 %v4905, %v5053
    %v5055 = vpop.f32.mrb[0].mxu0
    %v5056 = vadd.f32 %v4909, %v5055
    %v5057 = vpop.f32.mrb[0].mxu0
    %v5058 = vadd.f32 %v4905, %v5057
    %v5059 = vpop.f32.mrb[0].mxu0
    %v5060 = vadd.f32 %v4909, %v5059
    %5061 = vmatprep.mubr.bf16.mxu0 0
    %5062 = vmatmul.mubr.bf16.gmra.mrb[0].mxu0 %v4931
    %v5063 = vpop.f32.mrb[0].mxu0
    %v5064 = vadd.f32 %v4905, %v5063
    %v5065 = vpop.f32.mrb[0].mxu0
    %v5066 = vadd.f32 %v4909, %v5065
    %v5067 = vpop.f32.mrb[0].mxu0
    %v5068 = vadd.f32 %v4905, %v5067
    %v5069 = vpop.f32.mrb[0].mxu0
    %v5070 = vadd.f32 %v4909, %v5069
    %5071 = vmatprep.mubr.bf16.mxu0 0
    %5072 = vmatmul.mubr.bf16.gmra.mrb[0].mxu0 %v4934
    %v5073 = vpop.f32.mrb[0].mxu0
    %v5074 = vadd.f32 %v4905, %v5073
    %v5075 = vpop.f32.mrb[0].mxu0
    %v5076 = vadd.f32 %v4909, %v5075
    %v5077 = vpop.f32.mrb[0].mxu0
    %v5078 = vadd.f32 %v4905, %v5077
    %v5079 = vpop.f32.mrb[0].mxu0
    %v5080 = vadd.f32 %v4909, %v5079
    %5081 = vdwg.mxu0
    %5082 = vmatprep.subr.bf16.mxu0 %v4874
    %5083 = vmatpush1.bf16.msra.mxu0 %v4873
    %5084 = vmatprep.subr.bf16.mxu0 %v4880
    %5085 = vmatpush1.bf16.msra.mxu0 %v4879
    %5086 = vmatprep.subr.bf16.mxu0 %v4886
    %5087 = vmatpush1.bf16.msra.mxu0 %v4885
    %5088 = vmatprep.subr.bf16.mxu0 %v4892
    %5089 = vmatpush1.bf16.msra.mxu0 %v4891
    %5090 = vmatprep.subr.bf16.mxu0 0
    %5091 = vmatpush1.bf16.msra.mxu0 0
    %5092 = vmatprep.subr.bf16.mxu0 0
    %5093 = vmatpush1.bf16.msra.mxu0 0
    %5094 = vmatprep.subr.bf16.mxu0 0
    %5095 = vmatpush1.bf16.msra.mxu0 0
    %5096 = vmatprep.subr.bf16.mxu0 0
    %5097 = vmatpush1.bf16.msra.mxu0 0
    %5098 = vmatprep.subr.bf16.mxu0 0
    %5099 = vmatpush1.bf16.msra.mxu0 0
    %5100 = vmatprep.subr.bf16.mxu0 0
    %5101 = vmatpush1.bf16.msra.mxu0 0
    %5102 = vmatprep.subr.bf16.mxu0 0
    %5103 = vmatpush1.bf16.msra.mxu0 0
    %5104 = vmatprep.subr.bf16.mxu0 0
    %5105 = vmatpush1.bf16.msra.mxu0 0
    %5106 = vmatprep.subr.bf16.mxu0 0
    %5107 = vmatpush1.bf16.msra.mxu0 0
    %5108 = vmatprep.subr.bf16.mxu0 0
    %5109 = vmatpush1.bf16.msra.mxu0 0
    %5110 = vmatprep.subr.bf16.mxu0 0
    %5111 = vmatpush1.bf16.msra.mxu0 0
    %5112 = vmatprep.subr.bf16.mxu0 0
    %5113 = vmatpush1.bf16.msra.mxu0 0
    %5114 = vmatprep.mubr.bf16.mxu0 0
    %5115 = vmatmul.mubr.bf16.gmra.mrb[0].mxu0 %v4925
    %v5116 = vpop.f32.mrb[0].mxu0
    %v5117 = vadd.f32 %v4913, %v5116
    %v5118 = vpop.f32.mrb[0].mxu0
    %v5119 = vadd.f32 %v4917, %v5118
    %v5120 = vpop.f32.mrb[0].mxu0
    %v5121 = vadd.f32 %v4913, %v5120
    %v5122 = vpop.f32.mrb[0].mxu0
    %v5123 = vadd.f32 %v4917, %v5122
    %5124 = vmatprep.mubr.bf16.mxu0 0
    %5125 = vmatmul.mubr.bf16.gmra.mrb[0].mxu0 %v4928
    %v5126 = vpop.f32.mrb[0].mxu0
    %v5127 = vadd.f32 %v4913, %v5126
    %v5128 = vpop.f32.mrb[0].mxu0
    %v5129 = vadd.f32 %v4917, %v5128
    %v5130 = vpop.f32.mrb[0].mxu0
    %v5131 = vadd.f32 %v4913, %v5130
    %v5132 = vpop.f32.mrb[0].mxu0
    %v5133 = vadd.f32 %v4917, %v5132
    %5134 = vmatprep.mubr.bf16.mxu0 0
    %5135 = vmatmul.mubr.bf16.gmra.mrb[0].mxu0 %v4931
    %v5136 = vpop.f32.mrb[0].mxu0
    %v5137 = vadd.f32 %v4913, %v5136
    %v5138 = vpop.f32.mrb[0].mxu0
    %v5139 = vadd.f32 %v4917, %v5138
    %v5140 = vpop.f32.mrb[0].mxu0
    %v5141 = vadd.f32 %v4913, %v5140
    %v5142 = vpop.f32.mrb[0].mxu0
    %v5143 = vadd.f32 %v4917, %v5142
    %5144 = vmatprep.mubr.bf16.mxu0 0
    %5145 = vmatmul.mubr.bf16.gmra.mrb[0].mxu0 %v4934
    %v5146 = vpop.f32.mrb[0].mxu0
    %v5147 = vadd.f32 %v4913, %v5146
    %v5148 = vpop.f32.mrb[0].mxu0
    %v5149 = vadd.f32 %v4917, %v5148
    %v5150 = vpop.f32.mrb[0].mxu0
    %v5151 = vadd.f32 %v4913, %v5150
    %v5152 = vpop.f32.mrb[0].mxu0
    %v5153 = vadd.f32 %v4917, %v5152
    %5154 = vdwg.mxu0
    %5155 = vst [vmem:[#allocation19] sm:$0xff] %v4971
    %5156 = vst [vmem:[#allocation19 + $0x8] sm:$0xff] %v4973
    %5157 = vst [vmem:[#allocation19 + $0x10] sm:$0xff] %v5044
    %5158 = vst [vmem:[#allocation19 + $0x18] sm:$0xff] %v5046
    %5159 = vst [vmem:[#allocation19 + $0x20] sm:$0xff] %v5117
    %5160 = vst [vmem:[#allocation19 + $0x28] sm:$0xff] %v5119
    %5161 = vst [vmem:[#allocation19 + $0x30] sm:$0xff] %v4975
    %5162 = vst [vmem:[#allocation19 + $0x38] sm:$0xff] %v4977
    %5163 = vst [vmem:[#allocation19 + $0x40] sm:$0xff] %v5048
    %5164 = vst [vmem:[#allocation19 + $0x48] sm:$0xff] %v5050
    %5165 = vst [vmem:[#allocation19 + $0x50] sm:$0xff] %v5121
    %5166 = vst [vmem:[#allocation19 + $0x58] sm:$0xff] %v5123
    %5167 = vst [vmem:[#allocation19 + $0x60] sm:$0xff] %v4981
    %5168 = vst [vmem:[#allocation19 + $0x68] sm:$0xff] %v4983
    %5169 = vst [vmem:[#allocation19 + $0x70] sm:$0xff] %v5054
    %5170 = vst [vmem:[#allocation19 + $0x78] sm:$0xff] %v5056
    %5171 = vst [vmem:[#allocation19 + $0x80] sm:$0xff] %v5127
    %5172 = vst [vmem:[#allocation19 + $0x88] sm:$0xff] %v5129
    %5173 = vst [vmem:[#allocation19 + $0x90] sm:$0xff] %v4985
    %5174 = vst [vmem:[#allocation19 + $0x98] sm:$0xff] %v4987
    %5175 = vst [vmem:[#allocation19 + $0xa0] sm:$0xff] %v5058
    %5176 = vst [vmem:[#allocation19 + $0xa8] sm:$0xff] %v5060
    %5177 = vst [vmem:[#allocation19 + $0xb0] sm:$0xff] %v5131
    %5178 = vst [vmem:[#allocation19 + $0xb8] sm:$0xff] %v5133
    %5179 = vst [vmem:[#allocation19 + $0xc0] sm:$0xff] %v4991
    %5180 = vst [vmem:[#allocation19 + $0xc8] sm:$0xff] %v4993
    %5181 = vst [vmem:[#allocation19 + $0xd0] sm:$0xff] %v5064
    %5182 = vst [vmem:[#allocation19 + $0xd8] sm:$0xff] %v5066
    %5183 = vst [vmem:[#allocation19 + $0xe0] sm:$0xff] %v5137
    %5184 = vst [vmem:[#allocation19 + $0xe8] sm:$0xff] %v5139
    %5185 = vst [vmem:[#allocation19 + $0xf0] sm:$0xff] %v4995
    %5186 = vst [vmem:[#allocation19 + $0xf8] sm:$0xff] %v4997
    %5187 = vst [vmem:[#allocation19 + $0x100] sm:$0xff] %v5068
    %5188 = vst [vmem:[#allocation19 + $0x108] sm:$0xff] %v5070
    %5189 = vst [vmem:[#allocation19 + $0x110] sm:$0xff] %v5141
    %5190 = vst [vmem:[#allocation19 + $0x118] sm:$0xff] %v5143
    %5191 = vst [vmem:[#allocation19 + $0x120] sm:$0xff] %v5001
    %5192 = vst [vmem:[#allocation19 + $0x128] sm:$0xff] %v5003
    %5193 = vst [vmem:[#allocation19 + $0x130] sm:$0xff] %v5074
    %5194 = vst [vmem:[#allocation19 + $0x138] sm:$0xff] %v5076
    %5195 = vst [vmem:[#allocation19 + $0x140] sm:$0xff] %v5147
    %5196 = vst [vmem:[#allocation19 + $0x148] sm:$0xff] %v5149
    %5197 = vst [vmem:[#allocation19 + $0x150] sm:$0xff] %v5005
    %5198 = vst [vmem:[#allocation19 + $0x158] sm:$0xff] %v5007
    %5199 = vst [vmem:[#allocation19 + $0x160] sm:$0xff] %v5078
    %5200 = vst [vmem:[#allocation19 + $0x168] sm:$0xff] %v5080
    %5201 = vst [vmem:[#allocation19 + $0x170] sm:$0xff] %v5151
    %5202 = vst [vmem:[#allocation19 + $0x178] sm:$0xff] %v5153
    // Predicated region
    $region74: #{tpu_custom_call.1} parent=1 // pred_check
      _
    $region75: #{tpu_custom_call.1} parent=1 // pred_check_branch
      %5204 = sbr.rel (0) target = $region77
    $region76: #{tpu_custom_call.1} parent=1 // pred_region
      %s5206 = ssub.s32 6144, 6144
      %5207 = vsyncadd [#allocation6], %s5206
      %s5208 = sshll.u32 [#allocation19], 4
      %s5209 = int_to_ptr.vmem [resolvable:$true] %s5208
      %5214 = dma.vmem_to_hbm [thread:$0]  %s5209, 6144, %s10, [#allocation6], 768, 768, 48
    $region77: #{tpu_custom_call.1} parent=1 // pred_fallthru
      _
    // Predicated region
    $region78: #{tpu_custom_call.1} parent=1 // pred_check
      _
    $region79: #{tpu_custom_call.1} parent=1 // pred_check_branch
      %5216 = sbr.rel (0) target = $region81
    $region80: #{tpu_custom_call.1} parent=1 // pred_region
      %5217 = dma.done [#allocation6], 6144
    $region81: #{tpu_custom_call.1} parent=1 // pred_fallthru
      _
    %5218 = vsyncpa [#allocation5], 1
    %5219 = vsyncpa [#allocation8], 1
    %5220 = vsyncpa [#allocation11], 1
    %5221 = vsyncpa [#allocation14], 1
    %5222 = vsyncpa [#allocation17], 1
    %5223 = vsyncpa [#allocation6], 1
  %5224 = vsyncmov [#allocation3]
  %s5225 = vpop.sfrf %5224
  %p5226 = scmp.eq.s32.totalorder %s5225, 0
  %p5227 = pneg %p5226
  %5229 = shalt.err (%p5227)

</llo_original>
